<compile_context>
chip_gen: v5e
topology: v5e:2x2
jax: 0.10.0
libtpu: 0.0.40
codegen_flags: <defaults>
</compile_context>

<pallas_src>
import functools
import math

import jax
import jax.numpy as jnp
from jax.experimental import pallas as pl
from jax.experimental.pallas import tpu as pltpu


_BN_EPS = 1e-5
_VMEM_LIMIT = 64 * 1024 * 1024


def _pick_tile(n, requested):
    """Largest divisor of n that is <= requested and a multiple of 8 (or n)."""
    t = min(requested, n)
    for cand in range(t, 0, -1):
        if n % cand == 0 and (cand % 8 == 0 or cand == n):
            return cand
    return n


# ----------------------------------------------------------------------------
# Kernel 1: fused projection  (feat | lin) = h @ [W_fc | W_lin]  + el/er logits
# ----------------------------------------------------------------------------
def project_kernel(h_ref, wcat_ref, al_ref, ar_ref,
                   feat_ref, lin_ref, el_ref, er_ref,
                   *, num_heads, out_feats):
    H, D = num_heads, out_feats
    HD = H * D
    # Single fused MXU matmul (bf16 inputs, f32 accumulation).
    fused = jnp.dot(h_ref[...], wcat_ref[...],
                    preferred_element_type=jnp.float32)          # (T, 2*H*D)
    feat = fused[:, :HD]
    lin = fused[:, HD:]
    # Attention logits via VPU reductions (avoid degenerate 16-wide matmuls).
    els, ers = [], []
    for hd in range(H):
        f_h = feat[:, hd * D:(hd + 1) * D]                       # (T, D)
        els.append(jnp.sum(f_h * al_ref[hd:hd + 1, :], axis=-1, keepdims=True))
        ers.append(jnp.sum(f_h * ar_ref[hd:hd + 1, :], axis=-1, keepdims=True))
    feat_ref[...] = feat.astype(feat_ref.dtype)                  # bf16 for reuse
    lin_ref[...] = lin
    el_ref[...] = jnp.concatenate(els, axis=-1)                  # (T, H)
    er_ref[...] = jnp.concatenate(ers, axis=-1)                  # (T, H)


# ----------------------------------------------------------------------------
# Kernel 2: masked edge-softmax + aggregation + residual (+ BN/ReLU), dst-tiled
# ----------------------------------------------------------------------------
def attention_kernel(adj_ref, er_ref, elt_ref, feat_ref, lin_ref,
                     out_ref, *att_refs,
                     num_heads, out_feats, negative_slope, apply_bn_act,
                     write_att):
    H, D = num_heads, out_feats
    adj = adj_ref[...]                       # (T_dst, N_src)  bf16 {0,1}
    mask = adj > 0                           # computed once, reused per head
    er = er_ref[...]                         # (T_dst, H)      f32
    elt = elt_ref[...]                       # (H, N_src)      f32
    feat = feat_ref[...]                     # (N_src, H*D)    bf16
    neg = jnp.float32(-1e30)
    slope = jnp.float32(negative_slope)

    head_outs = []
    for hd in range(H):
        # e[v,u] = leaky_relu(el[u] + er[v]) on edges u->v.
        e = er[:, hd:hd + 1] + elt[hd:hd + 1, :]                 # (T_dst, N_src)
        e = jnp.where(e > 0, e, slope * e)
        em = jnp.where(mask, e, neg)
        mx = jnp.max(em, axis=1, keepdims=True)
        p = jnp.exp(em - mx)                 # off-edge entries underflow to 0
        s = jnp.sum(p, axis=1, keepdims=True)
        a = p * pl.reciprocal(s, approx=True)                    # EUP divide
        if write_att:
            att_refs[0][hd, :, :] = a
        # Aggregate: conv[v] = sum_u a[v,u] * feat[u]  (bf16 MXU, f32 acc).
        head_outs.append(
            jnp.dot(a.astype(jnp.bfloat16), feat[:, hd * D:(hd + 1) * D],
                    preferred_element_type=jnp.float32))         # (T_dst, D)

    out = jnp.concatenate(head_outs, axis=-1) + lin_ref[...]     # conv + linear
    if apply_bn_act:
        # BatchNorm1d eval with fresh running stats (mean=0, var=1), then ReLU.
        out = jnp.maximum(out * jnp.float32(1.0 / math.sqrt(1.0 + _BN_EPS)), 0.0)
    out_ref[...] = out                       # single lane-dense store per tile


# ----------------------------------------------------------------------------
# One full GAT layer = projection call + attention call
# ----------------------------------------------------------------------------
def gat_layer(h, adj_bf, w_cat_bf, attn_l, attn_r, *, num_heads, out_feats,
              apply_bn_act, return_att, negative_slope=0.2,
              row_tile=256, dst_tile=256):
    N, F_in = h.shape
    H, D = num_heads, out_feats
    HD = H * D
    row_tile = _pick_tile(N, row_tile)
    dst_tile = _pick_tile(N, dst_tile)

    h_bf = h.astype(jnp.bfloat16)

    # ---- projection: (feat | lin) + el/er -----------------------------------
    proj_cost = pl.CostEstimate(
        flops=2 * N * F_in * 2 * HD + 4 * N * HD,
        transcendentals=0,
        bytes_accessed=2 * N * F_in + 2 * F_in * 2 * HD + 8 * HD
                       + 2 * N * HD + 4 * N * HD + 8 * N * H)
    feat_bf, lin, el, er = pl.pallas_call(
        functools.partial(project_kernel, num_heads=H, out_feats=D),
        grid=(N // row_tile,),
        in_specs=[
            pl.BlockSpec((row_tile, F_in), lambda i: (i, 0)),     # h tile
            pl.BlockSpec((F_in, 2 * HD), lambda i: (0, 0)),       # fused weight
            pl.BlockSpec((H, D), lambda i: (0, 0)),               # attn_l
            pl.BlockSpec((H, D), lambda i: (0, 0)),               # attn_r
        ],
        out_specs=(
            pl.BlockSpec((row_tile, HD), lambda i: (i, 0)),
            pl.BlockSpec((row_tile, HD), lambda i: (i, 0)),
            pl.BlockSpec((row_tile, H), lambda i: (i, 0)),
            pl.BlockSpec((row_tile, H), lambda i: (i, 0)),
        ),
        out_shape=(
            jax.ShapeDtypeStruct((N, HD), jnp.bfloat16),
            jax.ShapeDtypeStruct((N, HD), jnp.float32),
            jax.ShapeDtypeStruct((N, H), jnp.float32),
            jax.ShapeDtypeStruct((N, H), jnp.float32),
        ),
        compiler_params=pltpu.CompilerParams(
            dimension_semantics=("parallel",),
            vmem_limit_bytes=_VMEM_LIMIT),
        cost_estimate=proj_cost,
    )(h_bf, w_cat_bf, attn_l, attn_r)

    # Source-side logits as (H, N) rows so each head's el is a lane-dense row.
    elt = jnp.transpose(el)                                       # (H, N)

    # ---- attention + aggregation, tiled over destination nodes -------------
    attn_flops = 2 * H * N * N * D + 10 * H * N * N
    attn_bytes = (2 * N * N + 4 * N * H + 4 * H * N
                  + 2 * N * HD + 2 * 4 * N * HD)
    if return_att:
        attn_bytes += 4 * H * N * N
    attn_cost = pl.CostEstimate(flops=attn_flops,
                                transcendentals=H * N * N + H * N,
                                bytes_accessed=attn_bytes)

    in_specs = [
        pl.BlockSpec((dst_tile, N), lambda i: (i, 0)),    # adjacency tile (bf16)
        pl.BlockSpec((dst_tile, H), lambda i: (i, 0)),    # er (dst logits)
        pl.BlockSpec((H, N), lambda i: (0, 0)),           # el (src logits, resident)
        pl.BlockSpec((N, HD), lambda i: (0, 0)),          # feat (resident, bf16)
        pl.BlockSpec((dst_tile, HD), lambda i: (i, 0)),   # linear branch
    ]
    out_spec_h = pl.BlockSpec((dst_tile, HD), lambda i: (i, 0))
    if return_att:
        out_shape = (jax.ShapeDtypeStruct((N, HD), jnp.float32),
                     jax.ShapeDtypeStruct((H, N, N), jnp.float32))
        out_specs = (out_spec_h,
                     pl.BlockSpec((H, dst_tile, N), lambda i: (0, i, 0)))
    else:
        out_shape = jax.ShapeDtypeStruct((N, HD), jnp.float32)
        out_specs = out_spec_h

    result = pl.pallas_call(
        functools.partial(attention_kernel, num_heads=H, out_feats=D,
                          negative_slope=negative_slope,
                          apply_bn_act=apply_bn_act, write_att=return_att),
        grid=(N // dst_tile,),
        in_specs=in_specs,
        out_specs=out_specs,
        out_shape=out_shape,
        compiler_params=pltpu.CompilerParams(
            dimension_semantics=("parallel",),
            vmem_limit_bytes=_VMEM_LIMIT),
        cost_estimate=attn_cost,
    )(adj_bf, er, elt, feat_bf, lin)

    if return_att:
        return result[0], result[1]
    return result, None


# ----------------------------------------------------------------------------
# Parameter init (deterministic, shapes match the PyTorch module __init__)
# ----------------------------------------------------------------------------
def init_params(key, in_feats, n_hidden, n_classes, n_layers, n_heads):
    params = []
    gain = math.sqrt(2.0)  # nn.init.calculate_gain('relu')
    for i in range(n_layers):
        in_hidden = n_heads * n_hidden if i > 0 else in_feats
        out_hidden = n_hidden if i < n_layers - 1 else n_classes
        key, k1, k2, k3, k4 = jax.random.split(key, 5)

        # GATConv.fc weight: torch (out*heads, in); stored transposed (in, out*heads).
        std_fc = gain * math.sqrt(2.0 / (in_hidden + out_hidden * n_heads))
        w_fc = std_fc * jax.random.normal(k1, (in_hidden, out_hidden * n_heads), jnp.float32)

        # attn_l / attn_r: torch (1, heads, out); stored (heads, out).
        std_attn = gain * math.sqrt(2.0 / (out_hidden + 1))
        attn_l = std_attn * jax.random.normal(k2, (n_heads, out_hidden), jnp.float32)
        attn_r = std_attn * jax.random.normal(k3, (n_heads, out_hidden), jnp.float32)

        # self.linear[i]: nn.Linear(in_hidden, heads*out_hidden, bias=False).
        bound = 1.0 / math.sqrt(in_hidden)
        w_lin = jax.random.uniform(k4, (in_hidden, n_heads * out_hidden),
                                   jnp.float32, minval=-bound, maxval=bound)

        params.append(dict(w_fc=w_fc, w_lin=w_lin, attn_l=attn_l, attn_r=attn_r))
    bias_last = jnp.zeros((n_classes,), jnp.float32)   # Bias: init zeros
    return params, bias_last


# ----------------------------------------------------------------------------
# Full forward (glue in plain JAX; hot path inside the Pallas kernels)
# ----------------------------------------------------------------------------
def ogb_gat_forward(feat, adj_bf, params, bias_last, *, n_layers, n_heads,
                    n_hidden, n_classes, row_tile=256, dst_tile=256):
    h = feat
    att = None
    for i, p in enumerate(params):
        out_hidden = n_hidden if i < n_layers - 1 else n_classes
        last = (i == n_layers - 1)
        # Fused projection weight [W_fc | W_lin] in bf16 (one wide MXU matmul).
        w_cat_bf = jnp.concatenate([p["w_fc"], p["w_lin"]],
                                   axis=1).astype(jnp.bfloat16)
        h, att_i = gat_layer(
            h, adj_bf, w_cat_bf, p["attn_l"], p["attn_r"],
            num_heads=n_heads, out_feats=out_hidden,
            apply_bn_act=not last, return_att=last,
            row_tile=row_tile, dst_tile=dst_tile)
        if last:
            att = att_i
    N = h.shape[0]
    h = h.reshape(N, n_heads, n_classes).mean(axis=1)   # mean over heads
    h = h + bias_last                                   # Bias (zeros init)
    # TODO(synk): DGL returns edge-list attention (E, heads); we return the
    # dense per-head attention (heads, N_dst, N_src) of the last layer instead.
    return h, att


if __name__ == "__main__":
    # Small, deterministic synthetic problem (exercises a 2-tile grid).
    N = 128         # number of graph nodes
    in_feats = 32
    n_hidden = 16
    n_classes = 8
    n_layers = 2
    n_heads = 2

    key = jax.random.PRNGKey(0)
    kfeat, kadj, kparam = jax.random.split(key, 3)

    feat = jax.random.normal(kfeat, (N, in_feats), jnp.float32)

    # Random directed graph with self-loops (adj[v, u] = 1 iff edge u -> v).
    # Self-loops guarantee in-degree >= 1 for every node (edge-softmax safety).
    rand_adj = (jax.random.uniform(kadj, (N, N)) < 0.1).astype(jnp.float32)
    adj = jnp.maximum(rand_adj, jnp.eye(N, dtype=jnp.float32))
    adj_bf = adj.astype(jnp.bfloat16)   # compact {0,1} mask, half the DMA bytes

    params, bias_last = init_params(kparam, in_feats, n_hidden, n_classes,
                                    n_layers, n_heads)

    fwd = jax.jit(functools.partial(
        ogb_gat_forward, n_layers=n_layers, n_heads=n_heads,
        n_hidden=n_hidden, n_classes=n_classes,
        row_tile=64, dst_tile=64))

    out, att = fwd(feat, adj_bf, params, bias_last)
    jax.block_until_ready((out, att))

    assert out.shape == (N, n_classes)
    assert att.shape == (n_heads, N, N)
    assert bool(jnp.all(jnp.isfinite(out)))
    assert bool(jnp.all(jnp.isfinite(att)))
    print("KERNEL_OK")
</pallas_src>

<mosaic_0001>
module attributes {stable_mosaic.version = 11 : i64} {
  func.func @project_kernel(%arg0: i32, %arg1: memref<64x32xbf16, #tpu.memory_space<vmem>>, %arg2: memref<32x64xbf16, #tpu.memory_space<vmem>>, %arg3: memref<2x16xf32, #tpu.memory_space<vmem>>, %arg4: memref<2x16xf32, #tpu.memory_space<vmem>>, %arg5: memref<64x32xbf16, #tpu.memory_space<vmem>>, %arg6: memref<64x32xf32, #tpu.memory_space<vmem>>, %arg7: memref<64x2xf32, #tpu.memory_space<vmem>>, %arg8: memref<64x2xf32, #tpu.memory_space<vmem>>) attributes {dimension_semantics = [#tpu.dimension_semantics<parallel>], iteration_bounds = array<i64: 2>, scalar_prefetch = 0 : i64, scratch_operands = 0 : i64, tpu.core_type = #tpu.core_type<tc>, window_params = [{transform_indices = @transform_0, window_bounds = array<i64: 64, 32>}, {pipeline_mode = #tpu.pipeline_mode<synchronous>, transform_indices = @transform_1, window_bounds = array<i64: 32, 64>}, {pipeline_mode = #tpu.pipeline_mode<synchronous>, transform_indices = @transform_2, window_bounds = array<i64: 2, 16>}, {pipeline_mode = #tpu.pipeline_mode<synchronous>, transform_indices = @transform_3, window_bounds = array<i64: 2, 16>}, {transform_indices = @transform_4, window_bounds = array<i64: 64, 32>}, {transform_indices = @transform_5, window_bounds = array<i64: 64, 32>}, {transform_indices = @transform_6, window_bounds = array<i64: 64, 2>}, {transform_indices = @transform_7, window_bounds = array<i64: 64, 2>}]} {
    %c0 = arith.constant 0 : index
    %c0_0 = arith.constant 0 : index
    %0 = vector.load %arg1[%c0, %c0_0] : memref<64x32xbf16, #tpu.memory_space<vmem>>, vector<64x32xbf16>
    %c0_1 = arith.constant 0 : index
    %c0_2 = arith.constant 0 : index
    %1 = vector.load %arg2[%c0_1, %c0_2] : memref<32x64xbf16, #tpu.memory_space<vmem>>, vector<32x64xbf16>
    %cst = arith.constant dense<0.000000e+00> : vector<64x64xf32>
    %2 = tpu.matmul %0, %1, %cst {dimension_numbers = #tpu.dot_dimension_numbers<[1], [0], [0], [1], [0, 0, 1, 1], [], []>} : vector<64x32xbf16>, vector<32x64xbf16>, vector<64x64xf32> -> vector<64x64xf32>
    %3 = vector.extract_strided_slice %2 {offsets = [0, 0], sizes = [64, 32], strides = [1, 1]} : vector<64x64xf32> to vector<64x32xf32>
    %4 = vector.extract_strided_slice %2 {offsets = [0, 32], sizes = [64, 32], strides = [1, 1]} : vector<64x64xf32> to vector<64x32xf32>
    %5 = vector.extract_strided_slice %3 {offsets = [0, 0], sizes = [64, 16], strides = [1, 1]} : vector<64x32xf32> to vector<64x16xf32>
    %c0_3 = arith.constant 0 : index
    %c0_4 = arith.constant 0 : index
    %6 = vector.load %arg3[%c0_3, %c0_4] : memref<2x16xf32, #tpu.memory_space<vmem>>, vector<1x16xf32>
    %7 = vector.broadcast %6 : vector<1x16xf32> to vector<64x16xf32>
    %8 = arith.mulf %5, %7 : vector<64x16xf32>
    %cst_5 = arith.constant dense<0.000000e+00> : vector<64xf32>
    %9 = vector.multi_reduction <add>, %8, %cst_5 [1] : vector<64x16xf32> to vector<64xf32>
    %10 = vector.shape_cast %9 : vector<64xf32> to vector<64x1xf32>
    %c0_6 = arith.constant 0 : index
    %c0_7 = arith.constant 0 : index
    %11 = vector.load %arg4[%c0_6, %c0_7] : memref<2x16xf32, #tpu.memory_space<vmem>>, vector<1x16xf32>
    %12 = vector.broadcast %11 : vector<1x16xf32> to vector<64x16xf32>
    %13 = arith.mulf %5, %12 : vector<64x16xf32>
    %cst_8 = arith.constant dense<0.000000e+00> : vector<64xf32>
    %14 = vector.multi_reduction <add>, %13, %cst_8 [1] : vector<64x16xf32> to vector<64xf32>
    %15 = vector.shape_cast %14 : vector<64xf32> to vector<64x1xf32>
    %16 = vector.extract_strided_slice %3 {offsets = [0, 16], sizes = [64, 16], strides = [1, 1]} : vector<64x32xf32> to vector<64x16xf32>
    %c1 = arith.constant 1 : index
    %c0_9 = arith.constant 0 : index
    %17 = vector.load %arg3[%c1, %c0_9] : memref<2x16xf32, #tpu.memory_space<vmem>>, vector<1x16xf32>
    %18 = vector.broadcast %17 : vector<1x16xf32> to vector<64x16xf32>
    %19 = arith.mulf %16, %18 : vector<64x16xf32>
    %cst_10 = arith.constant dense<0.000000e+00> : vector<64xf32>
    %20 = vector.multi_reduction <add>, %19, %cst_10 [1] : vector<64x16xf32> to vector<64xf32>
    %21 = vector.shape_cast %20 : vector<64xf32> to vector<64x1xf32>
    %c1_11 = arith.constant 1 : index
    %c0_12 = arith.constant 0 : index
    %22 = vector.load %arg4[%c1_11, %c0_12] : memref<2x16xf32, #tpu.memory_space<vmem>>, vector<1x16xf32>
    %23 = vector.broadcast %22 : vector<1x16xf32> to vector<64x16xf32>
    %24 = arith.mulf %16, %23 : vector<64x16xf32>
    %cst_13 = arith.constant dense<0.000000e+00> : vector<64xf32>
    %25 = vector.multi_reduction <add>, %24, %cst_13 [1] : vector<64x16xf32> to vector<64xf32>
    %26 = vector.shape_cast %25 : vector<64xf32> to vector<64x1xf32>
    %27 = arith.truncf %3 : vector<64x32xf32> to vector<64x32xbf16>
    %c0_14 = arith.constant 0 : index
    %c0_15 = arith.constant 0 : index
    %28 = vector.load %arg5[%c0_14, %c0_15] : memref<64x32xbf16, #tpu.memory_space<vmem>>, vector<64x32xbf16>
    tpu.vector_store %arg5[%c0_14, %c0_15], %27 {strides = array<i32>} : memref<64x32xbf16, #tpu.memory_space<vmem>>, vector<64x32xbf16>,
    %c0_16 = arith.constant 0 : index
    %c0_17 = arith.constant 0 : index
    %29 = vector.load %arg6[%c0_16, %c0_17] : memref<64x32xf32, #tpu.memory_space<vmem>>, vector<64x32xf32>
    tpu.vector_store %arg6[%c0_16, %c0_17], %4 {strides = array<i32>} : memref<64x32xf32, #tpu.memory_space<vmem>>, vector<64x32xf32>,
    %30 = tpu.concatenate %10, %21 in 1 : vector<64x1xf32>, vector<64x1xf32> -> vector<64x2xf32>
    %c0_18 = arith.constant 0 : index
    %c0_19 = arith.constant 0 : index
    %31 = vector.load %arg7[%c0_18, %c0_19] : memref<64x2xf32, #tpu.memory_space<vmem>>, vector<64x2xf32>
    tpu.vector_store %arg7[%c0_18, %c0_19], %30 {strides = array<i32>} : memref<64x2xf32, #tpu.memory_space<vmem>>, vector<64x2xf32>,
    %32 = tpu.concatenate %15, %26 in 1 : vector<64x1xf32>, vector<64x1xf32> -> vector<64x2xf32>
    %c0_20 = arith.constant 0 : index
    %c0_21 = arith.constant 0 : index
    %33 = vector.load %arg8[%c0_20, %c0_21] : memref<64x2xf32, #tpu.memory_space<vmem>>, vector<64x2xf32>
    tpu.vector_store %arg8[%c0_20, %c0_21], %32 {strides = array<i32>} : memref<64x2xf32, #tpu.memory_space<vmem>>, vector<64x2xf32>,
    return
  }
  func.func @transform_0(%arg0: i32) -> (i32, i32) {
    %c0_i32 = arith.constant 0 : i32
    %c0_i32_0 = arith.constant 0 : i32
    return %arg0, %c0_i32 : i32, i32
  }
  func.func @transform_1(%arg0: i32) -> (i32, i32) {
    %c0_i32 = arith.constant 0 : i32
    %c0_i32_0 = arith.constant 0 : i32
    %c0_i32_1 = arith.constant 0 : i32
    return %c0_i32, %c0_i32_0 : i32, i32
  }
  func.func @transform_2(%arg0: i32) -> (i32, i32) {
    %c0_i32 = arith.constant 0 : i32
    %c0_i32_0 = arith.constant 0 : i32
    %c0_i32_1 = arith.constant 0 : i32
    return %c0_i32, %c0_i32_0 : i32, i32
  }
  func.func @transform_3(%arg0: i32) -> (i32, i32) {
    %c0_i32 = arith.constant 0 : i32
    %c0_i32_0 = arith.constant 0 : i32
    %c0_i32_1 = arith.constant 0 : i32
    return %c0_i32, %c0_i32_0 : i32, i32
  }
  func.func @transform_4(%arg0: i32) -> (i32, i32) {
    %c0_i32 = arith.constant 0 : i32
    %c0_i32_0 = arith.constant 0 : i32
    return %arg0, %c0_i32 : i32, i32
  }
  func.func @transform_5(%arg0: i32) -> (i32, i32) {
    %c0_i32 = arith.constant 0 : i32
    %c0_i32_0 = arith.constant 0 : i32
    return %arg0, %c0_i32 : i32, i32
  }
  func.func @transform_6(%arg0: i32) -> (i32, i32) {
    %c0_i32 = arith.constant 0 : i32
    %c0_i32_0 = arith.constant 0 : i32
    return %arg0, %c0_i32 : i32, i32
  }
  func.func @transform_7(%arg0: i32) -> (i32, i32) {
    %c0_i32 = arith.constant 0 : i32
    %c0_i32_0 = arith.constant 0 : i32
    return %arg0, %c0_i32 : i32, i32
  }
}

module attributes {stable_mosaic.version = 11 : i64} {
  func.func @attention_kernel(%arg0: i32, %arg1: memref<64x128xbf16, #tpu.memory_space<vmem>>, %arg2: memref<64x2xf32, #tpu.memory_space<vmem>>, %arg3: memref<2x128xf32, #tpu.memory_space<vmem>>, %arg4: memref<128x32xbf16, #tpu.memory_space<vmem>>, %arg5: memref<64x32xf32, #tpu.memory_space<vmem>>, %arg6: memref<64x32xf32, #tpu.memory_space<vmem>>) attributes {dimension_semantics = [#tpu.dimension_semantics<parallel>], iteration_bounds = array<i64: 2>, scalar_prefetch = 0 : i64, scratch_operands = 0 : i64, tpu.core_type = #tpu.core_type<tc>, window_params = [{transform_indices = @transform_0, window_bounds = array<i64: 64, 128>}, {transform_indices = @transform_1, window_bounds = array<i64: 64, 2>}, {pipeline_mode = #tpu.pipeline_mode<synchronous>, transform_indices = @transform_2, window_bounds = array<i64: 2, 128>}, {pipeline_mode = #tpu.pipeline_mode<synchronous>, transform_indices = @transform_3, window_bounds = array<i64: 128, 32>}, {transform_indices = @transform_4, window_bounds = array<i64: 64, 32>}, {transform_indices = @transform_5, window_bounds = array<i64: 64, 32>}]} {
    %c0 = arith.constant 0 : index
    %c0_0 = arith.constant 0 : index
    %0 = vector.load %arg1[%c0, %c0_0] : memref<64x128xbf16, #tpu.memory_space<vmem>>, vector<64x128xbf16>
    %cst = arith.constant 0.000000e+00 : bf16
    %1 = vector.broadcast %cst : bf16 to vector<64x128xbf16>
    %2 = arith.cmpf ogt, %0, %1 : vector<64x128xbf16>
    %c0_1 = arith.constant 0 : index
    %c0_2 = arith.constant 0 : index
    %3 = vector.load %arg2[%c0_1, %c0_2] : memref<64x2xf32, #tpu.memory_space<vmem>>, vector<64x2xf32>
    %c0_3 = arith.constant 0 : index
    %c0_4 = arith.constant 0 : index
    %4 = vector.load %arg3[%c0_3, %c0_4] : memref<2x128xf32, #tpu.memory_space<vmem>>, vector<2x128xf32>
    %c0_5 = arith.constant 0 : index
    %c0_6 = arith.constant 0 : index
    %5 = vector.load %arg4[%c0_5, %c0_6] : memref<128x32xbf16, #tpu.memory_space<vmem>>, vector<128x32xbf16>
    %6 = vector.extract_strided_slice %3 {offsets = [0, 0], sizes = [64, 1], strides = [1, 1]} : vector<64x2xf32> to vector<64x1xf32>
    %7 = vector.extract_strided_slice %4 {offsets = [0, 0], sizes = [1, 128], strides = [1, 1]} : vector<2x128xf32> to vector<1x128xf32>
    %8 = vector.broadcast %6 : vector<64x1xf32> to vector<64x128xf32>
    %9 = vector.broadcast %7 : vector<1x128xf32> to vector<64x128xf32>
    %10 = arith.addf %8, %9 : vector<64x128xf32>
    %cst_7 = arith.constant 0.000000e+00 : f32
    %11 = vector.broadcast %cst_7 : f32 to vector<64x128xf32>
    %12 = arith.cmpf ogt, %10, %11 : vector<64x128xf32>
    %cst_8 = arith.constant 2.000000e-01 : f32
    %13 = vector.broadcast %cst_8 : f32 to vector<64x128xf32>
    %14 = arith.mulf %13, %10 : vector<64x128xf32>
    %15 = arith.select %12, %10, %14 : vector<64x128xi1>, vector<64x128xf32>
    %cst_9 = arith.constant -1.000000e+30 : f32
    %16 = vector.broadcast %cst_9 : f32 to vector<64x128xf32>
    %17 = arith.select %2, %15, %16 : vector<64x128xi1>, vector<64x128xf32>
    %cst_10 = arith.constant dense<0xFF800000> : vector<64xf32>
    %18 = vector.multi_reduction <maximumf>, %17, %cst_10 [1] : vector<64x128xf32> to vector<64xf32>
    %19 = vector.shape_cast %18 : vector<64xf32> to vector<64x1xf32>
    %20 = vector.broadcast %19 : vector<64x1xf32> to vector<64x128xf32>
    %21 = arith.subf %17, %20 : vector<64x128xf32>
    %22 = math.exp %21 : vector<64x128xf32>
    %cst_11 = arith.constant dense<0.000000e+00> : vector<64xf32>
    %23 = vector.multi_reduction <add>, %22, %cst_11 [1] : vector<64x128xf32> to vector<64xf32>
    %24 = vector.shape_cast %23 : vector<64xf32> to vector<64x1xf32>
    %25 = tpu.reciprocal %24 {approx = true} : vector<64x1xf32> -> vector<64x1xf32>
    %26 = vector.broadcast %25 : vector<64x1xf32> to vector<64x128xf32>
    %27 = arith.mulf %22, %26 : vector<64x128xf32>
    %28 = arith.truncf %27 : vector<64x128xf32> to vector<64x128xbf16>
    %29 = vector.extract_strided_slice %5 {offsets = [0, 0], sizes = [128, 16], strides = [1, 1]} : vector<128x32xbf16> to vector<128x16xbf16>
    %cst_12 = arith.constant dense<0.000000e+00> : vector<64x16xf32>
    %30 = tpu.matmul %28, %29, %cst_12 {dimension_numbers = #tpu.dot_dimension_numbers<[1], [0], [0], [1], [0, 0, 1, 1], [], []>} : vector<64x128xbf16>, vector<128x16xbf16>, vector<64x16xf32> -> vector<64x16xf32>
    %31 = vector.extract_strided_slice %3 {offsets = [0, 1], sizes = [64, 1], strides = [1, 1]} : vector<64x2xf32> to vector<64x1xf32>
    %32 = vector.extract_strided_slice %4 {offsets = [1, 0], sizes = [1, 128], strides = [1, 1]} : vector<2x128xf32> to vector<1x128xf32>
    %33 = vector.broadcast %31 : vector<64x1xf32> to vector<64x128xf32>
    %34 = vector.broadcast %32 : vector<1x128xf32> to vector<64x128xf32>
    %35 = arith.addf %33, %34 : vector<64x128xf32>
    %cst_13 = arith.constant 0.000000e+00 : f32
    %36 = vector.broadcast %cst_13 : f32 to vector<64x128xf32>
    %37 = arith.cmpf ogt, %35, %36 : vector<64x128xf32>
    %cst_14 = arith.constant 2.000000e-01 : f32
    %38 = vector.broadcast %cst_14 : f32 to vector<64x128xf32>
    %39 = arith.mulf %38, %35 : vector<64x128xf32>
    %40 = arith.select %37, %35, %39 : vector<64x128xi1>, vector<64x128xf32>
    %cst_15 = arith.constant -1.000000e+30 : f32
    %41 = vector.broadcast %cst_15 : f32 to vector<64x128xf32>
    %42 = arith.select %2, %40, %41 : vector<64x128xi1>, vector<64x128xf32>
    %cst_16 = arith.constant dense<0xFF800000> : vector<64xf32>
    %43 = vector.multi_reduction <maximumf>, %42, %cst_16 [1] : vector<64x128xf32> to vector<64xf32>
    %44 = vector.shape_cast %43 : vector<64xf32> to vector<64x1xf32>
    %45 = vector.broadcast %44 : vector<64x1xf32> to vector<64x128xf32>
    %46 = arith.subf %42, %45 : vector<64x128xf32>
    %47 = math.exp %46 : vector<64x128xf32>
    %cst_17 = arith.constant dense<0.000000e+00> : vector<64xf32>
    %48 = vector.multi_reduction <add>, %47, %cst_17 [1] : vector<64x128xf32> to vector<64xf32>
    %49 = vector.shape_cast %48 : vector<64xf32> to vector<64x1xf32>
    %50 = tpu.reciprocal %49 {approx = true} : vector<64x1xf32> -> vector<64x1xf32>
    %51 = vector.broadcast %50 : vector<64x1xf32> to vector<64x128xf32>
    %52 = arith.mulf %47, %51 : vector<64x128xf32>
    %53 = arith.truncf %52 : vector<64x128xf32> to vector<64x128xbf16>
    %54 = vector.extract_strided_slice %5 {offsets = [0, 16], sizes = [128, 16], strides = [1, 1]} : vector<128x32xbf16> to vector<128x16xbf16>
    %cst_18 = arith.constant dense<0.000000e+00> : vector<64x16xf32>
    %55 = tpu.matmul %53, %54, %cst_18 {dimension_numbers = #tpu.dot_dimension_numbers<[1], [0], [0], [1], [0, 0, 1, 1], [], []>} : vector<64x128xbf16>, vector<128x16xbf16>, vector<64x16xf32> -> vector<64x16xf32>
    %56 = tpu.concatenate %30, %55 in 1 : vector<64x16xf32>, vector<64x16xf32> -> vector<64x32xf32>
    %c0_19 = arith.constant 0 : index
    %c0_20 = arith.constant 0 : index
    %57 = vector.load %arg5[%c0_19, %c0_20] : memref<64x32xf32, #tpu.memory_space<vmem>>, vector<64x32xf32>
    %58 = arith.addf %56, %57 : vector<64x32xf32>
    %cst_21 = arith.constant 0.999994993 : f32
    %59 = vector.broadcast %cst_21 : f32 to vector<64x32xf32>
    %60 = arith.mulf %58, %59 : vector<64x32xf32>
    %cst_22 = arith.constant 0.000000e+00 : f32
    %61 = vector.broadcast %cst_22 : f32 to vector<64x32xf32>
    %62 = arith.maximumf %60, %61 : vector<64x32xf32>
    %c0_23 = arith.constant 0 : index
    %c0_24 = arith.constant 0 : index
    %63 = vector.load %arg6[%c0_23, %c0_24] : memref<64x32xf32, #tpu.memory_space<vmem>>, vector<64x32xf32>
    tpu.vector_store %arg6[%c0_23, %c0_24], %62 {strides = array<i32>} : memref<64x32xf32, #tpu.memory_space<vmem>>, vector<64x32xf32>,
    return
  }
  func.func @transform_0(%arg0: i32) -> (i32, i32) {
    %c0_i32 = arith.constant 0 : i32
    %c0_i32_0 = arith.constant 0 : i32
    return %arg0, %c0_i32 : i32, i32
  }
  func.func @transform_1(%arg0: i32) -> (i32, i32) {
    %c0_i32 = arith.constant 0 : i32
    %c0_i32_0 = arith.constant 0 : i32
    return %arg0, %c0_i32 : i32, i32
  }
  func.func @transform_2(%arg0: i32) -> (i32, i32) {
    %c0_i32 = arith.constant 0 : i32
    %c0_i32_0 = arith.constant 0 : i32
    %c0_i32_1 = arith.constant 0 : i32
    return %c0_i32, %c0_i32_0 : i32, i32
  }
  func.func @transform_3(%arg0: i32) -> (i32, i32) {
    %c0_i32 = arith.constant 0 : i32
    %c0_i32_0 = arith.constant 0 : i32
    %c0_i32_1 = arith.constant 0 : i32
    return %c0_i32, %c0_i32_0 : i32, i32
  }
  func.func @transform_4(%arg0: i32) -> (i32, i32) {
    %c0_i32 = arith.constant 0 : i32
    %c0_i32_0 = arith.constant 0 : i32
    return %arg0, %c0_i32 : i32, i32
  }
  func.func @transform_5(%arg0: i32) -> (i32, i32) {
    %c0_i32 = arith.constant 0 : i32
    %c0_i32_0 = arith.constant 0 : i32
    return %arg0, %c0_i32 : i32, i32
  }
}

module attributes {stable_mosaic.version = 11 : i64} {
  func.func @project_kernel(%arg0: i32, %arg1: memref<64x32xbf16, #tpu.memory_space<vmem>>, %arg2: memref<32x32xbf16, #tpu.memory_space<vmem>>, %arg3: memref<2x8xf32, #tpu.memory_space<vmem>>, %arg4: memref<2x8xf32, #tpu.memory_space<vmem>>, %arg5: memref<64x16xbf16, #tpu.memory_space<vmem>>, %arg6: memref<64x16xf32, #tpu.memory_space<vmem>>, %arg7: memref<64x2xf32, #tpu.memory_space<vmem>>, %arg8: memref<64x2xf32, #tpu.memory_space<vmem>>) attributes {dimension_semantics = [#tpu.dimension_semantics<parallel>], iteration_bounds = array<i64: 2>, scalar_prefetch = 0 : i64, scratch_operands = 0 : i64, tpu.core_type = #tpu.core_type<tc>, window_params = [{transform_indices = @transform_0, window_bounds = array<i64: 64, 32>}, {pipeline_mode = #tpu.pipeline_mode<synchronous>, transform_indices = @transform_1, window_bounds = array<i64: 32, 32>}, {pipeline_mode = #tpu.pipeline_mode<synchronous>, transform_indices = @transform_2, window_bounds = array<i64: 2, 8>}, {pipeline_mode = #tpu.pipeline_mode<synchronous>, transform_indices = @transform_3, window_bounds = array<i64: 2, 8>}, {transform_indices = @transform_4, window_bounds = array<i64: 64, 16>}, {transform_indices = @transform_5, window_bounds = array<i64: 64, 16>}, {transform_indices = @transform_6, window_bounds = array<i64: 64, 2>}, {transform_indices = @transform_7, window_bounds = array<i64: 64, 2>}]} {
    %c0 = arith.constant 0 : index
    %c0_0 = arith.constant 0 : index
    %0 = vector.load %arg1[%c0, %c0_0] : memref<64x32xbf16, #tpu.memory_space<vmem>>, vector<64x32xbf16>
    %c0_1 = arith.constant 0 : index
    %c0_2 = arith.constant 0 : index
    %1 = vector.load %arg2[%c0_1, %c0_2] : memref<32x32xbf16, #tpu.memory_space<vmem>>, vector<32x32xbf16>
    %cst = arith.constant dense<0.000000e+00> : vector<64x32xf32>
    %2 = tpu.matmul %0, %1, %cst {dimension_numbers = #tpu.dot_dimension_numbers<[1], [0], [0], [1], [0, 0, 1, 1], [], []>} : vector<64x32xbf16>, vector<32x32xbf16>, vector<64x32xf32> -> vector<64x32xf32>
    %3 = vector.extract_strided_slice %2 {offsets = [0, 0], sizes = [64, 16], strides = [1, 1]} : vector<64x32xf32> to vector<64x16xf32>
    %4 = vector.extract_strided_slice %2 {offsets = [0, 16], sizes = [64, 16], strides = [1, 1]} : vector<64x32xf32> to vector<64x16xf32>
    %5 = vector.extract_strided_slice %3 {offsets = [0, 0], sizes = [64, 8], strides = [1, 1]} : vector<64x16xf32> to vector<64x8xf32>
    %c0_3 = arith.constant 0 : index
    %c0_4 = arith.constant 0 : index
    %6 = vector.load %arg3[%c0_3, %c0_4] : memref<2x8xf32, #tpu.memory_space<vmem>>, vector<1x8xf32>
    %7 = vector.broadcast %6 : vector<1x8xf32> to vector<64x8xf32>
    %8 = arith.mulf %5, %7 : vector<64x8xf32>
    %cst_5 = arith.constant dense<0.000000e+00> : vector<64xf32>
    %9 = vector.multi_reduction <add>, %8, %cst_5 [1] : vector<64x8xf32> to vector<64xf32>
    %10 = vector.shape_cast %9 : vector<64xf32> to vector<64x1xf32>
    %c0_6 = arith.constant 0 : index
    %c0_7 = arith.constant 0 : index
    %11 = vector.load %arg4[%c0_6, %c0_7] : memref<2x8xf32, #tpu.memory_space<vmem>>, vector<1x8xf32>
    %12 = vector.broadcast %11 : vector<1x8xf32> to vector<64x8xf32>
    %13 = arith.mulf %5, %12 : vector<64x8xf32>
    %cst_8 = arith.constant dense<0.000000e+00> : vector<64xf32>
    %14 = vector.multi_reduction <add>, %13, %cst_8 [1] : vector<64x8xf32> to vector<64xf32>
    %15 = vector.shape_cast %14 : vector<64xf32> to vector<64x1xf32>
    %16 = vector.extract_strided_slice %3 {offsets = [0, 8], sizes = [64, 8], strides = [1, 1]} : vector<64x16xf32> to vector<64x8xf32>
    %c1 = arith.constant 1 : index
    %c0_9 = arith.constant 0 : index
    %17 = vector.load %arg3[%c1, %c0_9] : memref<2x8xf32, #tpu.memory_space<vmem>>, vector<1x8xf32>
    %18 = vector.broadcast %17 : vector<1x8xf32> to vector<64x8xf32>
    %19 = arith.mulf %16, %18 : vector<64x8xf32>
    %cst_10 = arith.constant dense<0.000000e+00> : vector<64xf32>
    %20 = vector.multi_reduction <add>, %19, %cst_10 [1] : vector<64x8xf32> to vector<64xf32>
    %21 = vector.shape_cast %20 : vector<64xf32> to vector<64x1xf32>
    %c1_11 = arith.constant 1 : index
    %c0_12 = arith.constant 0 : index
    %22 = vector.load %arg4[%c1_11, %c0_12] : memref<2x8xf32, #tpu.memory_space<vmem>>, vector<1x8xf32>
    %23 = vector.broadcast %22 : vector<1x8xf32> to vector<64x8xf32>
    %24 = arith.mulf %16, %23 : vector<64x8xf32>
    %cst_13 = arith.constant dense<0.000000e+00> : vector<64xf32>
    %25 = vector.multi_reduction <add>, %24, %cst_13 [1] : vector<64x8xf32> to vector<64xf32>
    %26 = vector.shape_cast %25 : vector<64xf32> to vector<64x1xf32>
    %27 = arith.truncf %3 : vector<64x16xf32> to vector<64x16xbf16>
    %c0_14 = arith.constant 0 : index
    %c0_15 = arith.constant 0 : index
    %28 = vector.load %arg5[%c0_14, %c0_15] : memref<64x16xbf16, #tpu.memory_space<vmem>>, vector<64x16xbf16>
    tpu.vector_store %arg5[%c0_14, %c0_15], %27 {strides = array<i32>} : memref<64x16xbf16, #tpu.memory_space<vmem>>, vector<64x16xbf16>,
    %c0_16 = arith.constant 0 : index
    %c0_17 = arith.constant 0 : index
    %29 = vector.load %arg6[%c0_16, %c0_17] : memref<64x16xf32, #tpu.memory_space<vmem>>, vector<64x16xf32>
    tpu.vector_store %arg6[%c0_16, %c0_17], %4 {strides = array<i32>} : memref<64x16xf32, #tpu.memory_space<vmem>>, vector<64x16xf32>,
    %30 = tpu.concatenate %10, %21 in 1 : vector<64x1xf32>, vector<64x1xf32> -> vector<64x2xf32>
    %c0_18 = arith.constant 0 : index
    %c0_19 = arith.constant 0 : index
    %31 = vector.load %arg7[%c0_18, %c0_19] : memref<64x2xf32, #tpu.memory_space<vmem>>, vector<64x2xf32>
    tpu.vector_store %arg7[%c0_18, %c0_19], %30 {strides = array<i32>} : memref<64x2xf32, #tpu.memory_space<vmem>>, vector<64x2xf32>,
    %32 = tpu.concatenate %15, %26 in 1 : vector<64x1xf32>, vector<64x1xf32> -> vector<64x2xf32>
    %c0_20 = arith.constant 0 : index
    %c0_21 = arith.constant 0 : index
    %33 = vector.load %arg8[%c0_20, %c0_21] : memref<64x2xf32, #tpu.memory_space<vmem>>, vector<64x2xf32>
    tpu.vector_store %arg8[%c0_20, %c0_21], %32 {strides = array<i32>} : memref<64x2xf32, #tpu.memory_space<vmem>>, vector<64x2xf32>,
    return
  }
  func.func @transform_0(%arg0: i32) -> (i32, i32) {
    %c0_i32 = arith.constant 0 : i32
    %c0_i32_0 = arith.constant 0 : i32
    return %arg0, %c0_i32 : i32, i32
  }
  func.func @transform_1(%arg0: i32) -> (i32, i32) {
    %c0_i32 = arith.constant 0 : i32
    %c0_i32_0 = arith.constant 0 : i32
    %c0_i32_1 = arith.constant 0 : i32
    return %c0_i32, %c0_i32_0 : i32, i32
  }
  func.func @transform_2(%arg0: i32) -> (i32, i32) {
    %c0_i32 = arith.constant 0 : i32
    %c0_i32_0 = arith.constant 0 : i32
    %c0_i32_1 = arith.constant 0 : i32
    return %c0_i32, %c0_i32_0 : i32, i32
  }
  func.func @transform_3(%arg0: i32) -> (i32, i32) {
    %c0_i32 = arith.constant 0 : i32
    %c0_i32_0 = arith.constant 0 : i32
    %c0_i32_1 = arith.constant 0 : i32
    return %c0_i32, %c0_i32_0 : i32, i32
  }
  func.func @transform_4(%arg0: i32) -> (i32, i32) {
    %c0_i32 = arith.constant 0 : i32
    %c0_i32_0 = arith.constant 0 : i32
    return %arg0, %c0_i32 : i32, i32
  }
  func.func @transform_5(%arg0: i32) -> (i32, i32) {
    %c0_i32 = arith.constant 0 : i32
    %c0_i32_0 = arith.constant 0 : i32
    return %arg0, %c0_i32 : i32, i32
  }
  func.func @transform_6(%arg0: i32) -> (i32, i32) {
    %c0_i32 = arith.constant 0 : i32
    %c0_i32_0 = arith.constant 0 : i32
    return %arg0, %c0_i32 : i32, i32
  }
  func.func @transform_7(%arg0: i32) -> (i32, i32) {
    %c0_i32 = arith.constant 0 : i32
    %c0_i32_0 = arith.constant 0 : i32
    return %arg0, %c0_i32 : i32, i32
  }
}

module attributes {stable_mosaic.version = 11 : i64} {
  func.func @attention_kernel(%arg0: i32, %arg1: memref<64x128xbf16, #tpu.memory_space<vmem>>, %arg2: memref<64x2xf32, #tpu.memory_space<vmem>>, %arg3: memref<2x128xf32, #tpu.memory_space<vmem>>, %arg4: memref<128x16xbf16, #tpu.memory_space<vmem>>, %arg5: memref<64x16xf32, #tpu.memory_space<vmem>>, %arg6: memref<64x16xf32, #tpu.memory_space<vmem>>, %arg7: memref<2x64x128xf32, #tpu.memory_space<vmem>>) attributes {dimension_semantics = [#tpu.dimension_semantics<parallel>], iteration_bounds = array<i64: 2>, scalar_prefetch = 0 : i64, scratch_operands = 0 : i64, tpu.core_type = #tpu.core_type<tc>, window_params = [{transform_indices = @transform_0, window_bounds = array<i64: 64, 128>}, {transform_indices = @transform_1, window_bounds = array<i64: 64, 2>}, {pipeline_mode = #tpu.pipeline_mode<synchronous>, transform_indices = @transform_2, window_bounds = array<i64: 2, 128>}, {pipeline_mode = #tpu.pipeline_mode<synchronous>, transform_indices = @transform_3, window_bounds = array<i64: 128, 16>}, {transform_indices = @transform_4, window_bounds = array<i64: 64, 16>}, {transform_indices = @transform_5, window_bounds = array<i64: 64, 16>}, {transform_indices = @transform_6, window_bounds = array<i64: 2, 64, 128>}]} {
    %c0 = arith.constant 0 : index
    %c0_0 = arith.constant 0 : index
    %0 = vector.load %arg1[%c0, %c0_0] : memref<64x128xbf16, #tpu.memory_space<vmem>>, vector<64x128xbf16>
    %cst = arith.constant 0.000000e+00 : bf16
    %1 = vector.broadcast %cst : bf16 to vector<64x128xbf16>
    %2 = arith.cmpf ogt, %0, %1 : vector<64x128xbf16>
    %c0_1 = arith.constant 0 : index
    %c0_2 = arith.constant 0 : index
    %3 = vector.load %arg2[%c0_1, %c0_2] : memref<64x2xf32, #tpu.memory_space<vmem>>, vector<64x2xf32>
    %c0_3 = arith.constant 0 : index
    %c0_4 = arith.constant 0 : index
    %4 = vector.load %arg3[%c0_3, %c0_4] : memref<2x128xf32, #tpu.memory_space<vmem>>, vector<2x128xf32>
    %c0_5 = arith.constant 0 : index
    %c0_6 = arith.constant 0 : index
    %5 = vector.load %arg4[%c0_5, %c0_6] : memref<128x16xbf16, #tpu.memory_space<vmem>>, vector<128x16xbf16>
    %6 = vector.extract_strided_slice %3 {offsets = [0, 0], sizes = [64, 1], strides = [1, 1]} : vector<64x2xf32> to vector<64x1xf32>
    %7 = vector.extract_strided_slice %4 {offsets = [0, 0], sizes = [1, 128], strides = [1, 1]} : vector<2x128xf32> to vector<1x128xf32>
    %8 = vector.broadcast %6 : vector<64x1xf32> to vector<64x128xf32>
    %9 = vector.broadcast %7 : vector<1x128xf32> to vector<64x128xf32>
    %10 = arith.addf %8, %9 : vector<64x128xf32>
    %cst_7 = arith.constant 0.000000e+00 : f32
    %11 = vector.broadcast %cst_7 : f32 to vector<64x128xf32>
    %12 = arith.cmpf ogt, %10, %11 : vector<64x128xf32>
    %cst_8 = arith.constant 2.000000e-01 : f32
    %13 = vector.broadcast %cst_8 : f32 to vector<64x128xf32>
    %14 = arith.mulf %13, %10 : vector<64x128xf32>
    %15 = arith.select %12, %10, %14 : vector<64x128xi1>, vector<64x128xf32>
    %cst_9 = arith.constant -1.000000e+30 : f32
    %16 = vector.broadcast %cst_9 : f32 to vector<64x128xf32>
    %17 = arith.select %2, %15, %16 : vector<64x128xi1>, vector<64x128xf32>
    %cst_10 = arith.constant dense<0xFF800000> : vector<64xf32>
    %18 = vector.multi_reduction <maximumf>, %17, %cst_10 [1] : vector<64x128xf32> to vector<64xf32>
    %19 = vector.shape_cast %18 : vector<64xf32> to vector<64x1xf32>
    %20 = vector.broadcast %19 : vector<64x1xf32> to vector<64x128xf32>
    %21 = arith.subf %17, %20 : vector<64x128xf32>
    %22 = math.exp %21 : vector<64x128xf32>
    %cst_11 = arith.constant dense<0.000000e+00> : vector<64xf32>
    %23 = vector.multi_reduction <add>, %22, %cst_11 [1] : vector<64x128xf32> to vector<64xf32>
    %24 = vector.shape_cast %23 : vector<64xf32> to vector<64x1xf32>
    %25 = tpu.reciprocal %24 {approx = true} : vector<64x1xf32> -> vector<64x1xf32>
    %26 = vector.broadcast %25 : vector<64x1xf32> to vector<64x128xf32>
    %27 = arith.mulf %22, %26 : vector<64x128xf32>
    %c0_12 = arith.constant 0 : index
    %c0_13 = arith.constant 0 : index
    %c0_14 = arith.constant 0 : index
    %28 = vector.load %arg7[%c0_12, %c0_13, %c0_14] : memref<2x64x128xf32, #tpu.memory_space<vmem>>, vector<1x64x128xf32>
    %29 = vector.shape_cast %28 : vector<1x64x128xf32> to vector<64x128xf32>
    %30 = vector.shape_cast %27 : vector<64x128xf32> to vector<1x64x128xf32>
    tpu.vector_store %arg7[%c0_12, %c0_13, %c0_14], %30 {strides = array<i32>} : memref<2x64x128xf32, #tpu.memory_space<vmem>>, vector<1x64x128xf32>,
    %31 = arith.truncf %27 : vector<64x128xf32> to vector<64x128xbf16>
    %32 = vector.extract_strided_slice %5 {offsets = [0, 0], sizes = [128, 8], strides = [1, 1]} : vector<128x16xbf16> to vector<128x8xbf16>
    %cst_15 = arith.constant dense<0.000000e+00> : vector<64x8xf32>
    %33 = tpu.matmul %31, %32, %cst_15 {dimension_numbers = #tpu.dot_dimension_numbers<[1], [0], [0], [1], [0, 0, 1, 1], [], []>} : vector<64x128xbf16>, vector<128x8xbf16>, vector<64x8xf32> -> vector<64x8xf32>
    %34 = vector.extract_strided_slice %3 {offsets = [0, 1], sizes = [64, 1], strides = [1, 1]} : vector<64x2xf32> to vector<64x1xf32>
    %35 = vector.extract_strided_slice %4 {offsets = [1, 0], sizes = [1, 128], strides = [1, 1]} : vector<2x128xf32> to vector<1x128xf32>
    %36 = vector.broadcast %34 : vector<64x1xf32> to vector<64x128xf32>
    %37 = vector.broadcast %35 : vector<1x128xf32> to vector<64x128xf32>
    %38 = arith.addf %36, %37 : vector<64x128xf32>
    %cst_16 = arith.constant 0.000000e+00 : f32
    %39 = vector.broadcast %cst_16 : f32 to vector<64x128xf32>
    %40 = arith.cmpf ogt, %38, %39 : vector<64x128xf32>
    %cst_17 = arith.constant 2.000000e-01 : f32
    %41 = vector.broadcast %cst_17 : f32 to vector<64x128xf32>
    %42 = arith.mulf %41, %38 : vector<64x128xf32>
    %43 = arith.select %40, %38, %42 : vector<64x128xi1>, vector<64x128xf32>
    %cst_18 = arith.constant -1.000000e+30 : f32
    %44 = vector.broadcast %cst_18 : f32 to vector<64x128xf32>
    %45 = arith.select %2, %43, %44 : vector<64x128xi1>, vector<64x128xf32>
    %cst_19 = arith.constant dense<0xFF800000> : vector<64xf32>
    %46 = vector.multi_reduction <maximumf>, %45, %cst_19 [1] : vector<64x128xf32> to vector<64xf32>
    %47 = vector.shape_cast %46 : vector<64xf32> to vector<64x1xf32>
    %48 = vector.broadcast %47 : vector<64x1xf32> to vector<64x128xf32>
    %49 = arith.subf %45, %48 : vector<64x128xf32>
    %50 = math.exp %49 : vector<64x128xf32>
    %cst_20 = arith.constant dense<0.000000e+00> : vector<64xf32>
    %51 = vector.multi_reduction <add>, %50, %cst_20 [1] : vector<64x128xf32> to vector<64xf32>
    %52 = vector.shape_cast %51 : vector<64xf32> to vector<64x1xf32>
    %53 = tpu.reciprocal %52 {approx = true} : vector<64x1xf32> -> vector<64x1xf32>
    %54 = vector.broadcast %53 : vector<64x1xf32> to vector<64x128xf32>
    %55 = arith.mulf %50, %54 : vector<64x128xf32>
    %c1 = arith.constant 1 : index
    %c0_21 = arith.constant 0 : index
    %c0_22 = arith.constant 0 : index
    %56 = vector.load %arg7[%c1, %c0_21, %c0_22] : memref<2x64x128xf32, #tpu.memory_space<vmem>>, vector<1x64x128xf32>
    %57 = vector.shape_cast %56 : vector<1x64x128xf32> to vector<64x128xf32>
    %58 = vector.shape_cast %55 : vector<64x128xf32> to vector<1x64x128xf32>
    tpu.vector_store %arg7[%c1, %c0_21, %c0_22], %58 {strides = array<i32>} : memref<2x64x128xf32, #tpu.memory_space<vmem>>, vector<1x64x128xf32>,
    %59 = arith.truncf %55 : vector<64x128xf32> to vector<64x128xbf16>
    %60 = vector.extract_strided_slice %5 {offsets = [0, 8], sizes = [128, 8], strides = [1, 1]} : vector<128x16xbf16> to vector<128x8xbf16>
    %cst_23 = arith.constant dense<0.000000e+00> : vector<64x8xf32>
    %61 = tpu.matmul %59, %60, %cst_23 {dimension_numbers = #tpu.dot_dimension_numbers<[1], [0], [0], [1], [0, 0, 1, 1], [], []>} : vector<64x128xbf16>, vector<128x8xbf16>, vector<64x8xf32> -> vector<64x8xf32>
    %62 = tpu.concatenate %33, %61 in 1 : vector<64x8xf32>, vector<64x8xf32> -> vector<64x16xf32>
    %c0_24 = arith.constant 0 : index
    %c0_25 = arith.constant 0 : index
    %63 = vector.load %arg5[%c0_24, %c0_25] : memref<64x16xf32, #tpu.memory_space<vmem>>, vector<64x16xf32>
    %64 = arith.addf %62, %63 : vector<64x16xf32>
    %c0_26 = arith.constant 0 : index
    %c0_27 = arith.constant 0 : index
    %65 = vector.load %arg6[%c0_26, %c0_27] : memref<64x16xf32, #tpu.memory_space<vmem>>, vector<64x16xf32>
    tpu.vector_store %arg6[%c0_26, %c0_27], %64 {strides = array<i32>} : memref<64x16xf32, #tpu.memory_space<vmem>>, vector<64x16xf32>,
    return
  }
  func.func @transform_0(%arg0: i32) -> (i32, i32) {
    %c0_i32 = arith.constant 0 : i32
    %c0_i32_0 = arith.constant 0 : i32
    return %arg0, %c0_i32 : i32, i32
  }
  func.func @transform_1(%arg0: i32) -> (i32, i32) {
    %c0_i32 = arith.constant 0 : i32
    %c0_i32_0 = arith.constant 0 : i32
    return %arg0, %c0_i32 : i32, i32
  }
  func.func @transform_2(%arg0: i32) -> (i32, i32) {
    %c0_i32 = arith.constant 0 : i32
    %c0_i32_0 = arith.constant 0 : i32
    %c0_i32_1 = arith.constant 0 : i32
    return %c0_i32, %c0_i32_0 : i32, i32
  }
  func.func @transform_3(%arg0: i32) -> (i32, i32) {
    %c0_i32 = arith.constant 0 : i32
    %c0_i32_0 = arith.constant 0 : i32
    %c0_i32_1 = arith.constant 0 : i32
    return %c0_i32, %c0_i32_0 : i32, i32
  }
  func.func @transform_4(%arg0: i32) -> (i32, i32) {
    %c0_i32 = arith.constant 0 : i32
    %c0_i32_0 = arith.constant 0 : i32
    return %arg0, %c0_i32 : i32, i32
  }
  func.func @transform_5(%arg0: i32) -> (i32, i32) {
    %c0_i32 = arith.constant 0 : i32
    %c0_i32_0 = arith.constant 0 : i32
    return %arg0, %c0_i32 : i32, i32
  }
  func.func @transform_6(%arg0: i32) -> (i32, i32, i32) {
    %c0_i32 = arith.constant 0 : i32
    %c0_i32_0 = arith.constant 0 : i32
    %c0_i32_1 = arith.constant 0 : i32
    return %c0_i32, %arg0, %c0_i32_0 : i32, i32, i32
  }
}

</mosaic_0001>

<llo_original>
// kernel: ogb_gat_forward.4
$region0: #{ogb_gat_forward.4}
  #allocation0 [shape = 'u32[]', space=smem, size = 0x4, offset = 0x4, fixed_abs, tag = 'smem constant byte address 0x4 - core index']
  #allocation1 [shape = 'u32[72,128]{1,0:T(1,128)}', space=vmem, size = 0x9000, scoped, tag = 'internal scratch']
  %s0 = inlined_call_operand.vmem [shape: bf16[128,32], index: 0, kind: input, shape index: {}]
  %s1 = inlined_call_operand.vmem [shape: bf16[32,64], index: 1, kind: input, shape index: {}]
  %s2 = inlined_call_operand.vmem [shape: f32[2,16], index: 2, kind: input, shape index: {}]
  %s3 = inlined_call_operand.vmem [shape: f32[2,16], index: 3, kind: input, shape index: {}]
  %s4 = inlined_call_operand.vmem [shape: bf16[128,32], index: 4, kind: output, shape index: {0}]
  %s5 = inlined_call_operand.vmem [shape: f32[128,32], index: 5, kind: output, shape index: {1}]
  %s6 = inlined_call_operand.vmem [shape: f32[128,2], index: 6, kind: output, shape index: {2}]
  %s7 = inlined_call_operand.vmem [shape: f32[128,2], index: 7, kind: output, shape index: {3}]
  %8 = xla_tuple %s4, %s5, %s6, %s7
  %s9 = sld [smem:[#allocation0]]
  $region73: #{ogb_gat_forward.4} parent=0
    _
  %s11 = ssub.s32 1, %s9
  %s12 = scalar_select 0, %s11, %s9
  loop: start=0, step=1, limit=4
  $region2: #{ogb_gat_forward.4} parent=0 // loop_pre_header
    _
  $region3: #{ogb_gat_forward.4} parent=0 // loop_header
    %s14 = sphi 0, %s18
    %p15 = scmp.ge.s32.totalorder %s14, 4
    %s24 = sphi 0, %s26
    %s27 = sphi 0, %s24
    %s28 = sphi 0, %s27
    %s44 = sphi 0, %s28
    %s48 = sphi 0, %s48
    %s50 = sphi 0, %s48
    %s51 = sphi 0, %s50
    %s65 = sphi 0, %s51
    %s69 = sphi 0, %s69
    %s71 = sphi 0, %s69
    %s72 = sphi 0, %s71
    %s86 = sphi 0, %s72
    %s90 = sphi 0, %s90
    %s92 = sphi 0, %s90
    %s93 = sphi 0, %s92
    %s107 = sphi 0, %s93
    %s113 = sphi 0, %s115
    %s116 = sphi 0, %s113
    %s117 = sphi 0, %s116
    %s133 = sphi 0, %s117
    %s139 = sphi 0, %s141
    %s142 = sphi 0, %s139
    %s143 = sphi 0, %s142
    %s159 = sphi 0, %s143
    %s165 = sphi 0, %s167
    %s168 = sphi 0, %s165
    %s169 = sphi 0, %s168
    %s185 = sphi 0, %s169
    %s191 = sphi 0, %s193
    %s194 = sphi 0, %s191
    %s195 = sphi 0, %s194
    %s211 = sphi 0, %s195
  $region4: #{ogb_gat_forward.4} parent=0 // loop_header_branch
    %17 = sbr.rel (%p15) target = $region8
  $region5: #{ogb_gat_forward.4} parent=0 // loop_body
    %s19 = ssub.s32 %s14, 1
    %s20 = ssub.s32 %s14, 2
    %s21 = sadd.s32 %s14, 1
    %s22 = ssub.s32 %s14, %s21
    %p23 = scmp.eq.s32.totalorder %s22, 0
    %s25 = sadd.s32 %s24, 1
    %s26 = scalar_select %p23, %s24, %s25
    %p29 = pneg %p23
    %p30 = scmp.eq.s32.totalorder %s14, 1
    %p31 = por %p29, %p30
    %p32 = scmp.ne.s32.totalorder %s24, %s27
    %p33 = scmp.eq.s32.totalorder %s14, 0
    %p34 = por %p32, %p33
    %p35 = scmp.ne.s32.totalorder %s24, %s27
    %p36 = scmp.eq.s32.totalorder %s19, 1
    %p37 = por %p35, %p36
    %p38 = scmp.ne.s32.totalorder %s27, %s28
    %p39 = scmp.eq.s32.totalorder %s19, 0
    %p40 = por %p38, %p39
    %p41 = scmp.ne.s32.totalorder %s27, %s28
    %p42 = scmp.eq.s32.totalorder %s20, 1
    %p43 = por %p41, %p42
    %p45 = scmp.ne.s32.totalorder %s28, %s44
    %p46 = scmp.eq.s32.totalorder %s20, 0
    %p47 = por %p45, %p46
    %s49 = sadd.s32 %s48, 1
    %p52 = scmp.eq.s32.totalorder %s14, 1
    %p53 = scmp.ne.s32.totalorder %s48, %s50
    %p54 = scmp.eq.s32.totalorder %s14, 0
    %p55 = por %p53, %p54
    %p56 = scmp.ne.s32.totalorder %s48, %s50
    %p57 = scmp.eq.s32.totalorder %s19, 1
    %p58 = por %p56, %p57
    %p59 = scmp.ne.s32.totalorder %s50, %s51
    %p60 = scmp.eq.s32.totalorder %s19, 0
    %p61 = por %p59, %p60
    %p62 = scmp.ne.s32.totalorder %s50, %s51
    %p63 = scmp.eq.s32.totalorder %s20, 1
    %p64 = por %p62, %p63
    %p66 = scmp.ne.s32.totalorder %s51, %s65
    %p67 = scmp.eq.s32.totalorder %s20, 0
    %p68 = por %p66, %p67
    %s70 = sadd.s32 %s69, 1
    %p73 = scmp.eq.s32.totalorder %s14, 1
    %p74 = scmp.ne.s32.totalorder %s69, %s71
    %p75 = scmp.eq.s32.totalorder %s14, 0
    %p76 = por %p74, %p75
    %p77 = scmp.ne.s32.totalorder %s69, %s71
    %p78 = scmp.eq.s32.totalorder %s19, 1
    %p79 = por %p77, %p78
    %p80 = scmp.ne.s32.totalorder %s71, %s72
    %p81 = scmp.eq.s32.totalorder %s19, 0
    %p82 = por %p80, %p81
    %p83 = scmp.ne.s32.totalorder %s71, %s72
    %p84 = scmp.eq.s32.totalorder %s20, 1
    %p85 = por %p83, %p84
    %p87 = scmp.ne.s32.totalorder %s72, %s86
    %p88 = scmp.eq.s32.totalorder %s20, 0
    %p89 = por %p87, %p88
    %s91 = sadd.s32 %s90, 1
    %p94 = scmp.eq.s32.totalorder %s14, 1
    %p95 = scmp.ne.s32.totalorder %s90, %s92
    %p96 = scmp.eq.s32.totalorder %s14, 0
    %p97 = por %p95, %p96
    %p98 = scmp.ne.s32.totalorder %s90, %s92
    %p99 = scmp.eq.s32.totalorder %s19, 1
    %p100 = por %p98, %p99
    %p101 = scmp.ne.s32.totalorder %s92, %s93
    %p102 = scmp.eq.s32.totalorder %s19, 0
    %p103 = por %p101, %p102
    %p104 = scmp.ne.s32.totalorder %s92, %s93
    %p105 = scmp.eq.s32.totalorder %s20, 1
    %p106 = por %p104, %p105
    %p108 = scmp.ne.s32.totalorder %s93, %s107
    %p109 = scmp.eq.s32.totalorder %s20, 0
    %p110 = por %p108, %p109
    %s111 = ssub.s32 %s14, %s21
    %p112 = scmp.eq.s32.totalorder %s111, 0
    %s114 = sadd.s32 %s113, 1
    %s115 = scalar_select %p112, %s113, %s114
    %p118 = pneg %p112
    %p119 = scmp.eq.s32.totalorder %s14, 1
    %p120 = por %p118, %p119
    %p121 = scmp.ne.s32.totalorder %s113, %s116
    %p122 = scmp.eq.s32.totalorder %s14, 0
    %p123 = por %p121, %p122
    %p124 = scmp.ne.s32.totalorder %s113, %s116
    %p125 = scmp.eq.s32.totalorder %s19, 1
    %p126 = por %p124, %p125
    %p127 = scmp.ne.s32.totalorder %s116, %s117
    %p128 = scmp.eq.s32.totalorder %s19, 0
    %p129 = por %p127, %p128
    %p130 = scmp.ne.s32.totalorder %s116, %s117
    %p131 = scmp.eq.s32.totalorder %s20, 1
    %p132 = por %p130, %p131
    %p134 = scmp.ne.s32.totalorder %s117, %s133
    %p135 = scmp.eq.s32.totalorder %s20, 0
    %p136 = por %p134, %p135
    %s137 = ssub.s32 %s14, %s21
    %p138 = scmp.eq.s32.totalorder %s137, 0
    %s140 = sadd.s32 %s139, 1
    %s141 = scalar_select %p138, %s139, %s140
    %p144 = pneg %p138
    %p145 = scmp.eq.s32.totalorder %s14, 1
    %p146 = por %p144, %p145
    %p147 = scmp.ne.s32.totalorder %s139, %s142
    %p148 = scmp.eq.s32.totalorder %s14, 0
    %p149 = por %p147, %p148
    %p150 = scmp.ne.s32.totalorder %s139, %s142
    %p151 = scmp.eq.s32.totalorder %s19, 1
    %p152 = por %p150, %p151
    %p153 = scmp.ne.s32.totalorder %s142, %s143
    %p154 = scmp.eq.s32.totalorder %s19, 0
    %p155 = por %p153, %p154
    %p156 = scmp.ne.s32.totalorder %s142, %s143
    %p157 = scmp.eq.s32.totalorder %s20, 1
    %p158 = por %p156, %p157
    %p160 = scmp.ne.s32.totalorder %s143, %s159
    %p161 = scmp.eq.s32.totalorder %s20, 0
    %p162 = por %p160, %p161
    %s163 = ssub.s32 %s14, %s21
    %p164 = scmp.eq.s32.totalorder %s163, 0
    %s166 = sadd.s32 %s165, 1
    %s167 = scalar_select %p164, %s165, %s166
    %p170 = pneg %p164
    %p171 = scmp.eq.s32.totalorder %s14, 1
    %p172 = por %p170, %p171
    %p173 = scmp.ne.s32.totalorder %s165, %s168
    %p174 = scmp.eq.s32.totalorder %s14, 0
    %p175 = por %p173, %p174
    %p176 = scmp.ne.s32.totalorder %s165, %s168
    %p177 = scmp.eq.s32.totalorder %s19, 1
    %p178 = por %p176, %p177
    %p179 = scmp.ne.s32.totalorder %s168, %s169
    %p180 = scmp.eq.s32.totalorder %s19, 0
    %p181 = por %p179, %p180
    %p182 = scmp.ne.s32.totalorder %s168, %s169
    %p183 = scmp.eq.s32.totalorder %s20, 1
    %p184 = por %p182, %p183
    %p186 = scmp.ne.s32.totalorder %s169, %s185
    %p187 = scmp.eq.s32.totalorder %s20, 0
    %p188 = por %p186, %p187
    %s189 = ssub.s32 %s14, %s21
    %p190 = scmp.eq.s32.totalorder %s189, 0
    %s192 = sadd.s32 %s191, 1
    %s193 = scalar_select %p190, %s191, %s192
    %p196 = pneg %p190
    %p197 = scmp.eq.s32.totalorder %s14, 1
    %p198 = por %p196, %p197
    %p199 = scmp.ne.s32.totalorder %s191, %s194
    %p200 = scmp.eq.s32.totalorder %s14, 0
    %p201 = por %p199, %p200
    %p202 = scmp.ne.s32.totalorder %s191, %s194
    %p203 = scmp.eq.s32.totalorder %s19, 1
    %p204 = por %p202, %p203
    %p205 = scmp.ne.s32.totalorder %s194, %s195
    %p206 = scmp.eq.s32.totalorder %s19, 0
    %p207 = por %p205, %p206
    %p208 = scmp.ne.s32.totalorder %s194, %s195
    %p209 = scmp.eq.s32.totalorder %s20, 1
    %p210 = por %p208, %p209
    %p212 = scmp.ne.s32.totalorder %s195, %s211
    %p213 = scmp.eq.s32.totalorder %s20, 0
    %p214 = por %p212, %p213
    %p215 = scmp.le.s32.totalorder 1, %s14
    %p216 = scmp.lt.s32.totalorder %s14, 3
    %p217 = pnand %p215, %p216
    %p218 = pneg %p217
    // Predicated region
    $region9: #{ogb_gat_forward.4} parent=5 // pred_check
      _
    $region10: #{ogb_gat_forward.4} parent=5 // pred_check_branch
      %220 = sbr.rel (%p217) target = $region12
    $region11: #{ogb_gat_forward.4} parent=5 // pred_region
      %s221 = ssub.s32 %s14, 1
      // Predicated region
      $region13: #{ogb_gat_forward.4} parent=11 // pred_check
        %p222 = pneg %p61
      $region14: #{ogb_gat_forward.4} parent=11 // pred_check_branch
        %224 = sbr.rel (%p222) target = $region16
      $region15: #{ogb_gat_forward.4} parent=11 // pred_region
        _
      $region16: #{ogb_gat_forward.4} parent=11 // pred_fallthru
        _
      // Predicated region
      $region17: #{ogb_gat_forward.4} parent=11 // pred_check
        %p225 = pneg %p82
      $region18: #{ogb_gat_forward.4} parent=11 // pred_check_branch
        %227 = sbr.rel (%p225) target = $region20
      $region19: #{ogb_gat_forward.4} parent=11 // pred_region
        _
      $region20: #{ogb_gat_forward.4} parent=11 // pred_fallthru
        _
      // Predicated region
      $region21: #{ogb_gat_forward.4} parent=11 // pred_check
        %p228 = pneg %p103
      $region22: #{ogb_gat_forward.4} parent=11 // pred_check_branch
        %230 = sbr.rel (%p228) target = $region24
      $region23: #{ogb_gat_forward.4} parent=11 // pred_region
        _
      $region24: #{ogb_gat_forward.4} parent=11 // pred_fallthru
        _
    $region12: #{ogb_gat_forward.4} parent=5 // pred_fallthru
      _
    %p231 = scmp.lt.s32.totalorder %s14, 2
    // Predicated region
    $region25: #{ogb_gat_forward.4} parent=5 // pred_check
      %p232 = pneg %p231
    $region26: #{ogb_gat_forward.4} parent=5 // pred_check_branch
      %234 = sbr.rel (%p232) target = $region28
    $region27: #{ogb_gat_forward.4} parent=5 // pred_region
      // Predicated region
      $region29: #{ogb_gat_forward.4} parent=27 // pred_check
        %p235 = pneg %p34
      $region30: #{ogb_gat_forward.4} parent=27 // pred_check_branch
        %237 = sbr.rel (%p235) target = $region32
      $region31: #{ogb_gat_forward.4} parent=27 // pred_region
        %s238 = smul.u32 8, %s14
        %p239 = scmp.lt.s32.totalorder %s238, 15
        %s240 = scalar_select %p239, %s238, 15
        %s241 = smul.addr %s240, 4
        %s242 = scalar_lea.vmem %s0, %s241
        %s243 = smul.u32 8, %s14
      $region32: #{ogb_gat_forward.4} parent=27 // pred_fallthru
        _
    $region28: #{ogb_gat_forward.4} parent=5 // pred_fallthru
      _
    %p244 = scmp.le.s32.totalorder 1, %s14
    %p245 = scmp.lt.s32.totalorder %s14, 3
    %p246 = pnand %p244, %p245
    %p247 = pneg %p246
    // Predicated region
    $region33: #{ogb_gat_forward.4} parent=5 // pred_check
      _
    $region34: #{ogb_gat_forward.4} parent=5 // pred_check_branch
      %249 = sbr.rel (%p246) target = $region36
    $region35: #{ogb_gat_forward.4} parent=5 // pred_region
      %s250 = ssub.s32 %s14, 1
      %s251 = smul.u32 8, %s19
      %p252 = scmp.lt.s32.totalorder %s251, 15
      %s253 = scalar_select %p252, %s251, 15
      %s254 = smul.addr %s253, 4
      %s255 = scalar_lea.vmem %s0, %s254
      %p256 = pneg %p40
      %p257 = pneg %p37
      %p258 = pneg %p61
      %p259 = pneg %p58
      %p260 = pneg %p82
      %p261 = pneg %p79
      %p262 = pneg %p103
      %p263 = pneg %p100
      %p264 = pneg %p129
      %p265 = pneg %p126
      %s266 = smul.u32 8, %s19
      %p267 = scmp.lt.s32.totalorder %s266, 15
      %s268 = scalar_select %p267, %s266, 15
      %s269 = smul.addr %s268, 4
      %s270 = scalar_lea.vmem %s4, %s269
      %p271 = pneg %p155
      %p272 = pneg %p152
      %s273 = smul.u32 8, %s19
      %p274 = scmp.lt.s32.totalorder %s273, 15
      %s275 = scalar_select %p274, %s273, 15
      %s276 = smul.addr %s275, 8
      %s277 = scalar_lea.vmem %s5, %s276
      %p278 = pneg %p181
      %p279 = pneg %p178
      %s280 = smul.u32 8, %s19
      %p281 = scmp.lt.s32.totalorder %s280, 15
      %s282 = scalar_select %p281, %s280, 15
      %s283 = smul.addr %s282, 8
      %s284 = scalar_lea.vmem %s6, %s283
      %p285 = pneg %p207
      %p286 = pneg %p204
      %s287 = smul.u32 8, %s19
      %p288 = scmp.lt.s32.totalorder %s287, 15
      %s289 = scalar_select %p288, %s287, 15
      %s290 = smul.addr %s289, 8
      %s291 = scalar_lea.vmem %s7, %s290
      %s292 = smul.u32 8, %s19
      %p293 = scmp.lt.s32.totalorder %s292, 15
      %s294 = scalar_select %p293, %s292, 15
      %s295 = smul.addr %s294, 4
      %s296 = scalar_lea.vmem %s0, %s295
      %s297 = smul.u32 8, %s19
      %s298 = smul.u32 8, %s19
      %p299 = scmp.lt.s32.totalorder %s298, 15
      %s300 = scalar_select %p299, %s298, 15
      %s301 = smul.addr %s300, 4
      %s302 = scalar_lea.vmem %s4, %s301
      %s303 = smul.u32 8, %s19
      %s304 = smul.u32 8, %s19
      %p305 = scmp.lt.s32.totalorder %s304, 15
      %s306 = scalar_select %p305, %s304, 15
      %s307 = smul.addr %s306, 8
      %s308 = scalar_lea.vmem %s5, %s307
      %s309 = smul.u32 8, %s19
      %s310 = smul.u32 8, %s19
      %p311 = scmp.lt.s32.totalorder %s310, 15
      %s312 = scalar_select %p311, %s310, 15
      %s313 = smul.addr %s312, 8
      %s314 = scalar_lea.vmem %s6, %s313
      %s315 = smul.u32 8, %s19
      %s316 = smul.u32 8, %s19
      %p317 = scmp.lt.s32.totalorder %s316, 15
      %s318 = scalar_select %p317, %s316, 15
      %s319 = smul.addr %s318, 8
      %s320 = scalar_lea.vmem %s7, %s319
      %s321 = smul.u32 8, %s19
      %v323 = vld [vmem:[%s296] sm:$0xf]
      %v324 = vld [vmem:[%s296 + $0x4] sm:$0xf]
      %v325 = vld [vmem:[%s296 + $0x8] sm:$0xf]
      %v326 = vld [vmem:[%s296 + $0xc] sm:$0xf]
      %v327 = vld [vmem:[%s296 + $0x10] sm:$0xf]
      %v328 = vld [vmem:[%s296 + $0x14] sm:$0xf]
      %v329 = vld [vmem:[%s296 + $0x18] sm:$0xf]
      %v330 = vld [vmem:[%s296 + $0x1c] sm:$0xf]
      %v331 = vld [vmem:[%s1] sm:$0xf]
      %v332 = vld [vmem:[%s1 + $0x4] sm:$0xf]
      %v333 = vld [vmem:[%s1 + $0x8] sm:$0xf]
      %v334 = vld [vmem:[%s1 + $0xc] sm:$0xf]
      %v343 = vunpack.c.l.b16 %v323
      %v344 = vunpack.c.l.b16 %v324
      %v345 = vunpack.c.l.b16 %v325
      %v346 = vunpack.c.l.b16 %v326
      %v347 = vunpack.c.l.b16 %v327
      %v348 = vunpack.c.l.b16 %v328
      %v349 = vunpack.c.l.b16 %v329
      %v350 = vunpack.c.l.b16 %v330
      %v351 = vpack.c.b16 %v344, %v343
      %v352 = vpack.c.b16 %v346, %v345
      %v353 = vpack.c.b16 %v348, %v347
      %v354 = vpack.c.b16 %v350, %v349
      %v359 = vunpack.c.l.b16 %v331
      %v360 = vunpack.c.l.b16 %v332
      %v361 = vunpack.c.l.b16 %v333
      %v362 = vunpack.c.l.b16 %v334
      %v363 = vpack.c.b16 %v360, %v359
      %v364 = vpack.c.b16 %v362, %v361
      %vm367 = vcmask 261120
      %v369 = vsel %vm367, %v351, 0
      %v372 = vsel %vm367, %v352, 0
      %v375 = vsel %vm367, %v353, 0
      %v378 = vsel %vm367, %v354, 0
      %380 = vmatpush.bf16.msra.mxu0 0
      %381 = vmatpush.bf16.msra.mxu0 0
      %382 = vmatpush.bf16.msra.mxu0 0
      %383 = vmatpush.bf16.msra.mxu0 0
      %384 = vmatpush.bf16.msra.mxu0 0
      %385 = vmatpush.bf16.msra.mxu0 0
      %386 = vmatpush.bf16.msra.mxu0 %v364
      %387 = vmatpush.bf16.msra.mxu0 %v363
      %388 = vmatmul.bf16.gmra.mxu0 %v369
      %v389 = vpop.f32.mrf.mxu0
      %v390 = vadd.f32 0.0, %v389
      %v391 = vpop.f32.mrf.mxu0
      %v392 = vadd.f32 0.0, %v391
      %393 = vmatmul.bf16.gmra.mxu0 %v372
      %v394 = vpop.f32.mrf.mxu0
      %v395 = vadd.f32 0.0, %v394
      %v396 = vpop.f32.mrf.mxu0
      %v397 = vadd.f32 0.0, %v396
      %398 = vmatmul.bf16.gmra.mxu0 %v375
      %v399 = vpop.f32.mrf.mxu0
      %v400 = vadd.f32 0.0, %v399
      %v401 = vpop.f32.mrf.mxu0
      %v402 = vadd.f32 0.0, %v401
      %403 = vmatmul.bf16.gmra.mxu0 %v378
      %v404 = vpop.f32.mrf.mxu0
      %v405 = vadd.f32 0.0, %v404
      %v406 = vpop.f32.mrf.mxu0
      %v407 = vadd.f32 0.0, %v406
      %408 = vdwg.mxu0
      %v409 = vld [vmem:[%s2] sm:$0x1]
      %v410 = vperm.slane %v409, 0
      %v411 = vmul.f32 %v390, %v410
      %v412 = vmul.f32 %v392, %v410
      %v413 = vmul.f32 %v395, %v410
      %v414 = vmul.f32 %v397, %v410
      %v415 = vmul.f32 %v400, %v410
      %v416 = vmul.f32 %v402, %v410
      %v417 = vmul.f32 %v405, %v410
      %v418 = vmul.f32 %v407, %v410
      %vm419 = vcmask 130048
      %v420 = vsel %vm419, %v411, 0.0
      %421 = vadd.xlane.f32.xlu0 %v420
      %v422 = vpop.xlane.xlu0 %421
      %v423 = vsel %vm419, %v412, 0.0
      %424 = vadd.xlane.f32.xlu0 %v423
      %v425 = vpop.xlane.xlu0 %424
      %v426 = vsel %vm419, %v413, 0.0
      %427 = vadd.xlane.f32.xlu0 %v426
      %v428 = vpop.xlane.xlu0 %427
      %v429 = vsel %vm419, %v414, 0.0
      %430 = vadd.xlane.f32.xlu0 %v429
      %v431 = vpop.xlane.xlu0 %430
      %v432 = vsel %vm419, %v415, 0.0
      %433 = vadd.xlane.f32.xlu0 %v432
      %v434 = vpop.xlane.xlu0 %433
      %v435 = vsel %vm419, %v416, 0.0
      %436 = vadd.xlane.f32.xlu0 %v435
      %v437 = vpop.xlane.xlu0 %436
      %v438 = vsel %vm419, %v417, 0.0
      %439 = vadd.xlane.f32.xlu0 %v438
      %v440 = vpop.xlane.xlu0 %439
      %v441 = vsel %vm419, %v418, 0.0
      %442 = vadd.xlane.f32.xlu0 %v441
      %v443 = vpop.xlane.xlu0 %442
      %v444 = vld [vmem:[%s3] sm:$0x1]
      %v445 = vperm.slane %v444, 0
      %v446 = vmul.f32 %v390, %v445
      %v447 = vmul.f32 %v392, %v445
      %v448 = vmul.f32 %v395, %v445
      %v449 = vmul.f32 %v397, %v445
      %v450 = vmul.f32 %v400, %v445
      %v451 = vmul.f32 %v402, %v445
      %v452 = vmul.f32 %v405, %v445
      %v453 = vmul.f32 %v407, %v445
      %v454 = vsel %vm419, %v446, 0.0
      %455 = vadd.xlane.f32.xlu0 %v454
      %v456 = vpop.xlane.xlu0 %455
      %v457 = vsel %vm419, %v447, 0.0
      %458 = vadd.xlane.f32.xlu0 %v457
      %v459 = vpop.xlane.xlu0 %458
      %v460 = vsel %vm419, %v448, 0.0
      %461 = vadd.xlane.f32.xlu0 %v460
      %v462 = vpop.xlane.xlu0 %461
      %v463 = vsel %vm419, %v449, 0.0
      %464 = vadd.xlane.f32.xlu0 %v463
      %v465 = vpop.xlane.xlu0 %464
      %v466 = vsel %vm419, %v450, 0.0
      %467 = vadd.xlane.f32.xlu0 %v466
      %v468 = vpop.xlane.xlu0 %467
      %v469 = vsel %vm419, %v451, 0.0
      %470 = vadd.xlane.f32.xlu0 %v469
      %v471 = vpop.xlane.xlu0 %470
      %v472 = vsel %vm419, %v452, 0.0
      %473 = vadd.xlane.f32.xlu0 %v472
      %v474 = vpop.xlane.xlu0 %473
      %v475 = vsel %vm419, %v453, 0.0
      %476 = vadd.xlane.f32.xlu0 %v475
      %v477 = vpop.xlane.xlu0 %476
      %v478 = vld [vmem:[%s2 + $0x1] sm:$0x1]
      %v479 = vperm.slane %v478, 0
      %481 = vrot.lane.b32.xlu0 %v479, 16
      %v482 = vpop.permute.xlu0 %481
      %v484 = vmul.f32 %v390, %v482
      %v485 = vmul.f32 %v392, %v482
      %v486 = vmul.f32 %v395, %v482
      %v487 = vmul.f32 %v397, %v482
      %v488 = vmul.f32 %v400, %v482
      %v489 = vmul.f32 %v402, %v482
      %v490 = vmul.f32 %v405, %v482
      %v491 = vmul.f32 %v407, %v482
      %500 = vrot.lane.b32.xlu0 %v484, 112
      %v501 = vpop.permute.xlu0 %500
      %502 = vrot.lane.b32.xlu0 %v485, 112
      %v503 = vpop.permute.xlu0 %502
      %504 = vrot.lane.b32.xlu0 %v486, 112
      %v505 = vpop.permute.xlu0 %504
      %506 = vrot.lane.b32.xlu0 %v487, 112
      %v507 = vpop.permute.xlu0 %506
      %508 = vrot.lane.b32.xlu0 %v488, 112
      %v509 = vpop.permute.xlu0 %508
      %510 = vrot.lane.b32.xlu0 %v489, 112
      %v511 = vpop.permute.xlu0 %510
      %512 = vrot.lane.b32.xlu0 %v490, 112
      %v513 = vpop.permute.xlu0 %512
      %514 = vrot.lane.b32.xlu0 %v491, 112
      %v515 = vpop.permute.xlu0 %514
      %v524 = vsel %vm419, %v501, 0.0
      %525 = vadd.xlane.f32.xlu0 %v524
      %v526 = vpop.xlane.xlu0 %525
      %v527 = vsel %vm419, %v503, 0.0
      %528 = vadd.xlane.f32.xlu0 %v527
      %v529 = vpop.xlane.xlu0 %528
      %v530 = vsel %vm419, %v505, 0.0
      %531 = vadd.xlane.f32.xlu0 %v530
      %v532 = vpop.xlane.xlu0 %531
      %v533 = vsel %vm419, %v507, 0.0
      %534 = vadd.xlane.f32.xlu0 %v533
      %v535 = vpop.xlane.xlu0 %534
      %v536 = vsel %vm419, %v509, 0.0
      %537 = vadd.xlane.f32.xlu0 %v536
      %v538 = vpop.xlane.xlu0 %537
      %v539 = vsel %vm419, %v511, 0.0
      %540 = vadd.xlane.f32.xlu0 %v539
      %v541 = vpop.xlane.xlu0 %540
      %v542 = vsel %vm419, %v513, 0.0
      %543 = vadd.xlane.f32.xlu0 %v542
      %v544 = vpop.xlane.xlu0 %543
      %v545 = vsel %vm419, %v515, 0.0
      %546 = vadd.xlane.f32.xlu0 %v545
      %v547 = vpop.xlane.xlu0 %546
      %v548 = vld [vmem:[%s3 + $0x1] sm:$0x1]
      %v549 = vperm.slane %v548, 0
      %551 = vrot.lane.b32.xlu0 %v549, 16
      %v552 = vpop.permute.xlu0 %551
      %v554 = vmul.f32 %v390, %v552
      %v555 = vmul.f32 %v392, %v552
      %v556 = vmul.f32 %v395, %v552
      %v557 = vmul.f32 %v397, %v552
      %v558 = vmul.f32 %v400, %v552
      %v559 = vmul.f32 %v402, %v552
      %v560 = vmul.f32 %v405, %v552
      %v561 = vmul.f32 %v407, %v552
      %570 = vrot.lane.b32.xlu0 %v554, 112
      %v571 = vpop.permute.xlu0 %570
      %572 = vrot.lane.b32.xlu0 %v555, 112
      %v573 = vpop.permute.xlu0 %572
      %574 = vrot.lane.b32.xlu0 %v556, 112
      %v575 = vpop.permute.xlu0 %574
      %576 = vrot.lane.b32.xlu0 %v557, 112
      %v577 = vpop.permute.xlu0 %576
      %578 = vrot.lane.b32.xlu0 %v558, 112
      %v579 = vpop.permute.xlu0 %578
      %580 = vrot.lane.b32.xlu0 %v559, 112
      %v581 = vpop.permute.xlu0 %580
      %582 = vrot.lane.b32.xlu0 %v560, 112
      %v583 = vpop.permute.xlu0 %582
      %584 = vrot.lane.b32.xlu0 %v561, 112
      %v585 = vpop.permute.xlu0 %584
      %v594 = vsel %vm419, %v571, 0.0
      %595 = vadd.xlane.f32.xlu0 %v594
      %v596 = vpop.xlane.xlu0 %595
      %v597 = vsel %vm419, %v573, 0.0
      %598 = vadd.xlane.f32.xlu0 %v597
      %v599 = vpop.xlane.xlu0 %598
      %v600 = vsel %vm419, %v575, 0.0
      %601 = vadd.xlane.f32.xlu0 %v600
      %v602 = vpop.xlane.xlu0 %601
      %v603 = vsel %vm419, %v577, 0.0
      %604 = vadd.xlane.f32.xlu0 %v603
      %v605 = vpop.xlane.xlu0 %604
      %v606 = vsel %vm419, %v579, 0.0
      %607 = vadd.xlane.f32.xlu0 %v606
      %v608 = vpop.xlane.xlu0 %607
      %v609 = vsel %vm419, %v581, 0.0
      %610 = vadd.xlane.f32.xlu0 %v609
      %v611 = vpop.xlane.xlu0 %610
      %v612 = vsel %vm419, %v583, 0.0
      %613 = vadd.xlane.f32.xlu0 %v612
      %v614 = vpop.xlane.xlu0 %613
      %v615 = vsel %vm419, %v585, 0.0
      %616 = vadd.xlane.f32.xlu0 %v615
      %v617 = vpop.xlane.xlu0 %616
      %v618 = vpack.c.bf16 %v390, %v390
      %v619 = vpack.c.bf16 %v392, %v392
      %v620 = vpack.c.bf16 %v395, %v395
      %v621 = vpack.c.bf16 %v397, %v397
      %v622 = vpack.c.bf16 %v400, %v400
      %v623 = vpack.c.bf16 %v402, %v402
      %v624 = vpack.c.bf16 %v405, %v405
      %v625 = vpack.c.bf16 %v407, %v407
      %vm626 = vcmask 257024
      %627 = vst.msk [vmem:[%s302] sm:$0xf] %vm626, %v618
      %628 = vst.msk [vmem:[%s302 + $0x4] sm:$0xf] %vm626, %v619
      %629 = vst.msk [vmem:[%s302 + $0x8] sm:$0xf] %vm626, %v620
      %630 = vst.msk [vmem:[%s302 + $0xc] sm:$0xf] %vm626, %v621
      %631 = vst.msk [vmem:[%s302 + $0x10] sm:$0xf] %vm626, %v622
      %632 = vst.msk [vmem:[%s302 + $0x14] sm:$0xf] %vm626, %v623
      %633 = vst.msk [vmem:[%s302 + $0x18] sm:$0xf] %vm626, %v624
      %634 = vst.msk [vmem:[%s302 + $0x1c] sm:$0xf] %vm626, %v625
      %643 = vrot.lane.b32.xlu0 %v390, 96
      %v644 = vpop.permute.xlu0 %643
      %645 = vrot.lane.b32.xlu0 %v392, 96
      %v646 = vpop.permute.xlu0 %645
      %647 = vrot.lane.b32.xlu0 %v395, 96
      %v648 = vpop.permute.xlu0 %647
      %649 = vrot.lane.b32.xlu0 %v397, 96
      %v650 = vpop.permute.xlu0 %649
      %651 = vrot.lane.b32.xlu0 %v400, 96
      %v652 = vpop.permute.xlu0 %651
      %653 = vrot.lane.b32.xlu0 %v402, 96
      %v654 = vpop.permute.xlu0 %653
      %655 = vrot.lane.b32.xlu0 %v405, 96
      %v656 = vpop.permute.xlu0 %655
      %657 = vrot.lane.b32.xlu0 %v407, 96
      %v658 = vpop.permute.xlu0 %657
      %667 = vst.msk [vmem:[%s308] sm:$0xff] %vm367, %v644
      %668 = vst.msk [vmem:[%s308 + $0x8] sm:$0xff] %vm367, %v646
      %669 = vst.msk [vmem:[%s308 + $0x10] sm:$0xff] %vm367, %v648
      %670 = vst.msk [vmem:[%s308 + $0x18] sm:$0xff] %vm367, %v650
      %671 = vst.msk [vmem:[%s308 + $0x20] sm:$0xff] %vm367, %v652
      %672 = vst.msk [vmem:[%s308 + $0x28] sm:$0xff] %vm367, %v654
      %673 = vst.msk [vmem:[%s308 + $0x30] sm:$0xff] %vm367, %v656
      %674 = vst.msk [vmem:[%s308 + $0x38] sm:$0xff] %vm367, %v658
      %vm675 = vcmask 7168
      %v676 = vsel %vm675, %v422, %v526
      %v677 = vsel %vm675, %v425, %v529
      %v678 = vsel %vm675, %v428, %v532
      %v679 = vsel %vm675, %v431, %v535
      %v680 = vsel %vm675, %v434, %v538
      %v681 = vsel %vm675, %v437, %v541
      %v682 = vsel %vm675, %v440, %v544
      %v683 = vsel %vm675, %v443, %v547
      %vm684 = vcmask 15360
      %685 = vst.msk [vmem:[%s314] sm:$0xff] %vm684, %v676
      %686 = vst.msk [vmem:[%s314 + $0x8] sm:$0xff] %vm684, %v677
      %687 = vst.msk [vmem:[%s314 + $0x10] sm:$0xff] %vm684, %v678
      %688 = vst.msk [vmem:[%s314 + $0x18] sm:$0xff] %vm684, %v679
      %689 = vst.msk [vmem:[%s314 + $0x20] sm:$0xff] %vm684, %v680
      %690 = vst.msk [vmem:[%s314 + $0x28] sm:$0xff] %vm684, %v681
      %691 = vst.msk [vmem:[%s314 + $0x30] sm:$0xff] %vm684, %v682
      %692 = vst.msk [vmem:[%s314 + $0x38] sm:$0xff] %vm684, %v683
      %v693 = vsel %vm675, %v456, %v596
      %v694 = vsel %vm675, %v459, %v599
      %v695 = vsel %vm675, %v462, %v602
      %v696 = vsel %vm675, %v465, %v605
      %v697 = vsel %vm675, %v468, %v608
      %v698 = vsel %vm675, %v471, %v611
      %v699 = vsel %vm675, %v474, %v614
      %v700 = vsel %vm675, %v477, %v617
      %701 = vst.msk [vmem:[%s320] sm:$0xff] %vm684, %v693
      %702 = vst.msk [vmem:[%s320 + $0x8] sm:$0xff] %vm684, %v694
      %703 = vst.msk [vmem:[%s320 + $0x10] sm:$0xff] %vm684, %v695
      %704 = vst.msk [vmem:[%s320 + $0x18] sm:$0xff] %vm684, %v696
      %705 = vst.msk [vmem:[%s320 + $0x20] sm:$0xff] %vm684, %v697
      %706 = vst.msk [vmem:[%s320 + $0x28] sm:$0xff] %vm684, %v698
      %707 = vst.msk [vmem:[%s320 + $0x30] sm:$0xff] %vm684, %v699
      %708 = vst.msk [vmem:[%s320 + $0x38] sm:$0xff] %vm684, %v700
      %s709 = smul.u32 8, %s19
      %p710 = scmp.lt.s32.totalorder %s709, 15
      %s711 = scalar_select %p710, %s709, 15
      %s712 = smul.addr %s711, 4
      %s713 = scalar_lea.vmem %s4, %s712
      %s714 = smul.u32 8, %s19
      %p715 = scmp.lt.s32.totalorder %s714, 15
      %s716 = scalar_select %p715, %s714, 15
      %s717 = smul.addr %s716, 8
      %s718 = scalar_lea.vmem %s5, %s717
      %s719 = smul.u32 8, %s19
      %p720 = scmp.lt.s32.totalorder %s719, 15
      %s721 = scalar_select %p720, %s719, 15
      %s722 = smul.addr %s721, 8
      %s723 = scalar_lea.vmem %s6, %s722
      %s724 = smul.u32 8, %s19
      %p725 = scmp.lt.s32.totalorder %s724, 15
      %s726 = scalar_select %p725, %s724, 15
      %s727 = smul.addr %s726, 8
      %s728 = scalar_lea.vmem %s7, %s727
      // Predicated region
      $region37: #{ogb_gat_forward.4} parent=35 // pred_check
        %p729 = pneg %p126
      $region38: #{ogb_gat_forward.4} parent=35 // pred_check_branch
        %731 = sbr.rel (%p729) target = $region40
      $region39: #{ogb_gat_forward.4} parent=35 // pred_region
        %s732 = smul.u32 8, %s19
      $region40: #{ogb_gat_forward.4} parent=35 // pred_fallthru
        _
      // Predicated region
      $region41: #{ogb_gat_forward.4} parent=35 // pred_check
        %p733 = pneg %p152
      $region42: #{ogb_gat_forward.4} parent=35 // pred_check_branch
        %735 = sbr.rel (%p733) target = $region44
      $region43: #{ogb_gat_forward.4} parent=35 // pred_region
        %s736 = smul.u32 8, %s19
      $region44: #{ogb_gat_forward.4} parent=35 // pred_fallthru
        _
      // Predicated region
      $region45: #{ogb_gat_forward.4} parent=35 // pred_check
        %p737 = pneg %p178
      $region46: #{ogb_gat_forward.4} parent=35 // pred_check_branch
        %739 = sbr.rel (%p737) target = $region48
      $region47: #{ogb_gat_forward.4} parent=35 // pred_region
        %s740 = smul.u32 8, %s19
      $region48: #{ogb_gat_forward.4} parent=35 // pred_fallthru
        _
      // Predicated region
      $region49: #{ogb_gat_forward.4} parent=35 // pred_check
        %p741 = pneg %p204
      $region50: #{ogb_gat_forward.4} parent=35 // pred_check_branch
        %743 = sbr.rel (%p741) target = $region52
      $region51: #{ogb_gat_forward.4} parent=35 // pred_region
        %s744 = smul.u32 8, %s19
      $region52: #{ogb_gat_forward.4} parent=35 // pred_fallthru
        _
    $region36: #{ogb_gat_forward.4} parent=5 // pred_fallthru
      _
    %p745 = scmp.le.s32.totalorder 2, %s14
    // Predicated region
    $region53: #{ogb_gat_forward.4} parent=5 // pred_check
      %p746 = pneg %p745
    $region54: #{ogb_gat_forward.4} parent=5 // pred_check_branch
      %748 = sbr.rel (%p746) target = $region56
    $region55: #{ogb_gat_forward.4} parent=5 // pred_region
      %s749 = ssub.s32 %s14, 2
      // Predicated region
      $region57: #{ogb_gat_forward.4} parent=55 // pred_check
        %p750 = pneg %p132
      $region58: #{ogb_gat_forward.4} parent=55 // pred_check_branch
        %752 = sbr.rel (%p750) target = $region60
      $region59: #{ogb_gat_forward.4} parent=55 // pred_region
        %s753 = smul.u32 8, %s20
        %p754 = scmp.lt.s32.totalorder %s753, 15
        %s755 = scalar_select %p754, %s753, 15
        %s756 = smul.addr %s755, 4
        %s757 = scalar_lea.vmem %s4, %s756
      $region60: #{ogb_gat_forward.4} parent=55 // pred_fallthru
        _
      // Predicated region
      $region61: #{ogb_gat_forward.4} parent=55 // pred_check
        %p758 = pneg %p158
      $region62: #{ogb_gat_forward.4} parent=55 // pred_check_branch
        %760 = sbr.rel (%p758) target = $region64
      $region63: #{ogb_gat_forward.4} parent=55 // pred_region
        %s761 = smul.u32 8, %s20
        %p762 = scmp.lt.s32.totalorder %s761, 15
        %s763 = scalar_select %p762, %s761, 15
        %s764 = smul.addr %s763, 8
        %s765 = scalar_lea.vmem %s5, %s764
      $region64: #{ogb_gat_forward.4} parent=55 // pred_fallthru
        _
      // Predicated region
      $region65: #{ogb_gat_forward.4} parent=55 // pred_check
        %p766 = pneg %p184
      $region66: #{ogb_gat_forward.4} parent=55 // pred_check_branch
        %768 = sbr.rel (%p766) target = $region68
      $region67: #{ogb_gat_forward.4} parent=55 // pred_region
        %s769 = smul.u32 8, %s20
        %p770 = scmp.lt.s32.totalorder %s769, 15
        %s771 = scalar_select %p770, %s769, 15
        %s772 = smul.addr %s771, 8
        %s773 = scalar_lea.vmem %s6, %s772
      $region68: #{ogb_gat_forward.4} parent=55 // pred_fallthru
        _
      // Predicated region
      $region69: #{ogb_gat_forward.4} parent=55 // pred_check
        %p774 = pneg %p210
      $region70: #{ogb_gat_forward.4} parent=55 // pred_check_branch
        %776 = sbr.rel (%p774) target = $region72
      $region71: #{ogb_gat_forward.4} parent=55 // pred_region
        %s777 = smul.u32 8, %s20
        %p778 = scmp.lt.s32.totalorder %s777, 15
        %s779 = scalar_select %p778, %s777, 15
        %s780 = smul.addr %s779, 8
        %s781 = scalar_lea.vmem %s7, %s780
      $region72: #{ogb_gat_forward.4} parent=55 // pred_fallthru
        _
    $region56: #{ogb_gat_forward.4} parent=5 // pred_fallthru
      _
  $region6: #{ogb_gat_forward.4} parent=0 // loop_footer
    %s18 = sadd.s32 1, %s14
  $region7: #{ogb_gat_forward.4} parent=0 // loop_footer_branch
    %13 = sbr.rel target = $region3
  $region8: #{ogb_gat_forward.4} parent=0 // loop_exit
    _

// kernel: ogb_gat_forward.6
$region0: #{ogb_gat_forward.6}
  #allocation0 [shape = 'u32[]', space=smem, size = 0x4, offset = 0x4, fixed_abs, tag = 'smem constant byte address 0x4 - core index']
  #allocation1 [shape = 'u32[72,128]{1,0:T(1,128)}', space=vmem, size = 0x9000, scoped, tag = 'internal scratch']
  %s0 = inlined_call_operand.vmem [shape: bf16[128,32], index: 0, kind: input, shape index: {}]
  %s1 = inlined_call_operand.vmem [shape: bf16[32,32], index: 1, kind: input, shape index: {}]
  %s2 = inlined_call_operand.vmem [shape: f32[2,8], index: 2, kind: input, shape index: {}]
  %s3 = inlined_call_operand.vmem [shape: f32[2,8], index: 3, kind: input, shape index: {}]
  %s4 = inlined_call_operand.vmem [shape: bf16[128,16], index: 4, kind: output, shape index: {0}]
  %s5 = inlined_call_operand.vmem [shape: f32[128,16], index: 5, kind: output, shape index: {1}]
  %s6 = inlined_call_operand.vmem [shape: f32[128,2], index: 6, kind: output, shape index: {2}]
  %s7 = inlined_call_operand.vmem [shape: f32[128,2], index: 7, kind: output, shape index: {3}]
  %8 = xla_tuple %s4, %s5, %s6, %s7
  %s9 = sld [smem:[#allocation0]]
  $region73: #{ogb_gat_forward.6} parent=0
    _
  %s11 = ssub.s32 1, %s9
  %s12 = scalar_select 0, %s11, %s9
  loop: start=0, step=1, limit=4
  $region2: #{ogb_gat_forward.6} parent=0 // loop_pre_header
    _
  $region3: #{ogb_gat_forward.6} parent=0 // loop_header
    %s14 = sphi 0, %s18
    %p15 = scmp.ge.s32.totalorder %s14, 4
    %s24 = sphi 0, %s26
    %s27 = sphi 0, %s24
    %s28 = sphi 0, %s27
    %s44 = sphi 0, %s28
    %s48 = sphi 0, %s48
    %s50 = sphi 0, %s48
    %s51 = sphi 0, %s50
    %s65 = sphi 0, %s51
    %s69 = sphi 0, %s69
    %s71 = sphi 0, %s69
    %s72 = sphi 0, %s71
    %s86 = sphi 0, %s72
    %s90 = sphi 0, %s90
    %s92 = sphi 0, %s90
    %s93 = sphi 0, %s92
    %s107 = sphi 0, %s93
    %s113 = sphi 0, %s115
    %s116 = sphi 0, %s113
    %s117 = sphi 0, %s116
    %s133 = sphi 0, %s117
    %s139 = sphi 0, %s141
    %s142 = sphi 0, %s139
    %s143 = sphi 0, %s142
    %s159 = sphi 0, %s143
    %s165 = sphi 0, %s167
    %s168 = sphi 0, %s165
    %s169 = sphi 0, %s168
    %s185 = sphi 0, %s169
    %s191 = sphi 0, %s193
    %s194 = sphi 0, %s191
    %s195 = sphi 0, %s194
    %s211 = sphi 0, %s195
  $region4: #{ogb_gat_forward.6} parent=0 // loop_header_branch
    %17 = sbr.rel (%p15) target = $region8
  $region5: #{ogb_gat_forward.6} parent=0 // loop_body
    %s19 = ssub.s32 %s14, 1
    %s20 = ssub.s32 %s14, 2
    %s21 = sadd.s32 %s14, 1
    %s22 = ssub.s32 %s14, %s21
    %p23 = scmp.eq.s32.totalorder %s22, 0
    %s25 = sadd.s32 %s24, 1
    %s26 = scalar_select %p23, %s24, %s25
    %p29 = pneg %p23
    %p30 = scmp.eq.s32.totalorder %s14, 1
    %p31 = por %p29, %p30
    %p32 = scmp.ne.s32.totalorder %s24, %s27
    %p33 = scmp.eq.s32.totalorder %s14, 0
    %p34 = por %p32, %p33
    %p35 = scmp.ne.s32.totalorder %s24, %s27
    %p36 = scmp.eq.s32.totalorder %s19, 1
    %p37 = por %p35, %p36
    %p38 = scmp.ne.s32.totalorder %s27, %s28
    %p39 = scmp.eq.s32.totalorder %s19, 0
    %p40 = por %p38, %p39
    %p41 = scmp.ne.s32.totalorder %s27, %s28
    %p42 = scmp.eq.s32.totalorder %s20, 1
    %p43 = por %p41, %p42
    %p45 = scmp.ne.s32.totalorder %s28, %s44
    %p46 = scmp.eq.s32.totalorder %s20, 0
    %p47 = por %p45, %p46
    %s49 = sadd.s32 %s48, 1
    %p52 = scmp.eq.s32.totalorder %s14, 1
    %p53 = scmp.ne.s32.totalorder %s48, %s50
    %p54 = scmp.eq.s32.totalorder %s14, 0
    %p55 = por %p53, %p54
    %p56 = scmp.ne.s32.totalorder %s48, %s50
    %p57 = scmp.eq.s32.totalorder %s19, 1
    %p58 = por %p56, %p57
    %p59 = scmp.ne.s32.totalorder %s50, %s51
    %p60 = scmp.eq.s32.totalorder %s19, 0
    %p61 = por %p59, %p60
    %p62 = scmp.ne.s32.totalorder %s50, %s51
    %p63 = scmp.eq.s32.totalorder %s20, 1
    %p64 = por %p62, %p63
    %p66 = scmp.ne.s32.totalorder %s51, %s65
    %p67 = scmp.eq.s32.totalorder %s20, 0
    %p68 = por %p66, %p67
    %s70 = sadd.s32 %s69, 1
    %p73 = scmp.eq.s32.totalorder %s14, 1
    %p74 = scmp.ne.s32.totalorder %s69, %s71
    %p75 = scmp.eq.s32.totalorder %s14, 0
    %p76 = por %p74, %p75
    %p77 = scmp.ne.s32.totalorder %s69, %s71
    %p78 = scmp.eq.s32.totalorder %s19, 1
    %p79 = por %p77, %p78
    %p80 = scmp.ne.s32.totalorder %s71, %s72
    %p81 = scmp.eq.s32.totalorder %s19, 0
    %p82 = por %p80, %p81
    %p83 = scmp.ne.s32.totalorder %s71, %s72
    %p84 = scmp.eq.s32.totalorder %s20, 1
    %p85 = por %p83, %p84
    %p87 = scmp.ne.s32.totalorder %s72, %s86
    %p88 = scmp.eq.s32.totalorder %s20, 0
    %p89 = por %p87, %p88
    %s91 = sadd.s32 %s90, 1
    %p94 = scmp.eq.s32.totalorder %s14, 1
    %p95 = scmp.ne.s32.totalorder %s90, %s92
    %p96 = scmp.eq.s32.totalorder %s14, 0
    %p97 = por %p95, %p96
    %p98 = scmp.ne.s32.totalorder %s90, %s92
    %p99 = scmp.eq.s32.totalorder %s19, 1
    %p100 = por %p98, %p99
    %p101 = scmp.ne.s32.totalorder %s92, %s93
    %p102 = scmp.eq.s32.totalorder %s19, 0
    %p103 = por %p101, %p102
    %p104 = scmp.ne.s32.totalorder %s92, %s93
    %p105 = scmp.eq.s32.totalorder %s20, 1
    %p106 = por %p104, %p105
    %p108 = scmp.ne.s32.totalorder %s93, %s107
    %p109 = scmp.eq.s32.totalorder %s20, 0
    %p110 = por %p108, %p109
    %s111 = ssub.s32 %s14, %s21
    %p112 = scmp.eq.s32.totalorder %s111, 0
    %s114 = sadd.s32 %s113, 1
    %s115 = scalar_select %p112, %s113, %s114
    %p118 = pneg %p112
    %p119 = scmp.eq.s32.totalorder %s14, 1
    %p120 = por %p118, %p119
    %p121 = scmp.ne.s32.totalorder %s113, %s116
    %p122 = scmp.eq.s32.totalorder %s14, 0
    %p123 = por %p121, %p122
    %p124 = scmp.ne.s32.totalorder %s113, %s116
    %p125 = scmp.eq.s32.totalorder %s19, 1
    %p126 = por %p124, %p125
    %p127 = scmp.ne.s32.totalorder %s116, %s117
    %p128 = scmp.eq.s32.totalorder %s19, 0
    %p129 = por %p127, %p128
    %p130 = scmp.ne.s32.totalorder %s116, %s117
    %p131 = scmp.eq.s32.totalorder %s20, 1
    %p132 = por %p130, %p131
    %p134 = scmp.ne.s32.totalorder %s117, %s133
    %p135 = scmp.eq.s32.totalorder %s20, 0
    %p136 = por %p134, %p135
    %s137 = ssub.s32 %s14, %s21
    %p138 = scmp.eq.s32.totalorder %s137, 0
    %s140 = sadd.s32 %s139, 1
    %s141 = scalar_select %p138, %s139, %s140
    %p144 = pneg %p138
    %p145 = scmp.eq.s32.totalorder %s14, 1
    %p146 = por %p144, %p145
    %p147 = scmp.ne.s32.totalorder %s139, %s142
    %p148 = scmp.eq.s32.totalorder %s14, 0
    %p149 = por %p147, %p148
    %p150 = scmp.ne.s32.totalorder %s139, %s142
    %p151 = scmp.eq.s32.totalorder %s19, 1
    %p152 = por %p150, %p151
    %p153 = scmp.ne.s32.totalorder %s142, %s143
    %p154 = scmp.eq.s32.totalorder %s19, 0
    %p155 = por %p153, %p154
    %p156 = scmp.ne.s32.totalorder %s142, %s143
    %p157 = scmp.eq.s32.totalorder %s20, 1
    %p158 = por %p156, %p157
    %p160 = scmp.ne.s32.totalorder %s143, %s159
    %p161 = scmp.eq.s32.totalorder %s20, 0
    %p162 = por %p160, %p161
    %s163 = ssub.s32 %s14, %s21
    %p164 = scmp.eq.s32.totalorder %s163, 0
    %s166 = sadd.s32 %s165, 1
    %s167 = scalar_select %p164, %s165, %s166
    %p170 = pneg %p164
    %p171 = scmp.eq.s32.totalorder %s14, 1
    %p172 = por %p170, %p171
    %p173 = scmp.ne.s32.totalorder %s165, %s168
    %p174 = scmp.eq.s32.totalorder %s14, 0
    %p175 = por %p173, %p174
    %p176 = scmp.ne.s32.totalorder %s165, %s168
    %p177 = scmp.eq.s32.totalorder %s19, 1
    %p178 = por %p176, %p177
    %p179 = scmp.ne.s32.totalorder %s168, %s169
    %p180 = scmp.eq.s32.totalorder %s19, 0
    %p181 = por %p179, %p180
    %p182 = scmp.ne.s32.totalorder %s168, %s169
    %p183 = scmp.eq.s32.totalorder %s20, 1
    %p184 = por %p182, %p183
    %p186 = scmp.ne.s32.totalorder %s169, %s185
    %p187 = scmp.eq.s32.totalorder %s20, 0
    %p188 = por %p186, %p187
    %s189 = ssub.s32 %s14, %s21
    %p190 = scmp.eq.s32.totalorder %s189, 0
    %s192 = sadd.s32 %s191, 1
    %s193 = scalar_select %p190, %s191, %s192
    %p196 = pneg %p190
    %p197 = scmp.eq.s32.totalorder %s14, 1
    %p198 = por %p196, %p197
    %p199 = scmp.ne.s32.totalorder %s191, %s194
    %p200 = scmp.eq.s32.totalorder %s14, 0
    %p201 = por %p199, %p200
    %p202 = scmp.ne.s32.totalorder %s191, %s194
    %p203 = scmp.eq.s32.totalorder %s19, 1
    %p204 = por %p202, %p203
    %p205 = scmp.ne.s32.totalorder %s194, %s195
    %p206 = scmp.eq.s32.totalorder %s19, 0
    %p207 = por %p205, %p206
    %p208 = scmp.ne.s32.totalorder %s194, %s195
    %p209 = scmp.eq.s32.totalorder %s20, 1
    %p210 = por %p208, %p209
    %p212 = scmp.ne.s32.totalorder %s195, %s211
    %p213 = scmp.eq.s32.totalorder %s20, 0
    %p214 = por %p212, %p213
    %p215 = scmp.le.s32.totalorder 1, %s14
    %p216 = scmp.lt.s32.totalorder %s14, 3
    %p217 = pnand %p215, %p216
    %p218 = pneg %p217
    // Predicated region
    $region9: #{ogb_gat_forward.6} parent=5 // pred_check
      _
    $region10: #{ogb_gat_forward.6} parent=5 // pred_check_branch
      %220 = sbr.rel (%p217) target = $region12
    $region11: #{ogb_gat_forward.6} parent=5 // pred_region
      %s221 = ssub.s32 %s14, 1
      // Predicated region
      $region13: #{ogb_gat_forward.6} parent=11 // pred_check
        %p222 = pneg %p61
      $region14: #{ogb_gat_forward.6} parent=11 // pred_check_branch
        %224 = sbr.rel (%p222) target = $region16
      $region15: #{ogb_gat_forward.6} parent=11 // pred_region
        _
      $region16: #{ogb_gat_forward.6} parent=11 // pred_fallthru
        _
      // Predicated region
      $region17: #{ogb_gat_forward.6} parent=11 // pred_check
        %p225 = pneg %p82
      $region18: #{ogb_gat_forward.6} parent=11 // pred_check_branch
        %227 = sbr.rel (%p225) target = $region20
      $region19: #{ogb_gat_forward.6} parent=11 // pred_region
        _
      $region20: #{ogb_gat_forward.6} parent=11 // pred_fallthru
        _
      // Predicated region
      $region21: #{ogb_gat_forward.6} parent=11 // pred_check
        %p228 = pneg %p103
      $region22: #{ogb_gat_forward.6} parent=11 // pred_check_branch
        %230 = sbr.rel (%p228) target = $region24
      $region23: #{ogb_gat_forward.6} parent=11 // pred_region
        _
      $region24: #{ogb_gat_forward.6} parent=11 // pred_fallthru
        _
    $region12: #{ogb_gat_forward.6} parent=5 // pred_fallthru
      _
    %p231 = scmp.lt.s32.totalorder %s14, 2
    // Predicated region
    $region25: #{ogb_gat_forward.6} parent=5 // pred_check
      %p232 = pneg %p231
    $region26: #{ogb_gat_forward.6} parent=5 // pred_check_branch
      %234 = sbr.rel (%p232) target = $region28
    $region27: #{ogb_gat_forward.6} parent=5 // pred_region
      // Predicated region
      $region29: #{ogb_gat_forward.6} parent=27 // pred_check
        %p235 = pneg %p34
      $region30: #{ogb_gat_forward.6} parent=27 // pred_check_branch
        %237 = sbr.rel (%p235) target = $region32
      $region31: #{ogb_gat_forward.6} parent=27 // pred_region
        %s238 = smul.u32 8, %s14
        %p239 = scmp.lt.s32.totalorder %s238, 15
        %s240 = scalar_select %p239, %s238, 15
        %s241 = smul.addr %s240, 4
        %s242 = scalar_lea.vmem %s0, %s241
        %s243 = smul.u32 8, %s14
      $region32: #{ogb_gat_forward.6} parent=27 // pred_fallthru
        _
    $region28: #{ogb_gat_forward.6} parent=5 // pred_fallthru
      _
    %p244 = scmp.le.s32.totalorder 1, %s14
    %p245 = scmp.lt.s32.totalorder %s14, 3
    %p246 = pnand %p244, %p245
    %p247 = pneg %p246
    // Predicated region
    $region33: #{ogb_gat_forward.6} parent=5 // pred_check
      _
    $region34: #{ogb_gat_forward.6} parent=5 // pred_check_branch
      %249 = sbr.rel (%p246) target = $region36
    $region35: #{ogb_gat_forward.6} parent=5 // pred_region
      %s250 = ssub.s32 %s14, 1
      %s251 = smul.u32 8, %s19
      %p252 = scmp.lt.s32.totalorder %s251, 15
      %s253 = scalar_select %p252, %s251, 15
      %s254 = smul.addr %s253, 4
      %s255 = scalar_lea.vmem %s0, %s254
      %p256 = pneg %p40
      %p257 = pneg %p37
      %p258 = pneg %p61
      %p259 = pneg %p58
      %p260 = pneg %p82
      %p261 = pneg %p79
      %p262 = pneg %p103
      %p263 = pneg %p100
      %p264 = pneg %p129
      %p265 = pneg %p126
      %s266 = smul.u32 8, %s19
      %p267 = scmp.lt.s32.totalorder %s266, 15
      %s268 = scalar_select %p267, %s266, 15
      %s269 = smul.addr %s268, 4
      %s270 = scalar_lea.vmem %s4, %s269
      %p271 = pneg %p155
      %p272 = pneg %p152
      %s273 = smul.u32 8, %s19
      %p274 = scmp.lt.s32.totalorder %s273, 15
      %s275 = scalar_select %p274, %s273, 15
      %s276 = smul.addr %s275, 8
      %s277 = scalar_lea.vmem %s5, %s276
      %p278 = pneg %p181
      %p279 = pneg %p178
      %s280 = smul.u32 8, %s19
      %p281 = scmp.lt.s32.totalorder %s280, 15
      %s282 = scalar_select %p281, %s280, 15
      %s283 = smul.addr %s282, 8
      %s284 = scalar_lea.vmem %s6, %s283
      %p285 = pneg %p207
      %p286 = pneg %p204
      %s287 = smul.u32 8, %s19
      %p288 = scmp.lt.s32.totalorder %s287, 15
      %s289 = scalar_select %p288, %s287, 15
      %s290 = smul.addr %s289, 8
      %s291 = scalar_lea.vmem %s7, %s290
      %s292 = smul.u32 8, %s19
      %p293 = scmp.lt.s32.totalorder %s292, 15
      %s294 = scalar_select %p293, %s292, 15
      %s295 = smul.addr %s294, 4
      %s296 = scalar_lea.vmem %s0, %s295
      %s297 = smul.u32 8, %s19
      %s298 = smul.u32 8, %s19
      %p299 = scmp.lt.s32.totalorder %s298, 15
      %s300 = scalar_select %p299, %s298, 15
      %s301 = smul.addr %s300, 4
      %s302 = scalar_lea.vmem %s4, %s301
      %s303 = smul.u32 8, %s19
      %s304 = smul.u32 8, %s19
      %p305 = scmp.lt.s32.totalorder %s304, 15
      %s306 = scalar_select %p305, %s304, 15
      %s307 = smul.addr %s306, 8
      %s308 = scalar_lea.vmem %s5, %s307
      %s309 = smul.u32 8, %s19
      %s310 = smul.u32 8, %s19
      %p311 = scmp.lt.s32.totalorder %s310, 15
      %s312 = scalar_select %p311, %s310, 15
      %s313 = smul.addr %s312, 8
      %s314 = scalar_lea.vmem %s6, %s313
      %s315 = smul.u32 8, %s19
      %s316 = smul.u32 8, %s19
      %p317 = scmp.lt.s32.totalorder %s316, 15
      %s318 = scalar_select %p317, %s316, 15
      %s319 = smul.addr %s318, 8
      %s320 = scalar_lea.vmem %s7, %s319
      %s321 = smul.u32 8, %s19
      %v323 = vld [vmem:[%s296] sm:$0xf]
      %v324 = vld [vmem:[%s296 + $0x4] sm:$0xf]
      %v325 = vld [vmem:[%s296 + $0x8] sm:$0xf]
      %v326 = vld [vmem:[%s296 + $0xc] sm:$0xf]
      %v327 = vld [vmem:[%s296 + $0x10] sm:$0xf]
      %v328 = vld [vmem:[%s296 + $0x14] sm:$0xf]
      %v329 = vld [vmem:[%s296 + $0x18] sm:$0xf]
      %v330 = vld [vmem:[%s296 + $0x1c] sm:$0xf]
      %v331 = vld [vmem:[%s1] sm:$0xf]
      %v332 = vld [vmem:[%s1 + $0x4] sm:$0xf]
      %v333 = vld [vmem:[%s1 + $0x8] sm:$0xf]
      %v334 = vld [vmem:[%s1 + $0xc] sm:$0xf]
      %v343 = vunpack.c.l.b16 %v323
      %v344 = vunpack.c.l.b16 %v324
      %v345 = vunpack.c.l.b16 %v325
      %v346 = vunpack.c.l.b16 %v326
      %v347 = vunpack.c.l.b16 %v327
      %v348 = vunpack.c.l.b16 %v328
      %v349 = vunpack.c.l.b16 %v329
      %v350 = vunpack.c.l.b16 %v330
      %v351 = vpack.c.b16 %v344, %v343
      %v352 = vpack.c.b16 %v346, %v345
      %v353 = vpack.c.b16 %v348, %v347
      %v354 = vpack.c.b16 %v350, %v349
      %v359 = vunpack.c.l.b16 %v331
      %v360 = vunpack.c.l.b16 %v332
      %v361 = vunpack.c.l.b16 %v333
      %v362 = vunpack.c.l.b16 %v334
      %v363 = vpack.c.b16 %v360, %v359
      %v364 = vpack.c.b16 %v362, %v361
      %vm367 = vcmask 261120
      %v369 = vsel %vm367, %v351, 0
      %v372 = vsel %vm367, %v352, 0
      %v375 = vsel %vm367, %v353, 0
      %v378 = vsel %vm367, %v354, 0
      %380 = vmatpush.bf16.msra.mxu0 0
      %381 = vmatpush.bf16.msra.mxu0 0
      %382 = vmatpush.bf16.msra.mxu0 0
      %383 = vmatpush.bf16.msra.mxu0 0
      %384 = vmatpush.bf16.msra.mxu0 0
      %385 = vmatpush.bf16.msra.mxu0 0
      %386 = vmatpush.bf16.msra.mxu0 %v364
      %387 = vmatpush.bf16.msra.mxu0 %v363
      %388 = vmatmul.bf16.gmra.mxu0 %v369
      %v389 = vpop.f32.mrf.mxu0
      %v390 = vadd.f32 0.0, %v389
      %v391 = vpop.f32.mrf.mxu0
      %v392 = vadd.f32 0.0, %v391
      %393 = vmatmul.bf16.gmra.mxu0 %v372
      %v394 = vpop.f32.mrf.mxu0
      %v395 = vadd.f32 0.0, %v394
      %v396 = vpop.f32.mrf.mxu0
      %v397 = vadd.f32 0.0, %v396
      %398 = vmatmul.bf16.gmra.mxu0 %v375
      %v399 = vpop.f32.mrf.mxu0
      %v400 = vadd.f32 0.0, %v399
      %v401 = vpop.f32.mrf.mxu0
      %v402 = vadd.f32 0.0, %v401
      %403 = vmatmul.bf16.gmra.mxu0 %v378
      %v404 = vpop.f32.mrf.mxu0
      %v405 = vadd.f32 0.0, %v404
      %v406 = vpop.f32.mrf.mxu0
      %v407 = vadd.f32 0.0, %v406
      %408 = vdwg.mxu0
      %v409 = vld [vmem:[%s2] sm:$0x1]
      %v410 = vperm.slane %v409, 0
      %v411 = vmul.f32 %v390, %v410
      %v412 = vmul.f32 %v392, %v410
      %v413 = vmul.f32 %v395, %v410
      %v414 = vmul.f32 %v397, %v410
      %v415 = vmul.f32 %v400, %v410
      %v416 = vmul.f32 %v402, %v410
      %v417 = vmul.f32 %v405, %v410
      %v418 = vmul.f32 %v407, %v410
      %vm419 = vcmask 64512
      %v420 = vsel %vm419, %v411, 0.0
      %421 = vadd.xlane.f32.xlu0 %v420
      %v422 = vpop.xlane.xlu0 %421
      %v423 = vsel %vm419, %v412, 0.0
      %424 = vadd.xlane.f32.xlu0 %v423
      %v425 = vpop.xlane.xlu0 %424
      %v426 = vsel %vm419, %v413, 0.0
      %427 = vadd.xlane.f32.xlu0 %v426
      %v428 = vpop.xlane.xlu0 %427
      %v429 = vsel %vm419, %v414, 0.0
      %430 = vadd.xlane.f32.xlu0 %v429
      %v431 = vpop.xlane.xlu0 %430
      %v432 = vsel %vm419, %v415, 0.0
      %433 = vadd.xlane.f32.xlu0 %v432
      %v434 = vpop.xlane.xlu0 %433
      %v435 = vsel %vm419, %v416, 0.0
      %436 = vadd.xlane.f32.xlu0 %v435
      %v437 = vpop.xlane.xlu0 %436
      %v438 = vsel %vm419, %v417, 0.0
      %439 = vadd.xlane.f32.xlu0 %v438
      %v440 = vpop.xlane.xlu0 %439
      %v441 = vsel %vm419, %v418, 0.0
      %442 = vadd.xlane.f32.xlu0 %v441
      %v443 = vpop.xlane.xlu0 %442
      %v444 = vld [vmem:[%s3] sm:$0x1]
      %v445 = vperm.slane %v444, 0
      %v446 = vmul.f32 %v390, %v445
      %v447 = vmul.f32 %v392, %v445
      %v448 = vmul.f32 %v395, %v445
      %v449 = vmul.f32 %v397, %v445
      %v450 = vmul.f32 %v400, %v445
      %v451 = vmul.f32 %v402, %v445
      %v452 = vmul.f32 %v405, %v445
      %v453 = vmul.f32 %v407, %v445
      %v454 = vsel %vm419, %v446, 0.0
      %455 = vadd.xlane.f32.xlu0 %v454
      %v456 = vpop.xlane.xlu0 %455
      %v457 = vsel %vm419, %v447, 0.0
      %458 = vadd.xlane.f32.xlu0 %v457
      %v459 = vpop.xlane.xlu0 %458
      %v460 = vsel %vm419, %v448, 0.0
      %461 = vadd.xlane.f32.xlu0 %v460
      %v462 = vpop.xlane.xlu0 %461
      %v463 = vsel %vm419, %v449, 0.0
      %464 = vadd.xlane.f32.xlu0 %v463
      %v465 = vpop.xlane.xlu0 %464
      %v466 = vsel %vm419, %v450, 0.0
      %467 = vadd.xlane.f32.xlu0 %v466
      %v468 = vpop.xlane.xlu0 %467
      %v469 = vsel %vm419, %v451, 0.0
      %470 = vadd.xlane.f32.xlu0 %v469
      %v471 = vpop.xlane.xlu0 %470
      %v472 = vsel %vm419, %v452, 0.0
      %473 = vadd.xlane.f32.xlu0 %v472
      %v474 = vpop.xlane.xlu0 %473
      %v475 = vsel %vm419, %v453, 0.0
      %476 = vadd.xlane.f32.xlu0 %v475
      %v477 = vpop.xlane.xlu0 %476
      %v478 = vld [vmem:[%s2 + $0x1] sm:$0x1]
      %v479 = vperm.slane %v478, 0
      %481 = vrot.lane.b32.xlu0 %v479, 8
      %v482 = vpop.permute.xlu0 %481
      %v484 = vmul.f32 %v390, %v482
      %v485 = vmul.f32 %v392, %v482
      %v486 = vmul.f32 %v395, %v482
      %v487 = vmul.f32 %v397, %v482
      %v488 = vmul.f32 %v400, %v482
      %v489 = vmul.f32 %v402, %v482
      %v490 = vmul.f32 %v405, %v482
      %v491 = vmul.f32 %v407, %v482
      %500 = vrot.lane.b32.xlu0 %v484, 120
      %v501 = vpop.permute.xlu0 %500
      %502 = vrot.lane.b32.xlu0 %v485, 120
      %v503 = vpop.permute.xlu0 %502
      %504 = vrot.lane.b32.xlu0 %v486, 120
      %v505 = vpop.permute.xlu0 %504
      %506 = vrot.lane.b32.xlu0 %v487, 120
      %v507 = vpop.permute.xlu0 %506
      %508 = vrot.lane.b32.xlu0 %v488, 120
      %v509 = vpop.permute.xlu0 %508
      %510 = vrot.lane.b32.xlu0 %v489, 120
      %v511 = vpop.permute.xlu0 %510
      %512 = vrot.lane.b32.xlu0 %v490, 120
      %v513 = vpop.permute.xlu0 %512
      %514 = vrot.lane.b32.xlu0 %v491, 120
      %v515 = vpop.permute.xlu0 %514
      %v524 = vsel %vm419, %v501, 0.0
      %525 = vadd.xlane.f32.xlu0 %v524
      %v526 = vpop.xlane.xlu0 %525
      %v527 = vsel %vm419, %v503, 0.0
      %528 = vadd.xlane.f32.xlu0 %v527
      %v529 = vpop.xlane.xlu0 %528
      %v530 = vsel %vm419, %v505, 0.0
      %531 = vadd.xlane.f32.xlu0 %v530
      %v532 = vpop.xlane.xlu0 %531
      %v533 = vsel %vm419, %v507, 0.0
      %534 = vadd.xlane.f32.xlu0 %v533
      %v535 = vpop.xlane.xlu0 %534
      %v536 = vsel %vm419, %v509, 0.0
      %537 = vadd.xlane.f32.xlu0 %v536
      %v538 = vpop.xlane.xlu0 %537
      %v539 = vsel %vm419, %v511, 0.0
      %540 = vadd.xlane.f32.xlu0 %v539
      %v541 = vpop.xlane.xlu0 %540
      %v542 = vsel %vm419, %v513, 0.0
      %543 = vadd.xlane.f32.xlu0 %v542
      %v544 = vpop.xlane.xlu0 %543
      %v545 = vsel %vm419, %v515, 0.0
      %546 = vadd.xlane.f32.xlu0 %v545
      %v547 = vpop.xlane.xlu0 %546
      %v548 = vld [vmem:[%s3 + $0x1] sm:$0x1]
      %v549 = vperm.slane %v548, 0
      %551 = vrot.lane.b32.xlu0 %v549, 8
      %v552 = vpop.permute.xlu0 %551
      %v554 = vmul.f32 %v390, %v552
      %v555 = vmul.f32 %v392, %v552
      %v556 = vmul.f32 %v395, %v552
      %v557 = vmul.f32 %v397, %v552
      %v558 = vmul.f32 %v400, %v552
      %v559 = vmul.f32 %v402, %v552
      %v560 = vmul.f32 %v405, %v552
      %v561 = vmul.f32 %v407, %v552
      %570 = vrot.lane.b32.xlu0 %v554, 120
      %v571 = vpop.permute.xlu0 %570
      %572 = vrot.lane.b32.xlu0 %v555, 120
      %v573 = vpop.permute.xlu0 %572
      %574 = vrot.lane.b32.xlu0 %v556, 120
      %v575 = vpop.permute.xlu0 %574
      %576 = vrot.lane.b32.xlu0 %v557, 120
      %v577 = vpop.permute.xlu0 %576
      %578 = vrot.lane.b32.xlu0 %v558, 120
      %v579 = vpop.permute.xlu0 %578
      %580 = vrot.lane.b32.xlu0 %v559, 120
      %v581 = vpop.permute.xlu0 %580
      %582 = vrot.lane.b32.xlu0 %v560, 120
      %v583 = vpop.permute.xlu0 %582
      %584 = vrot.lane.b32.xlu0 %v561, 120
      %v585 = vpop.permute.xlu0 %584
      %v594 = vsel %vm419, %v571, 0.0
      %595 = vadd.xlane.f32.xlu0 %v594
      %v596 = vpop.xlane.xlu0 %595
      %v597 = vsel %vm419, %v573, 0.0
      %598 = vadd.xlane.f32.xlu0 %v597
      %v599 = vpop.xlane.xlu0 %598
      %v600 = vsel %vm419, %v575, 0.0
      %601 = vadd.xlane.f32.xlu0 %v600
      %v602 = vpop.xlane.xlu0 %601
      %v603 = vsel %vm419, %v577, 0.0
      %604 = vadd.xlane.f32.xlu0 %v603
      %v605 = vpop.xlane.xlu0 %604
      %v606 = vsel %vm419, %v579, 0.0
      %607 = vadd.xlane.f32.xlu0 %v606
      %v608 = vpop.xlane.xlu0 %607
      %v609 = vsel %vm419, %v581, 0.0
      %610 = vadd.xlane.f32.xlu0 %v609
      %v611 = vpop.xlane.xlu0 %610
      %v612 = vsel %vm419, %v583, 0.0
      %613 = vadd.xlane.f32.xlu0 %v612
      %v614 = vpop.xlane.xlu0 %613
      %v615 = vsel %vm419, %v585, 0.0
      %616 = vadd.xlane.f32.xlu0 %v615
      %v617 = vpop.xlane.xlu0 %616
      %v618 = vpack.c.bf16 %v390, %v390
      %v619 = vpack.c.bf16 %v392, %v392
      %v620 = vpack.c.bf16 %v395, %v395
      %v621 = vpack.c.bf16 %v397, %v397
      %v622 = vpack.c.bf16 %v400, %v400
      %v623 = vpack.c.bf16 %v402, %v402
      %v624 = vpack.c.bf16 %v405, %v405
      %v625 = vpack.c.bf16 %v407, %v407
      %vm626 = vcmask 125952
      %627 = vst.msk [vmem:[%s302] sm:$0xf] %vm626, %v618
      %628 = vst.msk [vmem:[%s302 + $0x4] sm:$0xf] %vm626, %v619
      %629 = vst.msk [vmem:[%s302 + $0x8] sm:$0xf] %vm626, %v620
      %630 = vst.msk [vmem:[%s302 + $0xc] sm:$0xf] %vm626, %v621
      %631 = vst.msk [vmem:[%s302 + $0x10] sm:$0xf] %vm626, %v622
      %632 = vst.msk [vmem:[%s302 + $0x14] sm:$0xf] %vm626, %v623
      %633 = vst.msk [vmem:[%s302 + $0x18] sm:$0xf] %vm626, %v624
      %634 = vst.msk [vmem:[%s302 + $0x1c] sm:$0xf] %vm626, %v625
      %643 = vrot.lane.b32.xlu0 %v390, 112
      %v644 = vpop.permute.xlu0 %643
      %645 = vrot.lane.b32.xlu0 %v392, 112
      %v646 = vpop.permute.xlu0 %645
      %647 = vrot.lane.b32.xlu0 %v395, 112
      %v648 = vpop.permute.xlu0 %647
      %649 = vrot.lane.b32.xlu0 %v397, 112
      %v650 = vpop.permute.xlu0 %649
      %651 = vrot.lane.b32.xlu0 %v400, 112
      %v652 = vpop.permute.xlu0 %651
      %653 = vrot.lane.b32.xlu0 %v402, 112
      %v654 = vpop.permute.xlu0 %653
      %655 = vrot.lane.b32.xlu0 %v405, 112
      %v656 = vpop.permute.xlu0 %655
      %657 = vrot.lane.b32.xlu0 %v407, 112
      %v658 = vpop.permute.xlu0 %657
      %vm667 = vcmask 130048
      %668 = vst.msk [vmem:[%s308] sm:$0xff] %vm667, %v644
      %669 = vst.msk [vmem:[%s308 + $0x8] sm:$0xff] %vm667, %v646
      %670 = vst.msk [vmem:[%s308 + $0x10] sm:$0xff] %vm667, %v648
      %671 = vst.msk [vmem:[%s308 + $0x18] sm:$0xff] %vm667, %v650
      %672 = vst.msk [vmem:[%s308 + $0x20] sm:$0xff] %vm667, %v652
      %673 = vst.msk [vmem:[%s308 + $0x28] sm:$0xff] %vm667, %v654
      %674 = vst.msk [vmem:[%s308 + $0x30] sm:$0xff] %vm667, %v656
      %675 = vst.msk [vmem:[%s308 + $0x38] sm:$0xff] %vm667, %v658
      %vm676 = vcmask 7168
      %v677 = vsel %vm676, %v422, %v526
      %v678 = vsel %vm676, %v425, %v529
      %v679 = vsel %vm676, %v428, %v532
      %v680 = vsel %vm676, %v431, %v535
      %v681 = vsel %vm676, %v434, %v538
      %v682 = vsel %vm676, %v437, %v541
      %v683 = vsel %vm676, %v440, %v544
      %v684 = vsel %vm676, %v443, %v547
      %vm685 = vcmask 15360
      %686 = vst.msk [vmem:[%s314] sm:$0xff] %vm685, %v677
      %687 = vst.msk [vmem:[%s314 + $0x8] sm:$0xff] %vm685, %v678
      %688 = vst.msk [vmem:[%s314 + $0x10] sm:$0xff] %vm685, %v679
      %689 = vst.msk [vmem:[%s314 + $0x18] sm:$0xff] %vm685, %v680
      %690 = vst.msk [vmem:[%s314 + $0x20] sm:$0xff] %vm685, %v681
      %691 = vst.msk [vmem:[%s314 + $0x28] sm:$0xff] %vm685, %v682
      %692 = vst.msk [vmem:[%s314 + $0x30] sm:$0xff] %vm685, %v683
      %693 = vst.msk [vmem:[%s314 + $0x38] sm:$0xff] %vm685, %v684
      %v694 = vsel %vm676, %v456, %v596
      %v695 = vsel %vm676, %v459, %v599
      %v696 = vsel %vm676, %v462, %v602
      %v697 = vsel %vm676, %v465, %v605
      %v698 = vsel %vm676, %v468, %v608
      %v699 = vsel %vm676, %v471, %v611
      %v700 = vsel %vm676, %v474, %v614
      %v701 = vsel %vm676, %v477, %v617
      %702 = vst.msk [vmem:[%s320] sm:$0xff] %vm685, %v694
      %703 = vst.msk [vmem:[%s320 + $0x8] sm:$0xff] %vm685, %v695
      %704 = vst.msk [vmem:[%s320 + $0x10] sm:$0xff] %vm685, %v696
      %705 = vst.msk [vmem:[%s320 + $0x18] sm:$0xff] %vm685, %v697
      %706 = vst.msk [vmem:[%s320 + $0x20] sm:$0xff] %vm685, %v698
      %707 = vst.msk [vmem:[%s320 + $0x28] sm:$0xff] %vm685, %v699
      %708 = vst.msk [vmem:[%s320 + $0x30] sm:$0xff] %vm685, %v700
      %709 = vst.msk [vmem:[%s320 + $0x38] sm:$0xff] %vm685, %v701
      %s710 = smul.u32 8, %s19
      %p711 = scmp.lt.s32.totalorder %s710, 15
      %s712 = scalar_select %p711, %s710, 15
      %s713 = smul.addr %s712, 4
      %s714 = scalar_lea.vmem %s4, %s713
      %s715 = smul.u32 8, %s19
      %p716 = scmp.lt.s32.totalorder %s715, 15
      %s717 = scalar_select %p716, %s715, 15
      %s718 = smul.addr %s717, 8
      %s719 = scalar_lea.vmem %s5, %s718
      %s720 = smul.u32 8, %s19
      %p721 = scmp.lt.s32.totalorder %s720, 15
      %s722 = scalar_select %p721, %s720, 15
      %s723 = smul.addr %s722, 8
      %s724 = scalar_lea.vmem %s6, %s723
      %s725 = smul.u32 8, %s19
      %p726 = scmp.lt.s32.totalorder %s725, 15
      %s727 = scalar_select %p726, %s725, 15
      %s728 = smul.addr %s727, 8
      %s729 = scalar_lea.vmem %s7, %s728
      // Predicated region
      $region37: #{ogb_gat_forward.6} parent=35 // pred_check
        %p730 = pneg %p126
      $region38: #{ogb_gat_forward.6} parent=35 // pred_check_branch
        %732 = sbr.rel (%p730) target = $region40
      $region39: #{ogb_gat_forward.6} parent=35 // pred_region
        %s733 = smul.u32 8, %s19
      $region40: #{ogb_gat_forward.6} parent=35 // pred_fallthru
        _
      // Predicated region
      $region41: #{ogb_gat_forward.6} parent=35 // pred_check
        %p734 = pneg %p152
      $region42: #{ogb_gat_forward.6} parent=35 // pred_check_branch
        %736 = sbr.rel (%p734) target = $region44
      $region43: #{ogb_gat_forward.6} parent=35 // pred_region
        %s737 = smul.u32 8, %s19
      $region44: #{ogb_gat_forward.6} parent=35 // pred_fallthru
        _
      // Predicated region
      $region45: #{ogb_gat_forward.6} parent=35 // pred_check
        %p738 = pneg %p178
      $region46: #{ogb_gat_forward.6} parent=35 // pred_check_branch
        %740 = sbr.rel (%p738) target = $region48
      $region47: #{ogb_gat_forward.6} parent=35 // pred_region
        %s741 = smul.u32 8, %s19
      $region48: #{ogb_gat_forward.6} parent=35 // pred_fallthru
        _
      // Predicated region
      $region49: #{ogb_gat_forward.6} parent=35 // pred_check
        %p742 = pneg %p204
      $region50: #{ogb_gat_forward.6} parent=35 // pred_check_branch
        %744 = sbr.rel (%p742) target = $region52
      $region51: #{ogb_gat_forward.6} parent=35 // pred_region
        %s745 = smul.u32 8, %s19
      $region52: #{ogb_gat_forward.6} parent=35 // pred_fallthru
        _
    $region36: #{ogb_gat_forward.6} parent=5 // pred_fallthru
      _
    %p746 = scmp.le.s32.totalorder 2, %s14
    // Predicated region
    $region53: #{ogb_gat_forward.6} parent=5 // pred_check
      %p747 = pneg %p746
    $region54: #{ogb_gat_forward.6} parent=5 // pred_check_branch
      %749 = sbr.rel (%p747) target = $region56
    $region55: #{ogb_gat_forward.6} parent=5 // pred_region
      %s750 = ssub.s32 %s14, 2
      // Predicated region
      $region57: #{ogb_gat_forward.6} parent=55 // pred_check
        %p751 = pneg %p132
      $region58: #{ogb_gat_forward.6} parent=55 // pred_check_branch
        %753 = sbr.rel (%p751) target = $region60
      $region59: #{ogb_gat_forward.6} parent=55 // pred_region
        %s754 = smul.u32 8, %s20
        %p755 = scmp.lt.s32.totalorder %s754, 15
        %s756 = scalar_select %p755, %s754, 15
        %s757 = smul.addr %s756, 4
        %s758 = scalar_lea.vmem %s4, %s757
      $region60: #{ogb_gat_forward.6} parent=55 // pred_fallthru
        _
      // Predicated region
      $region61: #{ogb_gat_forward.6} parent=55 // pred_check
        %p759 = pneg %p158
      $region62: #{ogb_gat_forward.6} parent=55 // pred_check_branch
        %761 = sbr.rel (%p759) target = $region64
      $region63: #{ogb_gat_forward.6} parent=55 // pred_region
        %s762 = smul.u32 8, %s20
        %p763 = scmp.lt.s32.totalorder %s762, 15
        %s764 = scalar_select %p763, %s762, 15
        %s765 = smul.addr %s764, 8
        %s766 = scalar_lea.vmem %s5, %s765
      $region64: #{ogb_gat_forward.6} parent=55 // pred_fallthru
        _
      // Predicated region
      $region65: #{ogb_gat_forward.6} parent=55 // pred_check
        %p767 = pneg %p184
      $region66: #{ogb_gat_forward.6} parent=55 // pred_check_branch
        %769 = sbr.rel (%p767) target = $region68
      $region67: #{ogb_gat_forward.6} parent=55 // pred_region
        %s770 = smul.u32 8, %s20
        %p771 = scmp.lt.s32.totalorder %s770, 15
        %s772 = scalar_select %p771, %s770, 15
        %s773 = smul.addr %s772, 8
        %s774 = scalar_lea.vmem %s6, %s773
      $region68: #{ogb_gat_forward.6} parent=55 // pred_fallthru
        _
      // Predicated region
      $region69: #{ogb_gat_forward.6} parent=55 // pred_check
        %p775 = pneg %p210
      $region70: #{ogb_gat_forward.6} parent=55 // pred_check_branch
        %777 = sbr.rel (%p775) target = $region72
      $region71: #{ogb_gat_forward.6} parent=55 // pred_region
        %s778 = smul.u32 8, %s20
        %p779 = scmp.lt.s32.totalorder %s778, 15
        %s780 = scalar_select %p779, %s778, 15
        %s781 = smul.addr %s780, 8
        %s782 = scalar_lea.vmem %s7, %s781
      $region72: #{ogb_gat_forward.6} parent=55 // pred_fallthru
        _
    $region56: #{ogb_gat_forward.6} parent=5 // pred_fallthru
      _
  $region6: #{ogb_gat_forward.6} parent=0 // loop_footer
    %s18 = sadd.s32 1, %s14
  $region7: #{ogb_gat_forward.6} parent=0 // loop_footer_branch
    %13 = sbr.rel target = $region3
  $region8: #{ogb_gat_forward.6} parent=0 // loop_exit
    _

// kernel: ogb_gat_forward.5
$region0: #{ogb_gat_forward.5}
  #allocation0 [shape = 'u32[]', space=smem, size = 0x4, offset = 0x4, fixed_abs, tag = 'smem constant byte address 0x4 - core index']
  #allocation1 [shape = 'u32[72,128]{1,0:T(1,128)}', space=vmem, size = 0x9000, scoped, tag = 'internal scratch']
  %s0 = inlined_call_operand.vmem [shape: bf16[128,128], index: 0, kind: input, shape index: {}]
  %s1 = inlined_call_operand.vmem [shape: f32[128,2], index: 1, kind: input, shape index: {}]
  %s2 = inlined_call_operand.vmem [shape: f32[2,128], index: 2, kind: input, shape index: {}]
  %s3 = inlined_call_operand.vmem [shape: bf16[128,32], index: 3, kind: input, shape index: {}]
  %s4 = inlined_call_operand.vmem [shape: f32[128,32], index: 4, kind: input, shape index: {}]
  %s5 = inlined_call_operand.vmem [shape: f32[128,32], index: 5, kind: output, shape index: {}]
  %s6 = sld [smem:[#allocation0]]
  $region53: #{ogb_gat_forward.5} parent=0
    _
  %s8 = ssub.s32 1, %s6
  %s9 = scalar_select 0, %s8, %s6
  loop: start=0, step=1, limit=4
  $region2: #{ogb_gat_forward.5} parent=0 // loop_pre_header
    _
  $region3: #{ogb_gat_forward.5} parent=0 // loop_header
    %s11 = sphi 0, %s15
    %p12 = scmp.ge.s32.totalorder %s11, 4
    %s21 = sphi 0, %s23
    %s24 = sphi 0, %s21
    %s25 = sphi 0, %s24
    %s41 = sphi 0, %s25
    %s47 = sphi 0, %s49
    %s50 = sphi 0, %s47
    %s51 = sphi 0, %s50
    %s67 = sphi 0, %s51
    %s71 = sphi 0, %s71
    %s73 = sphi 0, %s71
    %s74 = sphi 0, %s73
    %s88 = sphi 0, %s74
    %s92 = sphi 0, %s92
    %s94 = sphi 0, %s92
    %s95 = sphi 0, %s94
    %s109 = sphi 0, %s95
    %s115 = sphi 0, %s117
    %s118 = sphi 0, %s115
    %s119 = sphi 0, %s118
    %s135 = sphi 0, %s119
    %s141 = sphi 0, %s143
    %s144 = sphi 0, %s141
    %s145 = sphi 0, %s144
    %s161 = sphi 0, %s145
  $region4: #{ogb_gat_forward.5} parent=0 // loop_header_branch
    %14 = sbr.rel (%p12) target = $region8
  $region5: #{ogb_gat_forward.5} parent=0 // loop_body
    %s16 = ssub.s32 %s11, 1
    %s17 = ssub.s32 %s11, 2
    %s18 = sadd.s32 %s11, 1
    %s19 = ssub.s32 %s11, %s18
    %p20 = scmp.eq.s32.totalorder %s19, 0
    %s22 = sadd.s32 %s21, 1
    %s23 = scalar_select %p20, %s21, %s22
    %p26 = pneg %p20
    %p27 = scmp.eq.s32.totalorder %s11, 1
    %p28 = por %p26, %p27
    %p29 = scmp.ne.s32.totalorder %s21, %s24
    %p30 = scmp.eq.s32.totalorder %s11, 0
    %p31 = por %p29, %p30
    %p32 = scmp.ne.s32.totalorder %s21, %s24
    %p33 = scmp.eq.s32.totalorder %s16, 1
    %p34 = por %p32, %p33
    %p35 = scmp.ne.s32.totalorder %s24, %s25
    %p36 = scmp.eq.s32.totalorder %s16, 0
    %p37 = por %p35, %p36
    %p38 = scmp.ne.s32.totalorder %s24, %s25
    %p39 = scmp.eq.s32.totalorder %s17, 1
    %p40 = por %p38, %p39
    %p42 = scmp.ne.s32.totalorder %s25, %s41
    %p43 = scmp.eq.s32.totalorder %s17, 0
    %p44 = por %p42, %p43
    %s45 = ssub.s32 %s11, %s18
    %p46 = scmp.eq.s32.totalorder %s45, 0
    %s48 = sadd.s32 %s47, 1
    %s49 = scalar_select %p46, %s47, %s48
    %p52 = pneg %p46
    %p53 = scmp.eq.s32.totalorder %s11, 1
    %p54 = por %p52, %p53
    %p55 = scmp.ne.s32.totalorder %s47, %s50
    %p56 = scmp.eq.s32.totalorder %s11, 0
    %p57 = por %p55, %p56
    %p58 = scmp.ne.s32.totalorder %s47, %s50
    %p59 = scmp.eq.s32.totalorder %s16, 1
    %p60 = por %p58, %p59
    %p61 = scmp.ne.s32.totalorder %s50, %s51
    %p62 = scmp.eq.s32.totalorder %s16, 0
    %p63 = por %p61, %p62
    %p64 = scmp.ne.s32.totalorder %s50, %s51
    %p65 = scmp.eq.s32.totalorder %s17, 1
    %p66 = por %p64, %p65
    %p68 = scmp.ne.s32.totalorder %s51, %s67
    %p69 = scmp.eq.s32.totalorder %s17, 0
    %p70 = por %p68, %p69
    %s72 = sadd.s32 %s71, 1
    %p75 = scmp.eq.s32.totalorder %s11, 1
    %p76 = scmp.ne.s32.totalorder %s71, %s73
    %p77 = scmp.eq.s32.totalorder %s11, 0
    %p78 = por %p76, %p77
    %p79 = scmp.ne.s32.totalorder %s71, %s73
    %p80 = scmp.eq.s32.totalorder %s16, 1
    %p81 = por %p79, %p80
    %p82 = scmp.ne.s32.totalorder %s73, %s74
    %p83 = scmp.eq.s32.totalorder %s16, 0
    %p84 = por %p82, %p83
    %p85 = scmp.ne.s32.totalorder %s73, %s74
    %p86 = scmp.eq.s32.totalorder %s17, 1
    %p87 = por %p85, %p86
    %p89 = scmp.ne.s32.totalorder %s74, %s88
    %p90 = scmp.eq.s32.totalorder %s17, 0
    %p91 = por %p89, %p90
    %s93 = sadd.s32 %s92, 1
    %p96 = scmp.eq.s32.totalorder %s11, 1
    %p97 = scmp.ne.s32.totalorder %s92, %s94
    %p98 = scmp.eq.s32.totalorder %s11, 0
    %p99 = por %p97, %p98
    %p100 = scmp.ne.s32.totalorder %s92, %s94
    %p101 = scmp.eq.s32.totalorder %s16, 1
    %p102 = por %p100, %p101
    %p103 = scmp.ne.s32.totalorder %s94, %s95
    %p104 = scmp.eq.s32.totalorder %s16, 0
    %p105 = por %p103, %p104
    %p106 = scmp.ne.s32.totalorder %s94, %s95
    %p107 = scmp.eq.s32.totalorder %s17, 1
    %p108 = por %p106, %p107
    %p110 = scmp.ne.s32.totalorder %s95, %s109
    %p111 = scmp.eq.s32.totalorder %s17, 0
    %p112 = por %p110, %p111
    %s113 = ssub.s32 %s11, %s18
    %p114 = scmp.eq.s32.totalorder %s113, 0
    %s116 = sadd.s32 %s115, 1
    %s117 = scalar_select %p114, %s115, %s116
    %p120 = pneg %p114
    %p121 = scmp.eq.s32.totalorder %s11, 1
    %p122 = por %p120, %p121
    %p123 = scmp.ne.s32.totalorder %s115, %s118
    %p124 = scmp.eq.s32.totalorder %s11, 0
    %p125 = por %p123, %p124
    %p126 = scmp.ne.s32.totalorder %s115, %s118
    %p127 = scmp.eq.s32.totalorder %s16, 1
    %p128 = por %p126, %p127
    %p129 = scmp.ne.s32.totalorder %s118, %s119
    %p130 = scmp.eq.s32.totalorder %s16, 0
    %p131 = por %p129, %p130
    %p132 = scmp.ne.s32.totalorder %s118, %s119
    %p133 = scmp.eq.s32.totalorder %s17, 1
    %p134 = por %p132, %p133
    %p136 = scmp.ne.s32.totalorder %s119, %s135
    %p137 = scmp.eq.s32.totalorder %s17, 0
    %p138 = por %p136, %p137
    %s139 = ssub.s32 %s11, %s18
    %p140 = scmp.eq.s32.totalorder %s139, 0
    %s142 = sadd.s32 %s141, 1
    %s143 = scalar_select %p140, %s141, %s142
    %p146 = pneg %p140
    %p147 = scmp.eq.s32.totalorder %s11, 1
    %p148 = por %p146, %p147
    %p149 = scmp.ne.s32.totalorder %s141, %s144
    %p150 = scmp.eq.s32.totalorder %s11, 0
    %p151 = por %p149, %p150
    %p152 = scmp.ne.s32.totalorder %s141, %s144
    %p153 = scmp.eq.s32.totalorder %s16, 1
    %p154 = por %p152, %p153
    %p155 = scmp.ne.s32.totalorder %s144, %s145
    %p156 = scmp.eq.s32.totalorder %s16, 0
    %p157 = por %p155, %p156
    %p158 = scmp.ne.s32.totalorder %s144, %s145
    %p159 = scmp.eq.s32.totalorder %s17, 1
    %p160 = por %p158, %p159
    %p162 = scmp.ne.s32.totalorder %s145, %s161
    %p163 = scmp.eq.s32.totalorder %s17, 0
    %p164 = por %p162, %p163
    %p165 = scmp.le.s32.totalorder 1, %s11
    %p166 = scmp.lt.s32.totalorder %s11, 3
    %p167 = pnand %p165, %p166
    %p168 = pneg %p167
    // Predicated region
    $region9: #{ogb_gat_forward.5} parent=5 // pred_check
      _
    $region10: #{ogb_gat_forward.5} parent=5 // pred_check_branch
      %170 = sbr.rel (%p167) target = $region12
    $region11: #{ogb_gat_forward.5} parent=5 // pred_region
      %s171 = ssub.s32 %s11, 1
      // Predicated region
      $region13: #{ogb_gat_forward.5} parent=11 // pred_check
        %p172 = pneg %p84
      $region14: #{ogb_gat_forward.5} parent=11 // pred_check_branch
        %174 = sbr.rel (%p172) target = $region16
      $region15: #{ogb_gat_forward.5} parent=11 // pred_region
        _
      $region16: #{ogb_gat_forward.5} parent=11 // pred_fallthru
        _
      // Predicated region
      $region17: #{ogb_gat_forward.5} parent=11 // pred_check
        %p175 = pneg %p105
      $region18: #{ogb_gat_forward.5} parent=11 // pred_check_branch
        %177 = sbr.rel (%p175) target = $region20
      $region19: #{ogb_gat_forward.5} parent=11 // pred_region
        _
      $region20: #{ogb_gat_forward.5} parent=11 // pred_fallthru
        _
    $region12: #{ogb_gat_forward.5} parent=5 // pred_fallthru
      _
    %p178 = scmp.lt.s32.totalorder %s11, 2
    // Predicated region
    $region21: #{ogb_gat_forward.5} parent=5 // pred_check
      %p179 = pneg %p178
    $region22: #{ogb_gat_forward.5} parent=5 // pred_check_branch
      %181 = sbr.rel (%p179) target = $region24
    $region23: #{ogb_gat_forward.5} parent=5 // pred_region
      // Predicated region
      $region25: #{ogb_gat_forward.5} parent=23 // pred_check
        %p182 = pneg %p31
      $region26: #{ogb_gat_forward.5} parent=23 // pred_check_branch
        %184 = sbr.rel (%p182) target = $region28
      $region27: #{ogb_gat_forward.5} parent=23 // pred_region
        %s185 = smul.u32 8, %s11
        %p186 = scmp.lt.s32.totalorder %s185, 15
        %s187 = scalar_select %p186, %s185, 15
        %s188 = smul.addr %s187, 4
        %s189 = scalar_lea.vmem %s0, %s188
        %s190 = smul.u32 8, %s11
      $region28: #{ogb_gat_forward.5} parent=23 // pred_fallthru
        _
      // Predicated region
      $region29: #{ogb_gat_forward.5} parent=23 // pred_check
        %p191 = pneg %p57
      $region30: #{ogb_gat_forward.5} parent=23 // pred_check_branch
        %193 = sbr.rel (%p191) target = $region32
      $region31: #{ogb_gat_forward.5} parent=23 // pred_region
        %s194 = smul.u32 8, %s11
        %p195 = scmp.lt.s32.totalorder %s194, 15
        %s196 = scalar_select %p195, %s194, 15
        %s197 = smul.addr %s196, 8
        %s198 = scalar_lea.vmem %s1, %s197
        %s199 = smul.u32 8, %s11
      $region32: #{ogb_gat_forward.5} parent=23 // pred_fallthru
        _
      // Predicated region
      $region33: #{ogb_gat_forward.5} parent=23 // pred_check
        %p200 = pneg %p125
      $region34: #{ogb_gat_forward.5} parent=23 // pred_check_branch
        %202 = sbr.rel (%p200) target = $region36
      $region35: #{ogb_gat_forward.5} parent=23 // pred_region
        %s203 = smul.u32 8, %s11
        %p204 = scmp.lt.s32.totalorder %s203, 15
        %s205 = scalar_select %p204, %s203, 15
        %s206 = smul.addr %s205, 8
        %s207 = scalar_lea.vmem %s4, %s206
        %s208 = smul.u32 8, %s11
      $region36: #{ogb_gat_forward.5} parent=23 // pred_fallthru
        _
    $region24: #{ogb_gat_forward.5} parent=5 // pred_fallthru
      _
    %p209 = scmp.le.s32.totalorder 1, %s11
    %p210 = scmp.lt.s32.totalorder %s11, 3
    %p211 = pnand %p209, %p210
    %p212 = pneg %p211
    // Predicated region
    $region37: #{ogb_gat_forward.5} parent=5 // pred_check
      _
    $region38: #{ogb_gat_forward.5} parent=5 // pred_check_branch
      %214 = sbr.rel (%p211) target = $region40
    $region39: #{ogb_gat_forward.5} parent=5 // pred_region
      %s215 = ssub.s32 %s11, 1
      %s216 = smul.u32 8, %s16
      %p217 = scmp.lt.s32.totalorder %s216, 15
      %s218 = scalar_select %p217, %s216, 15
      %s219 = smul.addr %s218, 4
      %s220 = scalar_lea.vmem %s0, %s219
      %p221 = pneg %p37
      %p222 = pneg %p34
      %s223 = smul.u32 8, %s16
      %p224 = scmp.lt.s32.totalorder %s223, 15
      %s225 = scalar_select %p224, %s223, 15
      %s226 = smul.addr %s225, 8
      %s227 = scalar_lea.vmem %s1, %s226
      %p228 = pneg %p63
      %p229 = pneg %p60
      %p230 = pneg %p84
      %p231 = pneg %p81
      %p232 = pneg %p105
      %p233 = pneg %p102
      %s234 = smul.u32 8, %s16
      %p235 = scmp.lt.s32.totalorder %s234, 15
      %s236 = scalar_select %p235, %s234, 15
      %s237 = smul.addr %s236, 8
      %s238 = scalar_lea.vmem %s4, %s237
      %p239 = pneg %p131
      %p240 = pneg %p128
      %p241 = pneg %p157
      %p242 = pneg %p154
      %s243 = smul.u32 8, %s16
      %p244 = scmp.lt.s32.totalorder %s243, 15
      %s245 = scalar_select %p244, %s243, 15
      %s246 = smul.addr %s245, 8
      %s247 = scalar_lea.vmem %s5, %s246
      %s248 = smul.u32 8, %s16
      %p249 = scmp.lt.s32.totalorder %s248, 15
      %s250 = scalar_select %p249, %s248, 15
      %s251 = smul.addr %s250, 4
      %s252 = scalar_lea.vmem %s0, %s251
      %s253 = smul.u32 8, %s16
      %s254 = smul.u32 8, %s16
      %p255 = scmp.lt.s32.totalorder %s254, 15
      %s256 = scalar_select %p255, %s254, 15
      %s257 = smul.addr %s256, 8
      %s258 = scalar_lea.vmem %s1, %s257
      %s259 = smul.u32 8, %s16
      %s260 = smul.u32 8, %s16
      %p261 = scmp.lt.s32.totalorder %s260, 15
      %s262 = scalar_select %p261, %s260, 15
      %s263 = smul.addr %s262, 8
      %s264 = scalar_lea.vmem %s4, %s263
      %s265 = smul.u32 8, %s16
      %s266 = smul.u32 8, %s16
      %p267 = scmp.lt.s32.totalorder %s266, 15
      %s268 = scalar_select %p267, %s266, 15
      %s269 = smul.addr %s268, 8
      %s270 = scalar_lea.vmem %s5, %s269
      %s271 = smul.u32 8, %s16
      %v272 = vld [vmem:[%s252] sm:$0xf]
      %v273 = vld [vmem:[%s252 + $0x4] sm:$0xf]
      %v274 = vld [vmem:[%s252 + $0x8] sm:$0xf]
      %v275 = vld [vmem:[%s252 + $0xc] sm:$0xf]
      %v276 = vld [vmem:[%s252 + $0x10] sm:$0xf]
      %v277 = vld [vmem:[%s252 + $0x14] sm:$0xf]
      %v278 = vld [vmem:[%s252 + $0x18] sm:$0xf]
      %v279 = vld [vmem:[%s252 + $0x1c] sm:$0xf]
      %v280 = vunpack.c.l.bf16 %v272
      %v281 = vunpack.c.l.bf16 %v273
      %v282 = vunpack.c.l.bf16 %v274
      %v283 = vunpack.c.l.bf16 %v275
      %v284 = vunpack.c.l.bf16 %v276
      %v285 = vunpack.c.l.bf16 %v277
      %v286 = vunpack.c.l.bf16 %v278
      %v287 = vunpack.c.l.bf16 %v279
      %vm288 = vcmp.gt.f32.partialorder %v280, 0.0
      %vm289 = vcmp.gt.f32.partialorder %v281, 0.0
      %vm290 = vcmp.gt.f32.partialorder %v282, 0.0
      %vm291 = vcmp.gt.f32.partialorder %v283, 0.0
      %vm292 = vcmp.gt.f32.partialorder %v284, 0.0
      %vm293 = vcmp.gt.f32.partialorder %v285, 0.0
      %vm294 = vcmp.gt.f32.partialorder %v286, 0.0
      %vm295 = vcmp.gt.f32.partialorder %v287, 0.0
      %v296 = vld [vmem:[%s258] sm:$0xff]
      %v297 = vld [vmem:[%s258 + $0x8] sm:$0xff]
      %v298 = vld [vmem:[%s258 + $0x10] sm:$0xff]
      %v299 = vld [vmem:[%s258 + $0x18] sm:$0xff]
      %v300 = vld [vmem:[%s258 + $0x20] sm:$0xff]
      %v301 = vld [vmem:[%s258 + $0x28] sm:$0xff]
      %v302 = vld [vmem:[%s258 + $0x30] sm:$0xff]
      %v303 = vld [vmem:[%s258 + $0x38] sm:$0xff]
      %v304 = vld [vmem:[%s2] sm:$0x3]
      %v305 = vld [vmem:[%s3] sm:$0xf]
      %v306 = vld [vmem:[%s3 + $0x4] sm:$0xf]
      %v307 = vld [vmem:[%s3 + $0x8] sm:$0xf]
      %v308 = vld [vmem:[%s3 + $0xc] sm:$0xf]
      %v309 = vld [vmem:[%s3 + $0x10] sm:$0xf]
      %v310 = vld [vmem:[%s3 + $0x14] sm:$0xf]
      %v311 = vld [vmem:[%s3 + $0x18] sm:$0xf]
      %v312 = vld [vmem:[%s3 + $0x1c] sm:$0xf]
      %v313 = vld [vmem:[%s3 + $0x20] sm:$0xf]
      %v314 = vld [vmem:[%s3 + $0x24] sm:$0xf]
      %v315 = vld [vmem:[%s3 + $0x28] sm:$0xf]
      %v316 = vld [vmem:[%s3 + $0x2c] sm:$0xf]
      %v317 = vld [vmem:[%s3 + $0x30] sm:$0xf]
      %v318 = vld [vmem:[%s3 + $0x34] sm:$0xf]
      %v319 = vld [vmem:[%s3 + $0x38] sm:$0xf]
      %v320 = vld [vmem:[%s3 + $0x3c] sm:$0xf]
      %322 = vset.pattern.permute.xlu0 0
      %323 = vperm.xlu0 %322, %v296
      %v324 = vpop.permute.xlu0 %323
      %327 = vset.pattern.permute.xlu0 0
      %328 = vperm.xlu0 %327, %v297
      %v329 = vpop.permute.xlu0 %328
      %332 = vset.pattern.permute.xlu0 0
      %333 = vperm.xlu0 %332, %v298
      %v334 = vpop.permute.xlu0 %333
      %337 = vset.pattern.permute.xlu0 0
      %338 = vperm.xlu0 %337, %v299
      %v339 = vpop.permute.xlu0 %338
      %342 = vset.pattern.permute.xlu0 0
      %343 = vperm.xlu0 %342, %v300
      %v344 = vpop.permute.xlu0 %343
      %347 = vset.pattern.permute.xlu0 0
      %348 = vperm.xlu0 %347, %v301
      %v349 = vpop.permute.xlu0 %348
      %352 = vset.pattern.permute.xlu0 0
      %353 = vperm.xlu0 %352, %v302
      %v354 = vpop.permute.xlu0 %353
      %357 = vset.pattern.permute.xlu0 0
      %358 = vperm.xlu0 %357, %v303
      %v359 = vpop.permute.xlu0 %358
      %v361 = vperm.slane %v304, 0
      %v362 = vadd.f32 %v324, %v361
      %v363 = vadd.f32 %v329, %v361
      %v364 = vadd.f32 %v334, %v361
      %v365 = vadd.f32 %v339, %v361
      %v366 = vadd.f32 %v344, %v361
      %v367 = vadd.f32 %v349, %v361
      %v368 = vadd.f32 %v354, %v361
      %v369 = vadd.f32 %v359, %v361
      %vm370 = vcmp.gt.f32.partialorder %v362, 0.0
      %vm371 = vcmp.gt.f32.partialorder %v363, 0.0
      %vm372 = vcmp.gt.f32.partialorder %v364, 0.0
      %vm373 = vcmp.gt.f32.partialorder %v365, 0.0
      %vm374 = vcmp.gt.f32.partialorder %v366, 0.0
      %vm375 = vcmp.gt.f32.partialorder %v367, 0.0
      %vm376 = vcmp.gt.f32.partialorder %v368, 0.0
      %vm377 = vcmp.gt.f32.partialorder %v369, 0.0
      %v378 = vmul.f32 %v362, 0.2
      %v379 = vmul.f32 %v363, 0.2
      %v380 = vmul.f32 %v364, 0.2
      %v381 = vmul.f32 %v365, 0.2
      %v382 = vmul.f32 %v366, 0.2
      %v383 = vmul.f32 %v367, 0.2
      %v384 = vmul.f32 %v368, 0.2
      %v385 = vmul.f32 %v369, 0.2
      %v386 = vsel %vm370, %v362, %v378
      %v387 = vsel %vm371, %v363, %v379
      %v388 = vsel %vm372, %v364, %v380
      %v389 = vsel %vm373, %v365, %v381
      %v390 = vsel %vm374, %v366, %v382
      %v391 = vsel %vm375, %v367, %v383
      %v392 = vsel %vm376, %v368, %v384
      %v393 = vsel %vm377, %v369, %v385
      %v394 = vsel %vm288, %v386, -1e+30
      %v395 = vsel %vm289, %v387, -1e+30
      %v396 = vsel %vm290, %v388, -1e+30
      %v397 = vsel %vm291, %v389, -1e+30
      %v398 = vsel %vm292, %v390, -1e+30
      %v399 = vsel %vm293, %v391, -1e+30
      %v400 = vsel %vm294, %v392, -1e+30
      %v401 = vsel %vm295, %v393, -1e+30
      %402 = vmax.xlane.f32.xlu0 %v394
      %v403 = vpop.xlane.xlu0 %402
      %404 = vmax.xlane.f32.xlu0 %v395
      %v405 = vpop.xlane.xlu0 %404
      %406 = vmax.xlane.f32.xlu0 %v396
      %v407 = vpop.xlane.xlu0 %406
      %408 = vmax.xlane.f32.xlu0 %v397
      %v409 = vpop.xlane.xlu0 %408
      %410 = vmax.xlane.f32.xlu0 %v398
      %v411 = vpop.xlane.xlu0 %410
      %412 = vmax.xlane.f32.xlu0 %v399
      %v413 = vpop.xlane.xlu0 %412
      %414 = vmax.xlane.f32.xlu0 %v400
      %v415 = vpop.xlane.xlu0 %414
      %416 = vmax.xlane.f32.xlu0 %v401
      %v417 = vpop.xlane.xlu0 %416
      %v418 = vsub.f32 %v394, %v403
      %v419 = vsub.f32 %v395, %v405
      %v420 = vsub.f32 %v396, %v407
      %v421 = vsub.f32 %v397, %v409
      %v422 = vsub.f32 %v398, %v411
      %v423 = vsub.f32 %v399, %v413
      %v424 = vsub.f32 %v400, %v415
      %v425 = vsub.f32 %v401, %v417
      %v426 = vmul.f32 %v418, 1.442695
      %v427 = vpow.pop %v426
      %v428 = vmul.f32 %v419, 1.442695
      %v429 = vpow.pop %v428
      %v430 = vmul.f32 %v420, 1.442695
      %v431 = vpow.pop %v430
      %v432 = vmul.f32 %v421, 1.442695
      %v433 = vpow.pop %v432
      %v434 = vmul.f32 %v422, 1.442695
      %v435 = vpow.pop %v434
      %v436 = vmul.f32 %v423, 1.442695
      %v437 = vpow.pop %v436
      %v438 = vmul.f32 %v424, 1.442695
      %v439 = vpow.pop %v438
      %v440 = vmul.f32 %v425, 1.442695
      %v441 = vpow.pop %v440
      %442 = vadd.xlane.f32.xlu0 %v427
      %v443 = vpop.xlane.xlu0 %442
      %444 = vadd.xlane.f32.xlu0 %v429
      %v445 = vpop.xlane.xlu0 %444
      %446 = vadd.xlane.f32.xlu0 %v431
      %v447 = vpop.xlane.xlu0 %446
      %448 = vadd.xlane.f32.xlu0 %v433
      %v449 = vpop.xlane.xlu0 %448
      %450 = vadd.xlane.f32.xlu0 %v435
      %v451 = vpop.xlane.xlu0 %450
      %452 = vadd.xlane.f32.xlu0 %v437
      %v453 = vpop.xlane.xlu0 %452
      %454 = vadd.xlane.f32.xlu0 %v439
      %v455 = vpop.xlane.xlu0 %454
      %456 = vadd.xlane.f32.xlu0 %v441
      %v457 = vpop.xlane.xlu0 %456
      %v458 = vrcp.pop %v443
      %v459 = vrcp.pop %v445
      %v460 = vrcp.pop %v447
      %v461 = vrcp.pop %v449
      %v462 = vrcp.pop %v451
      %v463 = vrcp.pop %v453
      %v464 = vrcp.pop %v455
      %v465 = vrcp.pop %v457
      %v466 = vmul.f32 %v427, %v458
      %v467 = vmul.f32 %v429, %v459
      %v468 = vmul.f32 %v431, %v460
      %v469 = vmul.f32 %v433, %v461
      %v470 = vmul.f32 %v435, %v462
      %v471 = vmul.f32 %v437, %v463
      %v472 = vmul.f32 %v439, %v464
      %v473 = vmul.f32 %v441, %v465
      %v474 = vpack.c.bf16 %v467, %v466
      %v475 = vpack.c.bf16 %v469, %v468
      %v476 = vpack.c.bf16 %v471, %v470
      %v477 = vpack.c.bf16 %v473, %v472
      %v494 = vunpack.c.l.b16 %v305
      %v495 = vunpack.c.l.b16 %v306
      %v496 = vunpack.c.l.b16 %v307
      %v497 = vunpack.c.l.b16 %v308
      %v498 = vunpack.c.l.b16 %v309
      %v499 = vunpack.c.l.b16 %v310
      %v500 = vunpack.c.l.b16 %v311
      %v501 = vunpack.c.l.b16 %v312
      %v502 = vunpack.c.l.b16 %v313
      %v503 = vunpack.c.l.b16 %v314
      %v504 = vunpack.c.l.b16 %v315
      %v505 = vunpack.c.l.b16 %v316
      %v506 = vunpack.c.l.b16 %v317
      %v507 = vunpack.c.l.b16 %v318
      %v508 = vunpack.c.l.b16 %v319
      %v509 = vunpack.c.l.b16 %v320
      %v510 = vpack.c.b16 %v495, %v494
      %v511 = vpack.c.b16 %v497, %v496
      %v512 = vpack.c.b16 %v499, %v498
      %v513 = vpack.c.b16 %v501, %v500
      %v514 = vpack.c.b16 %v503, %v502
      %v515 = vpack.c.b16 %v505, %v504
      %v516 = vpack.c.b16 %v507, %v506
      %v517 = vpack.c.b16 %v509, %v508
      %526 = vmatpush.bf16.msra.mxu0 %v517
      %527 = vmatpush.bf16.msra.mxu0 %v516
      %528 = vmatpush.bf16.msra.mxu0 %v515
      %529 = vmatpush.bf16.msra.mxu0 %v514
      %530 = vmatpush.bf16.msra.mxu0 %v513
      %531 = vmatpush.bf16.msra.mxu0 %v512
      %532 = vmatpush.bf16.msra.mxu0 %v511
      %533 = vmatpush.bf16.msra.mxu0 %v510
      %534 = vmatmul.bf16.gmra.mxu0 %v474
      %v535 = vpop.f32.mrf.mxu0
      %v536 = vadd.f32 0.0, %v535
      %v537 = vpop.f32.mrf.mxu0
      %v538 = vadd.f32 0.0, %v537
      %539 = vmatmul.bf16.gmra.mxu0 %v475
      %v540 = vpop.f32.mrf.mxu0
      %v541 = vadd.f32 0.0, %v540
      %v542 = vpop.f32.mrf.mxu0
      %v543 = vadd.f32 0.0, %v542
      %544 = vmatmul.bf16.gmra.mxu0 %v476
      %v545 = vpop.f32.mrf.mxu0
      %v546 = vadd.f32 0.0, %v545
      %v547 = vpop.f32.mrf.mxu0
      %v548 = vadd.f32 0.0, %v547
      %549 = vmatmul.bf16.gmra.mxu0 %v477
      %v550 = vpop.f32.mrf.mxu0
      %v551 = vadd.f32 0.0, %v550
      %v552 = vpop.f32.mrf.mxu0
      %v553 = vadd.f32 0.0, %v552
      %554 = vdwg.mxu0
      %555 = vset.pattern.permute.xlu0 1
      %556 = vperm.xlu0 %555, %v296
      %v557 = vpop.permute.xlu0 %556
      %559 = vset.pattern.permute.xlu0 1
      %560 = vperm.xlu0 %559, %v297
      %v561 = vpop.permute.xlu0 %560
      %563 = vset.pattern.permute.xlu0 1
      %564 = vperm.xlu0 %563, %v298
      %v565 = vpop.permute.xlu0 %564
      %567 = vset.pattern.permute.xlu0 1
      %568 = vperm.xlu0 %567, %v299
      %v569 = vpop.permute.xlu0 %568
      %571 = vset.pattern.permute.xlu0 1
      %572 = vperm.xlu0 %571, %v300
      %v573 = vpop.permute.xlu0 %572
      %575 = vset.pattern.permute.xlu0 1
      %576 = vperm.xlu0 %575, %v301
      %v577 = vpop.permute.xlu0 %576
      %579 = vset.pattern.permute.xlu0 1
      %580 = vperm.xlu0 %579, %v302
      %v581 = vpop.permute.xlu0 %580
      %583 = vset.pattern.permute.xlu0 1
      %584 = vperm.xlu0 %583, %v303
      %v585 = vpop.permute.xlu0 %584
      %v587 = vperm.slane %v304, 1
      %v588 = vadd.f32 %v557, %v587
      %v589 = vadd.f32 %v561, %v587
      %v590 = vadd.f32 %v565, %v587
      %v591 = vadd.f32 %v569, %v587
      %v592 = vadd.f32 %v573, %v587
      %v593 = vadd.f32 %v577, %v587
      %v594 = vadd.f32 %v581, %v587
      %v595 = vadd.f32 %v585, %v587
      %vm596 = vcmp.gt.f32.partialorder %v588, 0.0
      %vm597 = vcmp.gt.f32.partialorder %v589, 0.0
      %vm598 = vcmp.gt.f32.partialorder %v590, 0.0
      %vm599 = vcmp.gt.f32.partialorder %v591, 0.0
      %vm600 = vcmp.gt.f32.partialorder %v592, 0.0
      %vm601 = vcmp.gt.f32.partialorder %v593, 0.0
      %vm602 = vcmp.gt.f32.partialorder %v594, 0.0
      %vm603 = vcmp.gt.f32.partialorder %v595, 0.0
      %v604 = vmul.f32 %v588, 0.2
      %v605 = vmul.f32 %v589, 0.2
      %v606 = vmul.f32 %v590, 0.2
      %v607 = vmul.f32 %v591, 0.2
      %v608 = vmul.f32 %v592, 0.2
      %v609 = vmul.f32 %v593, 0.2
      %v610 = vmul.f32 %v594, 0.2
      %v611 = vmul.f32 %v595, 0.2
      %v612 = vsel %vm596, %v588, %v604
      %v613 = vsel %vm597, %v589, %v605
      %v614 = vsel %vm598, %v590, %v606
      %v615 = vsel %vm599, %v591, %v607
      %v616 = vsel %vm600, %v592, %v608
      %v617 = vsel %vm601, %v593, %v609
      %v618 = vsel %vm602, %v594, %v610
      %v619 = vsel %vm603, %v595, %v611
      %v620 = vsel %vm288, %v612, -1e+30
      %v621 = vsel %vm289, %v613, -1e+30
      %v622 = vsel %vm290, %v614, -1e+30
      %v623 = vsel %vm291, %v615, -1e+30
      %v624 = vsel %vm292, %v616, -1e+30
      %v625 = vsel %vm293, %v617, -1e+30
      %v626 = vsel %vm294, %v618, -1e+30
      %v627 = vsel %vm295, %v619, -1e+30
      %628 = vmax.xlane.f32.xlu0 %v620
      %v629 = vpop.xlane.xlu0 %628
      %630 = vmax.xlane.f32.xlu0 %v621
      %v631 = vpop.xlane.xlu0 %630
      %632 = vmax.xlane.f32.xlu0 %v622
      %v633 = vpop.xlane.xlu0 %632
      %634 = vmax.xlane.f32.xlu0 %v623
      %v635 = vpop.xlane.xlu0 %634
      %636 = vmax.xlane.f32.xlu0 %v624
      %v637 = vpop.xlane.xlu0 %636
      %638 = vmax.xlane.f32.xlu0 %v625
      %v639 = vpop.xlane.xlu0 %638
      %640 = vmax.xlane.f32.xlu0 %v626
      %v641 = vpop.xlane.xlu0 %640
      %642 = vmax.xlane.f32.xlu0 %v627
      %v643 = vpop.xlane.xlu0 %642
      %v644 = vsub.f32 %v620, %v629
      %v645 = vsub.f32 %v621, %v631
      %v646 = vsub.f32 %v622, %v633
      %v647 = vsub.f32 %v623, %v635
      %v648 = vsub.f32 %v624, %v637
      %v649 = vsub.f32 %v625, %v639
      %v650 = vsub.f32 %v626, %v641
      %v651 = vsub.f32 %v627, %v643
      %v652 = vmul.f32 %v644, 1.442695
      %v653 = vpow.pop %v652
      %v654 = vmul.f32 %v645, 1.442695
      %v655 = vpow.pop %v654
      %v656 = vmul.f32 %v646, 1.442695
      %v657 = vpow.pop %v656
      %v658 = vmul.f32 %v647, 1.442695
      %v659 = vpow.pop %v658
      %v660 = vmul.f32 %v648, 1.442695
      %v661 = vpow.pop %v660
      %v662 = vmul.f32 %v649, 1.442695
      %v663 = vpow.pop %v662
      %v664 = vmul.f32 %v650, 1.442695
      %v665 = vpow.pop %v664
      %v666 = vmul.f32 %v651, 1.442695
      %v667 = vpow.pop %v666
      %668 = vadd.xlane.f32.xlu0 %v653
      %v669 = vpop.xlane.xlu0 %668
      %670 = vadd.xlane.f32.xlu0 %v655
      %v671 = vpop.xlane.xlu0 %670
      %672 = vadd.xlane.f32.xlu0 %v657
      %v673 = vpop.xlane.xlu0 %672
      %674 = vadd.xlane.f32.xlu0 %v659
      %v675 = vpop.xlane.xlu0 %674
      %676 = vadd.xlane.f32.xlu0 %v661
      %v677 = vpop.xlane.xlu0 %676
      %678 = vadd.xlane.f32.xlu0 %v663
      %v679 = vpop.xlane.xlu0 %678
      %680 = vadd.xlane.f32.xlu0 %v665
      %v681 = vpop.xlane.xlu0 %680
      %682 = vadd.xlane.f32.xlu0 %v667
      %v683 = vpop.xlane.xlu0 %682
      %v684 = vrcp.pop %v669
      %v685 = vrcp.pop %v671
      %v686 = vrcp.pop %v673
      %v687 = vrcp.pop %v675
      %v688 = vrcp.pop %v677
      %v689 = vrcp.pop %v679
      %v690 = vrcp.pop %v681
      %v691 = vrcp.pop %v683
      %v692 = vmul.f32 %v653, %v684
      %v693 = vmul.f32 %v655, %v685
      %v694 = vmul.f32 %v657, %v686
      %v695 = vmul.f32 %v659, %v687
      %v696 = vmul.f32 %v661, %v688
      %v697 = vmul.f32 %v663, %v689
      %v698 = vmul.f32 %v665, %v690
      %v699 = vmul.f32 %v667, %v691
      %v700 = vpack.c.bf16 %v693, %v692
      %v701 = vpack.c.bf16 %v695, %v694
      %v702 = vpack.c.bf16 %v697, %v696
      %v703 = vpack.c.bf16 %v699, %v698
      %704 = vrot.lane.b32.xlu0 %v510, 112
      %v705 = vpop.permute.xlu0 %704
      %706 = vrot.lane.b32.xlu0 %v511, 112
      %v707 = vpop.permute.xlu0 %706
      %708 = vrot.lane.b32.xlu0 %v512, 112
      %v709 = vpop.permute.xlu0 %708
      %710 = vrot.lane.b32.xlu0 %v513, 112
      %v711 = vpop.permute.xlu0 %710
      %712 = vrot.lane.b32.xlu0 %v514, 112
      %v713 = vpop.permute.xlu0 %712
      %714 = vrot.lane.b32.xlu0 %v515, 112
      %v715 = vpop.permute.xlu0 %714
      %716 = vrot.lane.b32.xlu0 %v516, 112
      %v717 = vpop.permute.xlu0 %716
      %718 = vrot.lane.b32.xlu0 %v517, 112
      %v719 = vpop.permute.xlu0 %718
      %728 = vmatpush.bf16.msra.mxu0 %v719
      %729 = vmatpush.bf16.msra.mxu0 %v717
      %730 = vmatpush.bf16.msra.mxu0 %v715
      %731 = vmatpush.bf16.msra.mxu0 %v713
      %732 = vmatpush.bf16.msra.mxu0 %v711
      %733 = vmatpush.bf16.msra.mxu0 %v709
      %734 = vmatpush.bf16.msra.mxu0 %v707
      %735 = vmatpush.bf16.msra.mxu0 %v705
      %736 = vmatmul.bf16.gmra.mxu0 %v700
      %v737 = vpop.f32.mrf.mxu0
      %v738 = vadd.f32 0.0, %v737
      %v739 = vpop.f32.mrf.mxu0
      %v740 = vadd.f32 0.0, %v739
      %741 = vmatmul.bf16.gmra.mxu0 %v701
      %v742 = vpop.f32.mrf.mxu0
      %v743 = vadd.f32 0.0, %v742
      %v744 = vpop.f32.mrf.mxu0
      %v745 = vadd.f32 0.0, %v744
      %746 = vmatmul.bf16.gmra.mxu0 %v702
      %v747 = vpop.f32.mrf.mxu0
      %v748 = vadd.f32 0.0, %v747
      %v749 = vpop.f32.mrf.mxu0
      %v750 = vadd.f32 0.0, %v749
      %751 = vmatmul.bf16.gmra.mxu0 %v703
      %v752 = vpop.f32.mrf.mxu0
      %v753 = vadd.f32 0.0, %v752
      %v754 = vpop.f32.mrf.mxu0
      %v755 = vadd.f32 0.0, %v754
      %756 = vdwg.mxu0
      %765 = vrot.lane.b32.xlu0 %v738, 16
      %v766 = vpop.permute.xlu0 %765
      %767 = vrot.lane.b32.xlu0 %v740, 16
      %v768 = vpop.permute.xlu0 %767
      %769 = vrot.lane.b32.xlu0 %v743, 16
      %v770 = vpop.permute.xlu0 %769
      %771 = vrot.lane.b32.xlu0 %v745, 16
      %v772 = vpop.permute.xlu0 %771
      %773 = vrot.lane.b32.xlu0 %v748, 16
      %v774 = vpop.permute.xlu0 %773
      %775 = vrot.lane.b32.xlu0 %v750, 16
      %v776 = vpop.permute.xlu0 %775
      %777 = vrot.lane.b32.xlu0 %v753, 16
      %v778 = vpop.permute.xlu0 %777
      %779 = vrot.lane.b32.xlu0 %v755, 16
      %v780 = vpop.permute.xlu0 %779
      %vm789 = vcmask 130048
      %v790 = vsel %vm789, %v536, %v766
      %v791 = vsel %vm789, %v538, %v768
      %v792 = vsel %vm789, %v541, %v770
      %v793 = vsel %vm789, %v543, %v772
      %v794 = vsel %vm789, %v546, %v774
      %v795 = vsel %vm789, %v548, %v776
      %v796 = vsel %vm789, %v551, %v778
      %v797 = vsel %vm789, %v553, %v780
      %v798 = vld [vmem:[%s264] sm:$0xff]
      %v799 = vld [vmem:[%s264 + $0x8] sm:$0xff]
      %v800 = vld [vmem:[%s264 + $0x10] sm:$0xff]
      %v801 = vld [vmem:[%s264 + $0x18] sm:$0xff]
      %v802 = vld [vmem:[%s264 + $0x20] sm:$0xff]
      %v803 = vld [vmem:[%s264 + $0x28] sm:$0xff]
      %v804 = vld [vmem:[%s264 + $0x30] sm:$0xff]
      %v805 = vld [vmem:[%s264 + $0x38] sm:$0xff]
      %v806 = vadd.f32 %v790, %v798
      %v807 = vadd.f32 %v791, %v799
      %v808 = vadd.f32 %v792, %v800
      %v809 = vadd.f32 %v793, %v801
      %v810 = vadd.f32 %v794, %v802
      %v811 = vadd.f32 %v795, %v803
      %v812 = vadd.f32 %v796, %v804
      %v813 = vadd.f32 %v797, %v805
      %v814 = vmul.f32 %v806, 0.999995
      %v815 = vmul.f32 %v807, 0.999995
      %v816 = vmul.f32 %v808, 0.999995
      %v817 = vmul.f32 %v809, 0.999995
      %v818 = vmul.f32 %v810, 0.999995
      %v819 = vmul.f32 %v811, 0.999995
      %v820 = vmul.f32 %v812, 0.999995
      %v821 = vmul.f32 %v813, 0.999995
      %v822 = vmax.f32 %v814, 0.0
      %v823 = vmax.f32 %v815, 0.0
      %v824 = vmax.f32 %v816, 0.0
      %v825 = vmax.f32 %v817, 0.0
      %v826 = vmax.f32 %v818, 0.0
      %v827 = vmax.f32 %v819, 0.0
      %v828 = vmax.f32 %v820, 0.0
      %v829 = vmax.f32 %v821, 0.0
      %vm830 = vcmask 261120
      %831 = vst.msk [vmem:[%s270] sm:$0xff] %vm830, %v822
      %832 = vst.msk [vmem:[%s270 + $0x8] sm:$0xff] %vm830, %v823
      %833 = vst.msk [vmem:[%s270 + $0x10] sm:$0xff] %vm830, %v824
      %834 = vst.msk [vmem:[%s270 + $0x18] sm:$0xff] %vm830, %v825
      %835 = vst.msk [vmem:[%s270 + $0x20] sm:$0xff] %vm830, %v826
      %836 = vst.msk [vmem:[%s270 + $0x28] sm:$0xff] %vm830, %v827
      %837 = vst.msk [vmem:[%s270 + $0x30] sm:$0xff] %vm830, %v828
      %838 = vst.msk [vmem:[%s270 + $0x38] sm:$0xff] %vm830, %v829
      %s839 = smul.u32 8, %s16
      %p840 = scmp.lt.s32.totalorder %s839, 15
      %s841 = scalar_select %p840, %s839, 15
      %s842 = smul.addr %s841, 8
      %s843 = scalar_lea.vmem %s5, %s842
      // Predicated region
      $region41: #{ogb_gat_forward.5} parent=39 // pred_check
        %p844 = pneg %p154
      $region42: #{ogb_gat_forward.5} parent=39 // pred_check_branch
        %846 = sbr.rel (%p844) target = $region44
      $region43: #{ogb_gat_forward.5} parent=39 // pred_region
        %s847 = smul.u32 8, %s16
      $region44: #{ogb_gat_forward.5} parent=39 // pred_fallthru
        _
    $region40: #{ogb_gat_forward.5} parent=5 // pred_fallthru
      _
    %p848 = scmp.le.s32.totalorder 2, %s11
    // Predicated region
    $region45: #{ogb_gat_forward.5} parent=5 // pred_check
      %p849 = pneg %p848
    $region46: #{ogb_gat_forward.5} parent=5 // pred_check_branch
      %851 = sbr.rel (%p849) target = $region48
    $region47: #{ogb_gat_forward.5} parent=5 // pred_region
      %s852 = ssub.s32 %s11, 2
      // Predicated region
      $region49: #{ogb_gat_forward.5} parent=47 // pred_check
        %p853 = pneg %p160
      $region50: #{ogb_gat_forward.5} parent=47 // pred_check_branch
        %855 = sbr.rel (%p853) target = $region52
      $region51: #{ogb_gat_forward.5} parent=47 // pred_region
        %s856 = smul.u32 8, %s17
        %p857 = scmp.lt.s32.totalorder %s856, 15
        %s858 = scalar_select %p857, %s856, 15
        %s859 = smul.addr %s858, 8
        %s860 = scalar_lea.vmem %s5, %s859
      $region52: #{ogb_gat_forward.5} parent=47 // pred_fallthru
        _
    $region48: #{ogb_gat_forward.5} parent=5 // pred_fallthru
      _
  $region6: #{ogb_gat_forward.5} parent=0 // loop_footer
    %s15 = sadd.s32 1, %s11
  $region7: #{ogb_gat_forward.5} parent=0 // loop_footer_branch
    %10 = sbr.rel target = $region3
  $region8: #{ogb_gat_forward.5} parent=0 // loop_exit
    _

// kernel: ogb_gat_forward.7
$region0: #{ogb_gat_forward.7}
  #allocation0 [shape = 'u32[]', space=smem, size = 0x4, offset = 0x4, fixed_abs, tag = 'smem constant byte address 0x4 - core index']
  #allocation1 [shape = 'u32[72,128]{1,0:T(1,128)}', space=vmem, size = 0x9000, scoped, tag = 'internal scratch']
  #allocation4 [shape = 's32[]', space=sflag, size = 0x4, offset = 0, fixed_abs, tag = 'sflag constant byte address 0x0 - dummy sync flag']
  %s0 = inlined_call_operand.vmem [shape: bf16[128,128], index: 0, kind: input, shape index: {}]
  %s1 = inlined_call_operand.vmem [shape: f32[128,2], index: 1, kind: input, shape index: {}]
  %s2 = inlined_call_operand.vmem [shape: f32[2,128], index: 2, kind: input, shape index: {}]
  %s3 = inlined_call_operand.vmem [shape: bf16[128,16], index: 3, kind: input, shape index: {}]
  %s4 = inlined_call_operand.vmem [shape: f32[128,16], index: 4, kind: input, shape index: {}]
  %s5 = inlined_call_operand.vmem [shape: f32[128,16], index: 5, kind: output, shape index: {0}]
  %s6 = inlined_call_operand.hbm [shape: f32[2,128,128], index: 6, kind: output, shape index: {1}]
  %7 = xla_tuple %s5, %s6
  %s8 = sld [smem:[#allocation0]]
  $region61: #{ogb_gat_forward.7} parent=0
    _
  %s10 = ssub.s32 1, %s8
  %s11 = scalar_select 0, %s10, %s8
  $region1: #{ogb_gat_forward.7} parent=0
    #allocation2 [shape = 'u8[131072]{0}', space=vmem, size = 0x20000, scoped, tag = 'output window, operand 1']
    #allocation3 [shape = 's32[2]{0}', space=sflag, size = 0x8, scoped, tag = 'scoped memory for ogb_gat_forward.7']
    %12 = vsyncpa [#allocation3], 0
    %s13 = scalar_lea.sflag [#allocation3], 1
    %14 = vsyncpa %s13, 0
    loop: start=0, step=1, limit=4
    $region2: #{ogb_gat_forward.7} parent=1 // loop_pre_header
      _
    $region3: #{ogb_gat_forward.7} parent=1 // loop_header
      %s16 = sphi 0, %s20
      %p17 = scmp.ge.s32.totalorder %s16, 4
      %s26 = sphi 0, %s28
      %s29 = sphi 0, %s26
      %s30 = sphi 0, %s29
      %s46 = sphi 0, %s30
      %s52 = sphi 0, %s54
      %s55 = sphi 0, %s52
      %s56 = sphi 0, %s55
      %s72 = sphi 0, %s56
      %s76 = sphi 0, %s76
      %s78 = sphi 0, %s76
      %s79 = sphi 0, %s78
      %s93 = sphi 0, %s79
      %s97 = sphi 0, %s97
      %s99 = sphi 0, %s97
      %s100 = sphi 0, %s99
      %s114 = sphi 0, %s100
      %s120 = sphi 0, %s122
      %s123 = sphi 0, %s120
      %s124 = sphi 0, %s123
      %s140 = sphi 0, %s124
      %s146 = sphi 0, %s148
      %s149 = sphi 0, %s146
      %s150 = sphi 0, %s149
      %s166 = sphi 0, %s150
      %s172 = sphi 0, %s174
      %s175 = sphi 0, %s172
      %s176 = sphi 0, %s175
      %s192 = sphi 0, %s176
    $region4: #{ogb_gat_forward.7} parent=1 // loop_header_branch
      %19 = sbr.rel (%p17) target = $region8
    $region5: #{ogb_gat_forward.7} parent=1 // loop_body
      %s21 = ssub.s32 %s16, 1
      %s22 = ssub.s32 %s16, 2
      %s23 = sadd.s32 %s16, 1
      %s24 = ssub.s32 %s16, %s23
      %p25 = scmp.eq.s32.totalorder %s24, 0
      %s27 = sadd.s32 %s26, 1
      %s28 = scalar_select %p25, %s26, %s27
      %p31 = pneg %p25
      %p32 = scmp.eq.s32.totalorder %s16, 1
      %p33 = por %p31, %p32
      %p34 = scmp.ne.s32.totalorder %s26, %s29
      %p35 = scmp.eq.s32.totalorder %s16, 0
      %p36 = por %p34, %p35
      %p37 = scmp.ne.s32.totalorder %s26, %s29
      %p38 = scmp.eq.s32.totalorder %s21, 1
      %p39 = por %p37, %p38
      %p40 = scmp.ne.s32.totalorder %s29, %s30
      %p41 = scmp.eq.s32.totalorder %s21, 0
      %p42 = por %p40, %p41
      %p43 = scmp.ne.s32.totalorder %s29, %s30
      %p44 = scmp.eq.s32.totalorder %s22, 1
      %p45 = por %p43, %p44
      %p47 = scmp.ne.s32.totalorder %s30, %s46
      %p48 = scmp.eq.s32.totalorder %s22, 0
      %p49 = por %p47, %p48
      %s50 = ssub.s32 %s16, %s23
      %p51 = scmp.eq.s32.totalorder %s50, 0
      %s53 = sadd.s32 %s52, 1
      %s54 = scalar_select %p51, %s52, %s53
      %p57 = pneg %p51
      %p58 = scmp.eq.s32.totalorder %s16, 1
      %p59 = por %p57, %p58
      %p60 = scmp.ne.s32.totalorder %s52, %s55
      %p61 = scmp.eq.s32.totalorder %s16, 0
      %p62 = por %p60, %p61
      %p63 = scmp.ne.s32.totalorder %s52, %s55
      %p64 = scmp.eq.s32.totalorder %s21, 1
      %p65 = por %p63, %p64
      %p66 = scmp.ne.s32.totalorder %s55, %s56
      %p67 = scmp.eq.s32.totalorder %s21, 0
      %p68 = por %p66, %p67
      %p69 = scmp.ne.s32.totalorder %s55, %s56
      %p70 = scmp.eq.s32.totalorder %s22, 1
      %p71 = por %p69, %p70
      %p73 = scmp.ne.s32.totalorder %s56, %s72
      %p74 = scmp.eq.s32.totalorder %s22, 0
      %p75 = por %p73, %p74
      %s77 = sadd.s32 %s76, 1
      %p80 = scmp.eq.s32.totalorder %s16, 1
      %p81 = scmp.ne.s32.totalorder %s76, %s78
      %p82 = scmp.eq.s32.totalorder %s16, 0
      %p83 = por %p81, %p82
      %p84 = scmp.ne.s32.totalorder %s76, %s78
      %p85 = scmp.eq.s32.totalorder %s21, 1
      %p86 = por %p84, %p85
      %p87 = scmp.ne.s32.totalorder %s78, %s79
      %p88 = scmp.eq.s32.totalorder %s21, 0
      %p89 = por %p87, %p88
      %p90 = scmp.ne.s32.totalorder %s78, %s79
      %p91 = scmp.eq.s32.totalorder %s22, 1
      %p92 = por %p90, %p91
      %p94 = scmp.ne.s32.totalorder %s79, %s93
      %p95 = scmp.eq.s32.totalorder %s22, 0
      %p96 = por %p94, %p95
      %s98 = sadd.s32 %s97, 1
      %p101 = scmp.eq.s32.totalorder %s16, 1
      %p102 = scmp.ne.s32.totalorder %s97, %s99
      %p103 = scmp.eq.s32.totalorder %s16, 0
      %p104 = por %p102, %p103
      %p105 = scmp.ne.s32.totalorder %s97, %s99
      %p106 = scmp.eq.s32.totalorder %s21, 1
      %p107 = por %p105, %p106
      %p108 = scmp.ne.s32.totalorder %s99, %s100
      %p109 = scmp.eq.s32.totalorder %s21, 0
      %p110 = por %p108, %p109
      %p111 = scmp.ne.s32.totalorder %s99, %s100
      %p112 = scmp.eq.s32.totalorder %s22, 1
      %p113 = por %p111, %p112
      %p115 = scmp.ne.s32.totalorder %s100, %s114
      %p116 = scmp.eq.s32.totalorder %s22, 0
      %p117 = por %p115, %p116
      %s118 = ssub.s32 %s16, %s23
      %p119 = scmp.eq.s32.totalorder %s118, 0
      %s121 = sadd.s32 %s120, 1
      %s122 = scalar_select %p119, %s120, %s121
      %p125 = pneg %p119
      %p126 = scmp.eq.s32.totalorder %s16, 1
      %p127 = por %p125, %p126
      %p128 = scmp.ne.s32.totalorder %s120, %s123
      %p129 = scmp.eq.s32.totalorder %s16, 0
      %p130 = por %p128, %p129
      %p131 = scmp.ne.s32.totalorder %s120, %s123
      %p132 = scmp.eq.s32.totalorder %s21, 1
      %p133 = por %p131, %p132
      %p134 = scmp.ne.s32.totalorder %s123, %s124
      %p135 = scmp.eq.s32.totalorder %s21, 0
      %p136 = por %p134, %p135
      %p137 = scmp.ne.s32.totalorder %s123, %s124
      %p138 = scmp.eq.s32.totalorder %s22, 1
      %p139 = por %p137, %p138
      %p141 = scmp.ne.s32.totalorder %s124, %s140
      %p142 = scmp.eq.s32.totalorder %s22, 0
      %p143 = por %p141, %p142
      %s144 = ssub.s32 %s16, %s23
      %p145 = scmp.eq.s32.totalorder %s144, 0
      %s147 = sadd.s32 %s146, 1
      %s148 = scalar_select %p145, %s146, %s147
      %p151 = pneg %p145
      %p152 = scmp.eq.s32.totalorder %s16, 1
      %p153 = por %p151, %p152
      %p154 = scmp.ne.s32.totalorder %s146, %s149
      %p155 = scmp.eq.s32.totalorder %s16, 0
      %p156 = por %p154, %p155
      %p157 = scmp.ne.s32.totalorder %s146, %s149
      %p158 = scmp.eq.s32.totalorder %s21, 1
      %p159 = por %p157, %p158
      %p160 = scmp.ne.s32.totalorder %s149, %s150
      %p161 = scmp.eq.s32.totalorder %s21, 0
      %p162 = por %p160, %p161
      %p163 = scmp.ne.s32.totalorder %s149, %s150
      %p164 = scmp.eq.s32.totalorder %s22, 1
      %p165 = por %p163, %p164
      %p167 = scmp.ne.s32.totalorder %s150, %s166
      %p168 = scmp.eq.s32.totalorder %s22, 0
      %p169 = por %p167, %p168
      %s170 = ssub.s32 %s16, %s23
      %p171 = scmp.eq.s32.totalorder %s170, 0
      %s173 = sadd.s32 %s172, 1
      %s174 = scalar_select %p171, %s172, %s173
      %p177 = pneg %p171
      %p178 = scmp.eq.s32.totalorder %s16, 1
      %p179 = por %p177, %p178
      %p180 = scmp.ne.s32.totalorder %s172, %s175
      %p181 = scmp.eq.s32.totalorder %s16, 0
      %p182 = por %p180, %p181
      %p183 = scmp.ne.s32.totalorder %s172, %s175
      %p184 = scmp.eq.s32.totalorder %s21, 1
      %p185 = por %p183, %p184
      %p186 = scmp.ne.s32.totalorder %s175, %s176
      %p187 = scmp.eq.s32.totalorder %s21, 0
      %p188 = por %p186, %p187
      %p189 = scmp.ne.s32.totalorder %s175, %s176
      %p190 = scmp.eq.s32.totalorder %s22, 1
      %p191 = por %p189, %p190
      %p193 = scmp.ne.s32.totalorder %s176, %s192
      %p194 = scmp.eq.s32.totalorder %s22, 0
      %p195 = por %p193, %p194
      %p196 = scmp.le.s32.totalorder 1, %s16
      %p197 = scmp.lt.s32.totalorder %s16, 3
      %p198 = pnand %p196, %p197
      %p199 = pneg %p198
      // Predicated region
      $region9: #{ogb_gat_forward.7} parent=5 // pred_check
        _
      $region10: #{ogb_gat_forward.7} parent=5 // pred_check_branch
        %201 = sbr.rel (%p198) target = $region12
      $region11: #{ogb_gat_forward.7} parent=5 // pred_region
        %s202 = ssub.s32 %s16, 1
        // Predicated region
        $region13: #{ogb_gat_forward.7} parent=11 // pred_check
          %p203 = pneg %p89
        $region14: #{ogb_gat_forward.7} parent=11 // pred_check_branch
          %205 = sbr.rel (%p203) target = $region16
        $region15: #{ogb_gat_forward.7} parent=11 // pred_region
          _
        $region16: #{ogb_gat_forward.7} parent=11 // pred_fallthru
          _
        // Predicated region
        $region17: #{ogb_gat_forward.7} parent=11 // pred_check
          %p206 = pneg %p110
        $region18: #{ogb_gat_forward.7} parent=11 // pred_check_branch
          %208 = sbr.rel (%p206) target = $region20
        $region19: #{ogb_gat_forward.7} parent=11 // pred_region
          _
        $region20: #{ogb_gat_forward.7} parent=11 // pred_fallthru
          _
      $region12: #{ogb_gat_forward.7} parent=5 // pred_fallthru
        _
      %p209 = scmp.lt.s32.totalorder %s16, 2
      // Predicated region
      $region21: #{ogb_gat_forward.7} parent=5 // pred_check
        %p210 = pneg %p209
      $region22: #{ogb_gat_forward.7} parent=5 // pred_check_branch
        %212 = sbr.rel (%p210) target = $region24
      $region23: #{ogb_gat_forward.7} parent=5 // pred_region
        // Predicated region
        $region25: #{ogb_gat_forward.7} parent=23 // pred_check
          %p213 = pneg %p36
        $region26: #{ogb_gat_forward.7} parent=23 // pred_check_branch
          %215 = sbr.rel (%p213) target = $region28
        $region27: #{ogb_gat_forward.7} parent=23 // pred_region
          %s216 = smul.u32 8, %s16
          %p217 = scmp.lt.s32.totalorder %s216, 15
          %s218 = scalar_select %p217, %s216, 15
          %s219 = smul.addr %s218, 4
          %s220 = scalar_lea.vmem %s0, %s219
          %s221 = smul.u32 8, %s16
        $region28: #{ogb_gat_forward.7} parent=23 // pred_fallthru
          _
        // Predicated region
        $region29: #{ogb_gat_forward.7} parent=23 // pred_check
          %p222 = pneg %p62
        $region30: #{ogb_gat_forward.7} parent=23 // pred_check_branch
          %224 = sbr.rel (%p222) target = $region32
        $region31: #{ogb_gat_forward.7} parent=23 // pred_region
          %s225 = smul.u32 8, %s16
          %p226 = scmp.lt.s32.totalorder %s225, 15
          %s227 = scalar_select %p226, %s225, 15
          %s228 = smul.addr %s227, 8
          %s229 = scalar_lea.vmem %s1, %s228
          %s230 = smul.u32 8, %s16
        $region32: #{ogb_gat_forward.7} parent=23 // pred_fallthru
          _
        // Predicated region
        $region33: #{ogb_gat_forward.7} parent=23 // pred_check
          %p231 = pneg %p130
        $region34: #{ogb_gat_forward.7} parent=23 // pred_check_branch
          %233 = sbr.rel (%p231) target = $region36
        $region35: #{ogb_gat_forward.7} parent=23 // pred_region
          %s234 = smul.u32 8, %s16
          %p235 = scmp.lt.s32.totalorder %s234, 15
          %s236 = scalar_select %p235, %s234, 15
          %s237 = smul.addr %s236, 8
          %s238 = scalar_lea.vmem %s4, %s237
          %s239 = smul.u32 8, %s16
        $region36: #{ogb_gat_forward.7} parent=23 // pred_fallthru
          _
      $region24: #{ogb_gat_forward.7} parent=5 // pred_fallthru
        _
      %p240 = scmp.le.s32.totalorder 1, %s16
      %p241 = scmp.lt.s32.totalorder %s16, 3
      %p242 = pnand %p240, %p241
      %p243 = pneg %p242
      // Predicated region
      $region37: #{ogb_gat_forward.7} parent=5 // pred_check
        _
      $region38: #{ogb_gat_forward.7} parent=5 // pred_check_branch
        %245 = sbr.rel (%p242) target = $region40
      $region39: #{ogb_gat_forward.7} parent=5 // pred_region
        %s246 = ssub.s32 %s16, 1
        %s247 = smul.u32 8, %s21
        %p248 = scmp.lt.s32.totalorder %s247, 15
        %s249 = scalar_select %p248, %s247, 15
        %s250 = smul.addr %s249, 4
        %s251 = scalar_lea.vmem %s0, %s250
        %p252 = pneg %p42
        %p253 = pneg %p39
        %s254 = smul.u32 8, %s21
        %p255 = scmp.lt.s32.totalorder %s254, 15
        %s256 = scalar_select %p255, %s254, 15
        %s257 = smul.addr %s256, 8
        %s258 = scalar_lea.vmem %s1, %s257
        %p259 = pneg %p68
        %p260 = pneg %p65
        %p261 = pneg %p89
        %p262 = pneg %p86
        %p263 = pneg %p110
        %p264 = pneg %p107
        %s265 = smul.u32 8, %s21
        %p266 = scmp.lt.s32.totalorder %s265, 15
        %s267 = scalar_select %p266, %s265, 15
        %s268 = smul.addr %s267, 8
        %s269 = scalar_lea.vmem %s4, %s268
        %p270 = pneg %p136
        %p271 = pneg %p133
        %p272 = pneg %p162
        %p273 = pneg %p159
        %s274 = smul.u32 8, %s21
        %p275 = scmp.lt.s32.totalorder %s274, 15
        %s276 = scalar_select %p275, %s274, 15
        %s277 = smul.addr %s276, 8
        %s278 = scalar_lea.vmem %s5, %s277
        %p279 = pneg %p188
        %p280 = pneg %p185
        %s281 = sand.u32 %s175, 1
        %s282 = scalar_lea.sflag [#allocation3], %s281
        %s283 = sand.u32 %s175, 1
        %s284 = smul.addr %s283, 128
        %s285 = scalar_lea.vmem [#allocation2], %s284
        %s286 = smul.u32 8, %s21
        %p287 = scmp.lt.s32.totalorder %s286, 15
        %s288 = scalar_select %p287, %s286, 15
        %s289 = smul.addr %s288, 4
        %s290 = scalar_lea.vmem %s0, %s289
        %s291 = smul.u32 8, %s21
        %s292 = smul.u32 8, %s21
        %p293 = scmp.lt.s32.totalorder %s292, 15
        %s294 = scalar_select %p293, %s292, 15
        %s295 = smul.addr %s294, 8
        %s296 = scalar_lea.vmem %s1, %s295
        %s297 = smul.u32 8, %s21
        %s298 = smul.u32 8, %s21
        %p299 = scmp.lt.s32.totalorder %s298, 15
        %s300 = scalar_select %p299, %s298, 15
        %s301 = smul.addr %s300, 8
        %s302 = scalar_lea.vmem %s4, %s301
        %s303 = smul.u32 8, %s21
        %s304 = smul.u32 8, %s21
        %p305 = scmp.lt.s32.totalorder %s304, 15
        %s306 = scalar_select %p305, %s304, 15
        %s307 = smul.addr %s306, 8
        %s308 = scalar_lea.vmem %s5, %s307
        %s309 = smul.u32 8, %s21
        %s310 = smul.u32 8, %s21
        %v311 = vld [vmem:[%s290] sm:$0xf]
        %v312 = vld [vmem:[%s290 + $0x4] sm:$0xf]
        %v313 = vld [vmem:[%s290 + $0x8] sm:$0xf]
        %v314 = vld [vmem:[%s290 + $0xc] sm:$0xf]
        %v315 = vld [vmem:[%s290 + $0x10] sm:$0xf]
        %v316 = vld [vmem:[%s290 + $0x14] sm:$0xf]
        %v317 = vld [vmem:[%s290 + $0x18] sm:$0xf]
        %v318 = vld [vmem:[%s290 + $0x1c] sm:$0xf]
        %v319 = vunpack.c.l.bf16 %v311
        %v320 = vunpack.c.l.bf16 %v312
        %v321 = vunpack.c.l.bf16 %v313
        %v322 = vunpack.c.l.bf16 %v314
        %v323 = vunpack.c.l.bf16 %v315
        %v324 = vunpack.c.l.bf16 %v316
        %v325 = vunpack.c.l.bf16 %v317
        %v326 = vunpack.c.l.bf16 %v318
        %vm327 = vcmp.gt.f32.partialorder %v319, 0.0
        %vm328 = vcmp.gt.f32.partialorder %v320, 0.0
        %vm329 = vcmp.gt.f32.partialorder %v321, 0.0
        %vm330 = vcmp.gt.f32.partialorder %v322, 0.0
        %vm331 = vcmp.gt.f32.partialorder %v323, 0.0
        %vm332 = vcmp.gt.f32.partialorder %v324, 0.0
        %vm333 = vcmp.gt.f32.partialorder %v325, 0.0
        %vm334 = vcmp.gt.f32.partialorder %v326, 0.0
        %v335 = vld [vmem:[%s296] sm:$0xff]
        %v336 = vld [vmem:[%s296 + $0x8] sm:$0xff]
        %v337 = vld [vmem:[%s296 + $0x10] sm:$0xff]
        %v338 = vld [vmem:[%s296 + $0x18] sm:$0xff]
        %v339 = vld [vmem:[%s296 + $0x20] sm:$0xff]
        %v340 = vld [vmem:[%s296 + $0x28] sm:$0xff]
        %v341 = vld [vmem:[%s296 + $0x30] sm:$0xff]
        %v342 = vld [vmem:[%s296 + $0x38] sm:$0xff]
        %v343 = vld [vmem:[%s2] sm:$0x3]
        %v344 = vld [vmem:[%s3] sm:$0xf]
        %v345 = vld [vmem:[%s3 + $0x4] sm:$0xf]
        %v346 = vld [vmem:[%s3 + $0x8] sm:$0xf]
        %v347 = vld [vmem:[%s3 + $0xc] sm:$0xf]
        %v348 = vld [vmem:[%s3 + $0x10] sm:$0xf]
        %v349 = vld [vmem:[%s3 + $0x14] sm:$0xf]
        %v350 = vld [vmem:[%s3 + $0x18] sm:$0xf]
        %v351 = vld [vmem:[%s3 + $0x1c] sm:$0xf]
        %v352 = vld [vmem:[%s3 + $0x20] sm:$0xf]
        %v353 = vld [vmem:[%s3 + $0x24] sm:$0xf]
        %v354 = vld [vmem:[%s3 + $0x28] sm:$0xf]
        %v355 = vld [vmem:[%s3 + $0x2c] sm:$0xf]
        %v356 = vld [vmem:[%s3 + $0x30] sm:$0xf]
        %v357 = vld [vmem:[%s3 + $0x34] sm:$0xf]
        %v358 = vld [vmem:[%s3 + $0x38] sm:$0xf]
        %v359 = vld [vmem:[%s3 + $0x3c] sm:$0xf]
        %361 = vset.pattern.permute.xlu0 0
        %362 = vperm.xlu0 %361, %v335
        %v363 = vpop.permute.xlu0 %362
        %366 = vset.pattern.permute.xlu0 0
        %367 = vperm.xlu0 %366, %v336
        %v368 = vpop.permute.xlu0 %367
        %371 = vset.pattern.permute.xlu0 0
        %372 = vperm.xlu0 %371, %v337
        %v373 = vpop.permute.xlu0 %372
        %376 = vset.pattern.permute.xlu0 0
        %377 = vperm.xlu0 %376, %v338
        %v378 = vpop.permute.xlu0 %377
        %381 = vset.pattern.permute.xlu0 0
        %382 = vperm.xlu0 %381, %v339
        %v383 = vpop.permute.xlu0 %382
        %386 = vset.pattern.permute.xlu0 0
        %387 = vperm.xlu0 %386, %v340
        %v388 = vpop.permute.xlu0 %387
        %391 = vset.pattern.permute.xlu0 0
        %392 = vperm.xlu0 %391, %v341
        %v393 = vpop.permute.xlu0 %392
        %396 = vset.pattern.permute.xlu0 0
        %397 = vperm.xlu0 %396, %v342
        %v398 = vpop.permute.xlu0 %397
        %v400 = vperm.slane %v343, 0
        %v401 = vadd.f32 %v363, %v400
        %v402 = vadd.f32 %v368, %v400
        %v403 = vadd.f32 %v373, %v400
        %v404 = vadd.f32 %v378, %v400
        %v405 = vadd.f32 %v383, %v400
        %v406 = vadd.f32 %v388, %v400
        %v407 = vadd.f32 %v393, %v400
        %v408 = vadd.f32 %v398, %v400
        %vm409 = vcmp.gt.f32.partialorder %v401, 0.0
        %vm410 = vcmp.gt.f32.partialorder %v402, 0.0
        %vm411 = vcmp.gt.f32.partialorder %v403, 0.0
        %vm412 = vcmp.gt.f32.partialorder %v404, 0.0
        %vm413 = vcmp.gt.f32.partialorder %v405, 0.0
        %vm414 = vcmp.gt.f32.partialorder %v406, 0.0
        %vm415 = vcmp.gt.f32.partialorder %v407, 0.0
        %vm416 = vcmp.gt.f32.partialorder %v408, 0.0
        %v417 = vmul.f32 %v401, 0.2
        %v418 = vmul.f32 %v402, 0.2
        %v419 = vmul.f32 %v403, 0.2
        %v420 = vmul.f32 %v404, 0.2
        %v421 = vmul.f32 %v405, 0.2
        %v422 = vmul.f32 %v406, 0.2
        %v423 = vmul.f32 %v407, 0.2
        %v424 = vmul.f32 %v408, 0.2
        %v425 = vsel %vm409, %v401, %v417
        %v426 = vsel %vm410, %v402, %v418
        %v427 = vsel %vm411, %v403, %v419
        %v428 = vsel %vm412, %v404, %v420
        %v429 = vsel %vm413, %v405, %v421
        %v430 = vsel %vm414, %v406, %v422
        %v431 = vsel %vm415, %v407, %v423
        %v432 = vsel %vm416, %v408, %v424
        %v433 = vsel %vm327, %v425, -1e+30
        %v434 = vsel %vm328, %v426, -1e+30
        %v435 = vsel %vm329, %v427, -1e+30
        %v436 = vsel %vm330, %v428, -1e+30
        %v437 = vsel %vm331, %v429, -1e+30
        %v438 = vsel %vm332, %v430, -1e+30
        %v439 = vsel %vm333, %v431, -1e+30
        %v440 = vsel %vm334, %v432, -1e+30
        %441 = vmax.xlane.f32.xlu0 %v433
        %v442 = vpop.xlane.xlu0 %441
        %443 = vmax.xlane.f32.xlu0 %v434
        %v444 = vpop.xlane.xlu0 %443
        %445 = vmax.xlane.f32.xlu0 %v435
        %v446 = vpop.xlane.xlu0 %445
        %447 = vmax.xlane.f32.xlu0 %v436
        %v448 = vpop.xlane.xlu0 %447
        %449 = vmax.xlane.f32.xlu0 %v437
        %v450 = vpop.xlane.xlu0 %449
        %451 = vmax.xlane.f32.xlu0 %v438
        %v452 = vpop.xlane.xlu0 %451
        %453 = vmax.xlane.f32.xlu0 %v439
        %v454 = vpop.xlane.xlu0 %453
        %455 = vmax.xlane.f32.xlu0 %v440
        %v456 = vpop.xlane.xlu0 %455
        %v457 = vsub.f32 %v433, %v442
        %v458 = vsub.f32 %v434, %v444
        %v459 = vsub.f32 %v435, %v446
        %v460 = vsub.f32 %v436, %v448
        %v461 = vsub.f32 %v437, %v450
        %v462 = vsub.f32 %v438, %v452
        %v463 = vsub.f32 %v439, %v454
        %v464 = vsub.f32 %v440, %v456
        %v465 = vmul.f32 %v457, 1.442695
        %v466 = vpow.pop %v465
        %v467 = vmul.f32 %v458, 1.442695
        %v468 = vpow.pop %v467
        %v469 = vmul.f32 %v459, 1.442695
        %v470 = vpow.pop %v469
        %v471 = vmul.f32 %v460, 1.442695
        %v472 = vpow.pop %v471
        %v473 = vmul.f32 %v461, 1.442695
        %v474 = vpow.pop %v473
        %v475 = vmul.f32 %v462, 1.442695
        %v476 = vpow.pop %v475
        %v477 = vmul.f32 %v463, 1.442695
        %v478 = vpow.pop %v477
        %v479 = vmul.f32 %v464, 1.442695
        %v480 = vpow.pop %v479
        %481 = vadd.xlane.f32.xlu0 %v466
        %v482 = vpop.xlane.xlu0 %481
        %483 = vadd.xlane.f32.xlu0 %v468
        %v484 = vpop.xlane.xlu0 %483
        %485 = vadd.xlane.f32.xlu0 %v470
        %v486 = vpop.xlane.xlu0 %485
        %487 = vadd.xlane.f32.xlu0 %v472
        %v488 = vpop.xlane.xlu0 %487
        %489 = vadd.xlane.f32.xlu0 %v474
        %v490 = vpop.xlane.xlu0 %489
        %491 = vadd.xlane.f32.xlu0 %v476
        %v492 = vpop.xlane.xlu0 %491
        %493 = vadd.xlane.f32.xlu0 %v478
        %v494 = vpop.xlane.xlu0 %493
        %495 = vadd.xlane.f32.xlu0 %v480
        %v496 = vpop.xlane.xlu0 %495
        %v497 = vrcp.pop %v482
        %v498 = vrcp.pop %v484
        %v499 = vrcp.pop %v486
        %v500 = vrcp.pop %v488
        %v501 = vrcp.pop %v490
        %v502 = vrcp.pop %v492
        %v503 = vrcp.pop %v494
        %v504 = vrcp.pop %v496
        %v505 = vmul.f32 %v466, %v497
        %v506 = vmul.f32 %v468, %v498
        %v507 = vmul.f32 %v470, %v499
        %v508 = vmul.f32 %v472, %v500
        %v509 = vmul.f32 %v474, %v501
        %v510 = vmul.f32 %v476, %v502
        %v511 = vmul.f32 %v478, %v503
        %v512 = vmul.f32 %v480, %v504
        %513 = vst [vmem:[%s285] sm:$0xff] %v505
        %514 = vst [vmem:[%s285 + $0x8] sm:$0xff] %v506
        %515 = vst [vmem:[%s285 + $0x10] sm:$0xff] %v507
        %516 = vst [vmem:[%s285 + $0x18] sm:$0xff] %v508
        %517 = vst [vmem:[%s285 + $0x20] sm:$0xff] %v509
        %518 = vst [vmem:[%s285 + $0x28] sm:$0xff] %v510
        %519 = vst [vmem:[%s285 + $0x30] sm:$0xff] %v511
        %520 = vst [vmem:[%s285 + $0x38] sm:$0xff] %v512
        %v521 = vpack.c.bf16 %v506, %v505
        %v522 = vpack.c.bf16 %v508, %v507
        %v523 = vpack.c.bf16 %v510, %v509
        %v524 = vpack.c.bf16 %v512, %v511
        %v541 = vunpack.c.l.b16 %v344
        %v542 = vunpack.c.l.b16 %v345
        %v543 = vunpack.c.l.b16 %v346
        %v544 = vunpack.c.l.b16 %v347
        %v545 = vunpack.c.l.b16 %v348
        %v546 = vunpack.c.l.b16 %v349
        %v547 = vunpack.c.l.b16 %v350
        %v548 = vunpack.c.l.b16 %v351
        %v549 = vunpack.c.l.b16 %v352
        %v550 = vunpack.c.l.b16 %v353
        %v551 = vunpack.c.l.b16 %v354
        %v552 = vunpack.c.l.b16 %v355
        %v553 = vunpack.c.l.b16 %v356
        %v554 = vunpack.c.l.b16 %v357
        %v555 = vunpack.c.l.b16 %v358
        %v556 = vunpack.c.l.b16 %v359
        %v557 = vpack.c.b16 %v542, %v541
        %v558 = vpack.c.b16 %v544, %v543
        %v559 = vpack.c.b16 %v546, %v545
        %v560 = vpack.c.b16 %v548, %v547
        %v561 = vpack.c.b16 %v550, %v549
        %v562 = vpack.c.b16 %v552, %v551
        %v563 = vpack.c.b16 %v554, %v553
        %v564 = vpack.c.b16 %v556, %v555
        %573 = vmatpush.bf16.msra.mxu0 %v564
        %574 = vmatpush.bf16.msra.mxu0 %v563
        %575 = vmatpush.bf16.msra.mxu0 %v562
        %576 = vmatpush.bf16.msra.mxu0 %v561
        %577 = vmatpush.bf16.msra.mxu0 %v560
        %578 = vmatpush.bf16.msra.mxu0 %v559
        %579 = vmatpush.bf16.msra.mxu0 %v558
        %580 = vmatpush.bf16.msra.mxu0 %v557
        %581 = vmatmul.bf16.gmra.mxu0 %v521
        %v582 = vpop.f32.mrf.mxu0
        %v583 = vadd.f32 0.0, %v582
        %v584 = vpop.f32.mrf.mxu0
        %v585 = vadd.f32 0.0, %v584
        %586 = vmatmul.bf16.gmra.mxu0 %v522
        %v587 = vpop.f32.mrf.mxu0
        %v588 = vadd.f32 0.0, %v587
        %v589 = vpop.f32.mrf.mxu0
        %v590 = vadd.f32 0.0, %v589
        %591 = vmatmul.bf16.gmra.mxu0 %v523
        %v592 = vpop.f32.mrf.mxu0
        %v593 = vadd.f32 0.0, %v592
        %v594 = vpop.f32.mrf.mxu0
        %v595 = vadd.f32 0.0, %v594
        %596 = vmatmul.bf16.gmra.mxu0 %v524
        %v597 = vpop.f32.mrf.mxu0
        %v598 = vadd.f32 0.0, %v597
        %v599 = vpop.f32.mrf.mxu0
        %v600 = vadd.f32 0.0, %v599
        %601 = vdwg.mxu0
        %602 = vset.pattern.permute.xlu0 1
        %603 = vperm.xlu0 %602, %v335
        %v604 = vpop.permute.xlu0 %603
        %606 = vset.pattern.permute.xlu0 1
        %607 = vperm.xlu0 %606, %v336
        %v608 = vpop.permute.xlu0 %607
        %610 = vset.pattern.permute.xlu0 1
        %611 = vperm.xlu0 %610, %v337
        %v612 = vpop.permute.xlu0 %611
        %614 = vset.pattern.permute.xlu0 1
        %615 = vperm.xlu0 %614, %v338
        %v616 = vpop.permute.xlu0 %615
        %618 = vset.pattern.permute.xlu0 1
        %619 = vperm.xlu0 %618, %v339
        %v620 = vpop.permute.xlu0 %619
        %622 = vset.pattern.permute.xlu0 1
        %623 = vperm.xlu0 %622, %v340
        %v624 = vpop.permute.xlu0 %623
        %626 = vset.pattern.permute.xlu0 1
        %627 = vperm.xlu0 %626, %v341
        %v628 = vpop.permute.xlu0 %627
        %630 = vset.pattern.permute.xlu0 1
        %631 = vperm.xlu0 %630, %v342
        %v632 = vpop.permute.xlu0 %631
        %v634 = vperm.slane %v343, 1
        %v635 = vadd.f32 %v604, %v634
        %v636 = vadd.f32 %v608, %v634
        %v637 = vadd.f32 %v612, %v634
        %v638 = vadd.f32 %v616, %v634
        %v639 = vadd.f32 %v620, %v634
        %v640 = vadd.f32 %v624, %v634
        %v641 = vadd.f32 %v628, %v634
        %v642 = vadd.f32 %v632, %v634
        %vm643 = vcmp.gt.f32.partialorder %v635, 0.0
        %vm644 = vcmp.gt.f32.partialorder %v636, 0.0
        %vm645 = vcmp.gt.f32.partialorder %v637, 0.0
        %vm646 = vcmp.gt.f32.partialorder %v638, 0.0
        %vm647 = vcmp.gt.f32.partialorder %v639, 0.0
        %vm648 = vcmp.gt.f32.partialorder %v640, 0.0
        %vm649 = vcmp.gt.f32.partialorder %v641, 0.0
        %vm650 = vcmp.gt.f32.partialorder %v642, 0.0
        %v651 = vmul.f32 %v635, 0.2
        %v652 = vmul.f32 %v636, 0.2
        %v653 = vmul.f32 %v637, 0.2
        %v654 = vmul.f32 %v638, 0.2
        %v655 = vmul.f32 %v639, 0.2
        %v656 = vmul.f32 %v640, 0.2
        %v657 = vmul.f32 %v641, 0.2
        %v658 = vmul.f32 %v642, 0.2
        %v659 = vsel %vm643, %v635, %v651
        %v660 = vsel %vm644, %v636, %v652
        %v661 = vsel %vm645, %v637, %v653
        %v662 = vsel %vm646, %v638, %v654
        %v663 = vsel %vm647, %v639, %v655
        %v664 = vsel %vm648, %v640, %v656
        %v665 = vsel %vm649, %v641, %v657
        %v666 = vsel %vm650, %v642, %v658
        %v667 = vsel %vm327, %v659, -1e+30
        %v668 = vsel %vm328, %v660, -1e+30
        %v669 = vsel %vm329, %v661, -1e+30
        %v670 = vsel %vm330, %v662, -1e+30
        %v671 = vsel %vm331, %v663, -1e+30
        %v672 = vsel %vm332, %v664, -1e+30
        %v673 = vsel %vm333, %v665, -1e+30
        %v674 = vsel %vm334, %v666, -1e+30
        %675 = vmax.xlane.f32.xlu0 %v667
        %v676 = vpop.xlane.xlu0 %675
        %677 = vmax.xlane.f32.xlu0 %v668
        %v678 = vpop.xlane.xlu0 %677
        %679 = vmax.xlane.f32.xlu0 %v669
        %v680 = vpop.xlane.xlu0 %679
        %681 = vmax.xlane.f32.xlu0 %v670
        %v682 = vpop.xlane.xlu0 %681
        %683 = vmax.xlane.f32.xlu0 %v671
        %v684 = vpop.xlane.xlu0 %683
        %685 = vmax.xlane.f32.xlu0 %v672
        %v686 = vpop.xlane.xlu0 %685
        %687 = vmax.xlane.f32.xlu0 %v673
        %v688 = vpop.xlane.xlu0 %687
        %689 = vmax.xlane.f32.xlu0 %v674
        %v690 = vpop.xlane.xlu0 %689
        %v691 = vsub.f32 %v667, %v676
        %v692 = vsub.f32 %v668, %v678
        %v693 = vsub.f32 %v669, %v680
        %v694 = vsub.f32 %v670, %v682
        %v695 = vsub.f32 %v671, %v684
        %v696 = vsub.f32 %v672, %v686
        %v697 = vsub.f32 %v673, %v688
        %v698 = vsub.f32 %v674, %v690
        %v699 = vmul.f32 %v691, 1.442695
        %v700 = vpow.pop %v699
        %v701 = vmul.f32 %v692, 1.442695
        %v702 = vpow.pop %v701
        %v703 = vmul.f32 %v693, 1.442695
        %v704 = vpow.pop %v703
        %v705 = vmul.f32 %v694, 1.442695
        %v706 = vpow.pop %v705
        %v707 = vmul.f32 %v695, 1.442695
        %v708 = vpow.pop %v707
        %v709 = vmul.f32 %v696, 1.442695
        %v710 = vpow.pop %v709
        %v711 = vmul.f32 %v697, 1.442695
        %v712 = vpow.pop %v711
        %v713 = vmul.f32 %v698, 1.442695
        %v714 = vpow.pop %v713
        %715 = vadd.xlane.f32.xlu0 %v700
        %v716 = vpop.xlane.xlu0 %715
        %717 = vadd.xlane.f32.xlu0 %v702
        %v718 = vpop.xlane.xlu0 %717
        %719 = vadd.xlane.f32.xlu0 %v704
        %v720 = vpop.xlane.xlu0 %719
        %721 = vadd.xlane.f32.xlu0 %v706
        %v722 = vpop.xlane.xlu0 %721
        %723 = vadd.xlane.f32.xlu0 %v708
        %v724 = vpop.xlane.xlu0 %723
        %725 = vadd.xlane.f32.xlu0 %v710
        %v726 = vpop.xlane.xlu0 %725
        %727 = vadd.xlane.f32.xlu0 %v712
        %v728 = vpop.xlane.xlu0 %727
        %729 = vadd.xlane.f32.xlu0 %v714
        %v730 = vpop.xlane.xlu0 %729
        %v731 = vrcp.pop %v716
        %v732 = vrcp.pop %v718
        %v733 = vrcp.pop %v720
        %v734 = vrcp.pop %v722
        %v735 = vrcp.pop %v724
        %v736 = vrcp.pop %v726
        %v737 = vrcp.pop %v728
        %v738 = vrcp.pop %v730
        %v739 = vmul.f32 %v700, %v731
        %v740 = vmul.f32 %v702, %v732
        %v741 = vmul.f32 %v704, %v733
        %v742 = vmul.f32 %v706, %v734
        %v743 = vmul.f32 %v708, %v735
        %v744 = vmul.f32 %v710, %v736
        %v745 = vmul.f32 %v712, %v737
        %v746 = vmul.f32 %v714, %v738
        %s747 = scalar_lea.vmem %s285, 64 [#allocation2]
        %748 = vst [vmem:[%s747] sm:$0xff] %v739
        %749 = vst [vmem:[%s747 + $0x8] sm:$0xff] %v740
        %750 = vst [vmem:[%s747 + $0x10] sm:$0xff] %v741
        %751 = vst [vmem:[%s747 + $0x18] sm:$0xff] %v742
        %752 = vst [vmem:[%s747 + $0x20] sm:$0xff] %v743
        %753 = vst [vmem:[%s747 + $0x28] sm:$0xff] %v744
        %754 = vst [vmem:[%s747 + $0x30] sm:$0xff] %v745
        %755 = vst [vmem:[%s747 + $0x38] sm:$0xff] %v746
        %v756 = vpack.c.bf16 %v740, %v739
        %v757 = vpack.c.bf16 %v742, %v741
        %v758 = vpack.c.bf16 %v744, %v743
        %v759 = vpack.c.bf16 %v746, %v745
        %760 = vrot.lane.b32.xlu0 %v557, 120
        %v761 = vpop.permute.xlu0 %760
        %762 = vrot.lane.b32.xlu0 %v558, 120
        %v763 = vpop.permute.xlu0 %762
        %764 = vrot.lane.b32.xlu0 %v559, 120
        %v765 = vpop.permute.xlu0 %764
        %766 = vrot.lane.b32.xlu0 %v560, 120
        %v767 = vpop.permute.xlu0 %766
        %768 = vrot.lane.b32.xlu0 %v561, 120
        %v769 = vpop.permute.xlu0 %768
        %770 = vrot.lane.b32.xlu0 %v562, 120
        %v771 = vpop.permute.xlu0 %770
        %772 = vrot.lane.b32.xlu0 %v563, 120
        %v773 = vpop.permute.xlu0 %772
        %774 = vrot.lane.b32.xlu0 %v564, 120
        %v775 = vpop.permute.xlu0 %774
        %784 = vmatpush.bf16.msra.mxu0 %v775
        %785 = vmatpush.bf16.msra.mxu0 %v773
        %786 = vmatpush.bf16.msra.mxu0 %v771
        %787 = vmatpush.bf16.msra.mxu0 %v769
        %788 = vmatpush.bf16.msra.mxu0 %v767
        %789 = vmatpush.bf16.msra.mxu0 %v765
        %790 = vmatpush.bf16.msra.mxu0 %v763
        %791 = vmatpush.bf16.msra.mxu0 %v761
        %792 = vmatmul.bf16.gmra.mxu0 %v756
        %v793 = vpop.f32.mrf.mxu0
        %v794 = vadd.f32 0.0, %v793
        %v795 = vpop.f32.mrf.mxu0
        %v796 = vadd.f32 0.0, %v795
        %797 = vmatmul.bf16.gmra.mxu0 %v757
        %v798 = vpop.f32.mrf.mxu0
        %v799 = vadd.f32 0.0, %v798
        %v800 = vpop.f32.mrf.mxu0
        %v801 = vadd.f32 0.0, %v800
        %802 = vmatmul.bf16.gmra.mxu0 %v758
        %v803 = vpop.f32.mrf.mxu0
        %v804 = vadd.f32 0.0, %v803
        %v805 = vpop.f32.mrf.mxu0
        %v806 = vadd.f32 0.0, %v805
        %807 = vmatmul.bf16.gmra.mxu0 %v759
        %v808 = vpop.f32.mrf.mxu0
        %v809 = vadd.f32 0.0, %v808
        %v810 = vpop.f32.mrf.mxu0
        %v811 = vadd.f32 0.0, %v810
        %812 = vdwg.mxu0
        %821 = vrot.lane.b32.xlu0 %v794, 8
        %v822 = vpop.permute.xlu0 %821
        %823 = vrot.lane.b32.xlu0 %v796, 8
        %v824 = vpop.permute.xlu0 %823
        %825 = vrot.lane.b32.xlu0 %v799, 8
        %v826 = vpop.permute.xlu0 %825
        %827 = vrot.lane.b32.xlu0 %v801, 8
        %v828 = vpop.permute.xlu0 %827
        %829 = vrot.lane.b32.xlu0 %v804, 8
        %v830 = vpop.permute.xlu0 %829
        %831 = vrot.lane.b32.xlu0 %v806, 8
        %v832 = vpop.permute.xlu0 %831
        %833 = vrot.lane.b32.xlu0 %v809, 8
        %v834 = vpop.permute.xlu0 %833
        %835 = vrot.lane.b32.xlu0 %v811, 8
        %v836 = vpop.permute.xlu0 %835
        %vm845 = vcmask 64512
        %v846 = vsel %vm845, %v583, %v822
        %v847 = vsel %vm845, %v585, %v824
        %v848 = vsel %vm845, %v588, %v826
        %v849 = vsel %vm845, %v590, %v828
        %v850 = vsel %vm845, %v593, %v830
        %v851 = vsel %vm845, %v595, %v832
        %v852 = vsel %vm845, %v598, %v834
        %v853 = vsel %vm845, %v600, %v836
        %v854 = vld [vmem:[%s302] sm:$0xff]
        %v855 = vld [vmem:[%s302 + $0x8] sm:$0xff]
        %v856 = vld [vmem:[%s302 + $0x10] sm:$0xff]
        %v857 = vld [vmem:[%s302 + $0x18] sm:$0xff]
        %v858 = vld [vmem:[%s302 + $0x20] sm:$0xff]
        %v859 = vld [vmem:[%s302 + $0x28] sm:$0xff]
        %v860 = vld [vmem:[%s302 + $0x30] sm:$0xff]
        %v861 = vld [vmem:[%s302 + $0x38] sm:$0xff]
        %v862 = vadd.f32 %v846, %v854
        %v863 = vadd.f32 %v847, %v855
        %v864 = vadd.f32 %v848, %v856
        %v865 = vadd.f32 %v849, %v857
        %v866 = vadd.f32 %v850, %v858
        %v867 = vadd.f32 %v851, %v859
        %v868 = vadd.f32 %v852, %v860
        %v869 = vadd.f32 %v853, %v861
        %vm870 = vcmask 130048
        %871 = vst.msk [vmem:[%s308] sm:$0xff] %vm870, %v862
        %872 = vst.msk [vmem:[%s308 + $0x8] sm:$0xff] %vm870, %v863
        %873 = vst.msk [vmem:[%s308 + $0x10] sm:$0xff] %vm870, %v864
        %874 = vst.msk [vmem:[%s308 + $0x18] sm:$0xff] %vm870, %v865
        %875 = vst.msk [vmem:[%s308 + $0x20] sm:$0xff] %vm870, %v866
        %876 = vst.msk [vmem:[%s308 + $0x28] sm:$0xff] %vm870, %v867
        %877 = vst.msk [vmem:[%s308 + $0x30] sm:$0xff] %vm870, %v868
        %878 = vst.msk [vmem:[%s308 + $0x38] sm:$0xff] %vm870, %v869
        %s879 = smul.u32 8, %s21
        %p880 = scmp.lt.s32.totalorder %s879, 15
        %s881 = scalar_select %p880, %s879, 15
        %s882 = smul.addr %s881, 8
        %s883 = scalar_lea.vmem %s5, %s882
        %s884 = sand.u32 %s175, 1
        %s885 = scalar_lea.sflag [#allocation3], %s884
        %s886 = sand.u32 %s175, 1
        %s887 = smul.addr %s886, 128
        %s888 = scalar_lea.vmem [#allocation2], %s887
        // Predicated region
        $region41: #{ogb_gat_forward.7} parent=39 // pred_check
          %p889 = pneg %p159
        $region42: #{ogb_gat_forward.7} parent=39 // pred_check_branch
          %891 = sbr.rel (%p889) target = $region44
        $region43: #{ogb_gat_forward.7} parent=39 // pred_region
          %s892 = smul.u32 8, %s21
        $region44: #{ogb_gat_forward.7} parent=39 // pred_fallthru
          _
        // Predicated region
        $region45: #{ogb_gat_forward.7} parent=39 // pred_check
          %p893 = pneg %p185
        $region46: #{ogb_gat_forward.7} parent=39 // pred_check_branch
          %895 = sbr.rel (%p893) target = $region48
        $region47: #{ogb_gat_forward.7} parent=39 // pred_region
          #allocation5 [shape = 'u32[6]{0}', space=smem, size = 0x18, scoped, tag = 'DMA stride descriptor']
          %s896 = smul.u32 8, %s21
          %898 = vsyncadd %s885, 0
          %s899 = smul.addr %s896, 8
          %s900 = scalar_lea.hbm %s6, %s899
          %s902 = sshll.u32 1, 14
          %s903 = sxor.u32 4294967295, %s902
          %s906 = sshll.u32 7, 18
          %s907 = sxor.u32 4294967295, %s906
          %s908 = sand.u32 0, %s907
          %s910 = sor.u32 %s908, 0
          %s911 = sshll.u32 %s888, 4
          %s912 = int_to_ptr.vmem [resolvable:$true] %s911
          %s913 = sshll.u32 %s900, 4
          %s914 = int_to_ptr.hbm [resolvable:$true] %s913
          %920 = sst [smem:[#allocation5]] 1024
          %s921 = scalar_lea.smem [#allocation5], 1
          %922 = sst [smem:[%s921]] 2048
          %s923 = scalar_lea.smem [#allocation5], 2
          %924 = sst [smem:[%s923]] 8
          %s925 = scalar_lea.smem [#allocation5], 3
          %926 = sst [smem:[%s925]] 128
          %s927 = scalar_lea.smem [#allocation5], 4
          %928 = sst [smem:[%s927]] 128
          %s929 = scalar_lea.smem [#allocation5], 5
          %930 = sst [smem:[%s929]] 8
          %932 = dma.general %s912, 2048, %s914, %s885, [#allocation4], [#allocation5], %s910, 0
        $region48: #{ogb_gat_forward.7} parent=39 // pred_fallthru
          _
      $region40: #{ogb_gat_forward.7} parent=5 // pred_fallthru
        _
      %p933 = scmp.le.s32.totalorder 2, %s16
      // Predicated region
      $region49: #{ogb_gat_forward.7} parent=5 // pred_check
        %p934 = pneg %p933
      $region50: #{ogb_gat_forward.7} parent=5 // pred_check_branch
        %936 = sbr.rel (%p934) target = $region52
      $region51: #{ogb_gat_forward.7} parent=5 // pred_region
        %s937 = ssub.s32 %s16, 2
        // Predicated region
        $region53: #{ogb_gat_forward.7} parent=51 // pred_check
          %p938 = pneg %p165
        $region54: #{ogb_gat_forward.7} parent=51 // pred_check_branch
          %940 = sbr.rel (%p938) target = $region56
        $region55: #{ogb_gat_forward.7} parent=51 // pred_region
          %s941 = smul.u32 8, %s22
          %p942 = scmp.lt.s32.totalorder %s941, 15
          %s943 = scalar_select %p942, %s941, 15
          %s944 = smul.addr %s943, 8
          %s945 = scalar_lea.vmem %s5, %s944
        $region56: #{ogb_gat_forward.7} parent=51 // pred_fallthru
          _
        // Predicated region
        $region57: #{ogb_gat_forward.7} parent=51 // pred_check
          %p946 = pneg %p191
        $region58: #{ogb_gat_forward.7} parent=51 // pred_check_branch
          %948 = sbr.rel (%p946) target = $region60
        $region59: #{ogb_gat_forward.7} parent=51 // pred_region
          %s949 = sand.u32 %s176, 1
          %s950 = scalar_lea.sflag [#allocation3], %s949
          %s951 = sand.u32 %s176, 1
          %s952 = smul.addr %s951, 128
          %s953 = scalar_lea.vmem [#allocation2], %s952
          %955 = dma.done %s950, 2048
        $region60: #{ogb_gat_forward.7} parent=51 // pred_fallthru
          _
      $region52: #{ogb_gat_forward.7} parent=5 // pred_fallthru
        _
    $region6: #{ogb_gat_forward.7} parent=1 // loop_footer
      %s20 = sadd.s32 1, %s16
    $region7: #{ogb_gat_forward.7} parent=1 // loop_footer_branch
      %15 = sbr.rel target = $region3
    $region8: #{ogb_gat_forward.7} parent=1 // loop_exit
      _
    %956 = vsyncpa [#allocation3], 1
    %s957 = scalar_lea.sflag [#allocation3], 1
    %958 = vsyncpa %s957, 1

</llo_original>
